<compile_context>
chip_gen: v7x
topology: tpu7x:2x2x1
jax: 0.10.0
libtpu: 0.0.40
codegen_flags: <defaults>
</compile_context>

<pallas_src>
import math
import functools

import jax
import jax.numpy as jnp
from jax.experimental import pallas as pl
from jax.experimental.pallas import tpu as pltpu

_NEG_INF = -1e30  # large finite negative bias (avoids the exp(-inf) -> NaN hazard)


if hasattr(pltpu, "einshape"):
    def _swap01(x):
        """(a, b, d) -> (b, a, d); lane (last) dim untouched (single XLU permute)."""
        return pltpu.einshape("abd->bad", x)
else:  # older jax: jnp.transpose lowers to the same XLU permute
    def _swap01(x):
        return jnp.transpose(x, (1, 0, 2))


def _to_heads(x_bf16, num_head, dph):
    """(N, H*dph) bf16 -> (H, N, dph): one reshape + one permute, no per-head slices."""
    n = x_bf16.shape[0]
    return _swap01(x_bf16.reshape(n, num_head, dph))


def _attention(q, k, vvals, key_bias, scale, num_head, dph):
    """Head-batched masked attention; returns the lane-dense (N, D) update in f32."""
    bf16 = jnp.bfloat16
    f32 = jnp.float32
    n = q.shape[0]

    qh = _to_heads((q * scale).astype(bf16), num_head, dph)   # (H, N, dph)
    kh = _to_heads(k.astype(bf16), num_head, dph)             # (H, N, dph)
    vh = _to_heads(vvals.astype(bf16), num_head, dph)         # (H, N, dph)

    # One batched contraction over heads; contracts the last dims (no kh transpose).
    s = jnp.einsum("hqd,hkd->hqk", qh, kh, preferred_element_type=f32)   # (H, N, N)
    s = s + key_bias                                                     # (1, N) bcast over keys

    m = jnp.max(s, axis=-1, keepdims=True)
    p = jnp.exp(s - m)
    l = jnp.sum(p, axis=-1, keepdims=True)                               # (H, N, 1)

    o = jnp.einsum("hqk,hkd->hqd", p.astype(bf16), vh,
                   preferred_element_type=f32)                           # (H, N, dph)
    # Deferred softmax normalization on the small (H, N, dph) tensor.
    o = o * pl.reciprocal(l, approx=False)

    # Re-merge heads into one lane-dense (N, D) update (single permute + reshape),
    # so the caller does a single full-width residual add / output matmul.
    return _swap01(o).reshape(n, num_head * dph)


def dy_intra_kernel(v_ref, t_ref,
                    vm_col_ref, vm_row_ref, tm_col_ref, tm_row_ref,
                    w_v4t_ref, b_v4t_ref, w_t4v_ref, b_t4v_ref,
                    w_vlin_ref, b_vlin_ref, w_tlin_ref, b_tlin_ref,
                    w_vout_ref, b_vout_ref, w_tout_ref, b_tout_ref,
                    out_v_ref, out_t_ref,
                    *, num_head, output_size):
    f32 = jnp.float32
    bf16 = jnp.bfloat16
    d = output_size
    dph = d // num_head
    scale = 1.0 / math.sqrt(dph)

    v = v_ref[0]                  # (No, D) bf16 (kept narrow; widened only where needed)
    t = t_ref[0]                  # (Nt, D) bf16
    vm_col = vm_col_ref[0]        # (No, 1) f32
    vm_row = vm_row_ref[0]        # (1, No) f32
    tm_col = tm_col_ref[0]        # (Nt, 1)
    tm_row = tm_row_ref[0]        # (1, Nt)

    # Additive key-mask biases, computed once per grid step (hoisted out of attention).
    v_bias = jnp.where(vm_row == 0.0, _NEG_INF, 0.0).astype(f32)   # (1, No)
    t_bias = jnp.where(tm_row == 0.0, _NEG_INF, 0.0).astype(f32)   # (1, Nt)

    # Masked means ride the MXU: (1, N) @ (N, D), f32 accumulate, reciprocal multiply.
    # NOTE: a fully-masked sequence (sum(mask) == 0) diverges from torch (which NaNs).
    inv_nv = pl.reciprocal(jnp.sum(vm_row, axis=-1, keepdims=True), approx=False)  # (1, 1)
    inv_nt = pl.reciprocal(jnp.sum(tm_row, axis=-1, keepdims=True), approx=False)
    v_mean = jnp.dot(vm_row.astype(bf16), v, preferred_element_type=f32) * inv_nv  # (1, D)
    t_mean = jnp.dot(tm_row.astype(bf16), t, preferred_element_type=f32) * inv_nt

    # Gates (dropout p=0.0 is identity); bf16 MXU, f32 accumulate, f32 sigmoid.
    v4t_gate = jax.nn.sigmoid(
        jnp.dot(jnp.maximum(v_mean, 0.0).astype(bf16), w_v4t_ref[...],
                preferred_element_type=f32) + b_v4t_ref[...])       # (1, D)
    t4v_gate = jax.nn.sigmoid(
        jnp.dot(jnp.maximum(t_mean, 0.0).astype(bf16), w_t4v_ref[...],
                preferred_element_type=f32) + b_t4v_ref[...])       # (1, D)

    # k/q/v projections straight off the bf16 blocks (relu in bf16, f32 accumulate),
    # masked per row.
    v_trans = (jnp.dot(jnp.maximum(v, 0), w_vlin_ref[...],
                       preferred_element_type=f32) + b_vlin_ref[...]) * vm_col
    t_trans = (jnp.dot(jnp.maximum(t, 0), w_tlin_ref[...],
                       preferred_element_type=f32) + b_tlin_ref[...]) * tm_col

    v_k, v_q, v_vv = v_trans[:, :d], v_trans[:, d:2 * d], v_trans[:, 2 * d:]
    t_k, t_q, t_vv = t_trans[:, :d], t_trans[:, d:2 * d], t_trans[:, 2 * d:]

    # (1 + gate) applied per head == flat broadcast (heads contiguous along D).
    gv = 1.0 + t4v_gate
    gt = 1.0 + v4t_gate

    v_upd = _attention(gv * v_q, gv * v_k, v_vv, v_bias, scale, num_head, dph)  # (No, D) f32
    t_upd = _attention(gt * t_q, gt * t_k, t_vv, t_bias, scale, num_head, dph)  # (Nt, D) f32

    # Residual (f32 add) + output projection (full-D contraction keeps the MXU fed).
    out_v_ref[0] = jnp.dot((v.astype(f32) + v_upd).astype(bf16), w_vout_ref[...],
                           preferred_element_type=f32) + b_vout_ref[...]
    out_t_ref[0] = jnp.dot((t.astype(f32) + t_upd).astype(bf16), w_tout_ref[...],
                           preferred_element_type=f32) + b_tout_ref[...]


def dy_intra_modality_update(v, t, v_mask, t_mask, params, *, num_head):
    B, No, D = v.shape
    _, Nt, _ = t.shape
    f32 = jnp.float32
    bf16 = jnp.bfloat16

    vm_col = v_mask.astype(f32)[:, :, None]   # (B, No, 1)
    vm_row = v_mask.astype(f32)[:, None, :]   # (B, 1, No)
    tm_col = t_mask.astype(f32)[:, :, None]   # (B, Nt, 1)
    tm_row = t_mask.astype(f32)[:, None, :]   # (B, 1, Nt)

    # Weights travel HBM->VMEM in bf16 (half DMA bytes, feeds the bf16 MXU); biases f32.
    cast = {k: (w.astype(bf16) if k.startswith("w_") else w.astype(f32))
            for k, w in params.items()}

    def seq_spec(n, dd):
        return pl.BlockSpec((1, n, dd), lambda b: (b, 0, 0))

    def full_spec(shape):
        return pl.BlockSpec(shape, lambda b: (0,) * len(shape))

    in_specs = [
        seq_spec(No, D), seq_spec(Nt, D),
        seq_spec(No, 1), seq_spec(1, No), seq_spec(Nt, 1), seq_spec(1, Nt),
        full_spec(cast["w_v4t"].shape), full_spec(cast["b_v4t"].shape),
        full_spec(cast["w_t4v"].shape), full_spec(cast["b_t4v"].shape),
        full_spec(cast["w_vlin"].shape), full_spec(cast["b_vlin"].shape),
        full_spec(cast["w_tlin"].shape), full_spec(cast["b_tlin"].shape),
        full_spec(cast["w_vout"].shape), full_spec(cast["b_vout"].shape),
        full_spec(cast["w_tout"].shape), full_spec(cast["b_tout"].shape),
    ]
    out_specs = [seq_spec(No, D), seq_spec(Nt, D)]
    out_shape = (jax.ShapeDtypeStruct((B, No, D), f32),
                 jax.ShapeDtypeStruct((B, Nt, D), f32))

    # VMEM budget derived from the actual per-step working set (review feedback):
    # double-buffered weights + activations, f32 score tensors, 2x safety factor,
    # clamped to [32 MiB, 100 MiB].
    weight_bytes = sum(int(w.size) * w.dtype.itemsize for w in cast.values())
    act_bytes = (No + Nt) * D * (2 * 2 + 4 * 4)          # bf16 in/out dbl-buf + f32 temps
    score_bytes = 4 * num_head * (No * No + Nt * Nt)     # f32 (H, N, N) per modality
    est = 2 * weight_bytes + act_bytes + 2 * score_bytes
    vmem_limit = int(min(100 * 1024 * 1024, max(32 * 1024 * 1024, 2 * est)))

    kernel = functools.partial(dy_intra_kernel, num_head=num_head, output_size=D)

    return pl.pallas_call(
        kernel,
        out_shape=out_shape,
        grid=(B,),
        in_specs=in_specs,
        out_specs=out_specs,
        compiler_params=pltpu.CompilerParams(
            dimension_semantics=("parallel",),
            vmem_limit_bytes=vmem_limit),
    )(v.astype(bf16), t.astype(bf16),
      vm_col, vm_row, tm_col, tm_row,
      cast["w_v4t"], cast["b_v4t"], cast["w_t4v"], cast["b_t4v"],
      cast["w_vlin"], cast["b_vlin"], cast["w_tlin"], cast["b_tlin"],
      cast["w_vout"], cast["b_vout"], cast["w_tout"], cast["b_tout"])


def reference(v, t, v_mask, t_mask, params, num_head):
    """Pure-JAX (f32) transliteration of the PyTorch forward for verification."""
    B = v.shape[0]
    D = params["w_vout"].shape[0]
    dph = D // num_head
    v_mean = (v * v_mask[..., None]).sum(1) / v_mask.sum(1, keepdims=True)
    t_mean = (t * t_mask[..., None]).sum(1) / t_mask.sum(1, keepdims=True)
    v4t = jax.nn.sigmoid(jnp.maximum(v_mean, 0) @ params["w_v4t"] + params["b_v4t"])
    t4v = jax.nn.sigmoid(jnp.maximum(t_mean, 0) @ params["w_t4v"] + params["b_t4v"])
    v_trans = (jnp.maximum(v, 0) @ params["w_vlin"] + params["b_vlin"]) * v_mask[..., None]
    t_trans = (jnp.maximum(t, 0) @ params["w_tlin"] + params["b_tlin"]) * t_mask[..., None]
    v_k, v_q, v_v = v_trans[..., :D], v_trans[..., D:2 * D], v_trans[..., 2 * D:]
    t_k, t_q, t_v = t_trans[..., :D], t_trans[..., D:2 * D], t_trans[..., 2 * D:]

    def shape(x):
        return x.reshape(B, -1, num_head, dph).transpose(0, 2, 1, 3)

    def shape_gate(g):
        return g.reshape(B, num_head, 1, dph)

    def unshape(x):
        return x.transpose(0, 2, 1, 3).reshape(B, -1, num_head * dph)

    new_vq = (1 + shape_gate(t4v)) * shape(v_q)
    new_vk = (1 + shape_gate(t4v)) * shape(v_k)
    new_tq = (1 + shape_gate(v4t)) * shape(t_q)
    new_tk = (1 + shape_gate(v4t)) * shape(t_k)

    def attn(q, k, vv, mask):
        s = jnp.einsum("bhqd,bhkd->bhqk", q, k) / math.sqrt(dph)
        s = jnp.where((mask == 0)[:, None, None, :], -jnp.inf, s)
        p = jax.nn.softmax(s, axis=-1)
        return jnp.einsum("bhqk,bhkd->bhqd", p, shape(vv))

    v_update = unshape(attn(new_vq, new_vk, v_v, v_mask))
    t_update = unshape(attn(new_tq, new_tk, t_v, t_mask))
    updated_v = (v + v_update) @ params["w_vout"] + params["b_vout"]
    updated_t = (t + t_update) @ params["w_tout"] + params["b_tout"]
    return updated_v, updated_t


def init_params(key, v_size, t_size, output_size):
    ks = jax.random.split(key, 12)
    f32 = jnp.float32

    def w(k, shape):
        return (0.1 * jax.random.normal(k, shape)).astype(f32)

    return {
        "w_v4t": w(ks[0], (v_size, output_size)),   "b_v4t": w(ks[1], (1, output_size)),
        "w_t4v": w(ks[2], (t_size, output_size)),   "b_t4v": w(ks[3], (1, output_size)),
        "w_vlin": w(ks[4], (v_size, 3 * output_size)), "b_vlin": w(ks[5], (1, 3 * output_size)),
        "w_tlin": w(ks[6], (t_size, 3 * output_size)), "b_tlin": w(ks[7], (1, 3 * output_size)),
        "w_vout": w(ks[8], (output_size, output_size)), "b_vout": w(ks[9], (1, output_size)),
        "w_tout": w(ks[10], (output_size, output_size)), "b_tout": w(ks[11], (1, output_size)),
    }


if __name__ == "__main__":
    # Note: the residual `v + v_update` in the module requires v_size == t_size == output_size.
    B, No, Nt = 2, 8, 8
    v_size = t_size = output_size = 32
    num_head = 4

    key = jax.random.PRNGKey(0)
    k_v, k_t, k_p = jax.random.split(key, 3)
    v = jax.random.normal(k_v, (B, No, v_size), dtype=jnp.float32)
    t = jax.random.normal(k_t, (B, Nt, t_size), dtype=jnp.float32)
    v_mask = jnp.array([[1, 1, 1, 1, 1, 1, 1, 1],
                        [1, 1, 1, 1, 1, 0, 0, 0]], dtype=jnp.float32)
    t_mask = jnp.array([[1, 1, 1, 1, 1, 1, 0, 0],
                        [1, 1, 1, 0, 0, 0, 0, 0]], dtype=jnp.float32)

    params = init_params(k_p, v_size, t_size, output_size)

    out_v, out_t = dy_intra_modality_update(v, t, v_mask, t_mask, params, num_head=num_head)
    jax.block_until_ready((out_v, out_t))

    # Reference in f32 on bf16-rounded inputs/weights (the kernel's storage precision);
    # tolerances account for bf16 MXU inputs inside the kernel.
    def _r(x):
        return x.astype(jnp.bfloat16).astype(jnp.float32)

    ref_params = {k: (_r(w) if k.startswith("w_") else w) for k, w in params.items()}
    ref_v, ref_t = reference(_r(v), _r(t), v_mask, t_mask, ref_params, num_head)

    assert jnp.all(jnp.isfinite(out_v)) and jnp.all(jnp.isfinite(out_t)), "non-finite output"
    assert jnp.allclose(out_v, ref_v, atol=5e-2, rtol=5e-2), "v mismatch"
    assert jnp.allclose(out_t, ref_t, atol=5e-2, rtol=5e-2), "t mismatch"

    print("KERNEL_OK")
</pallas_src>

<mosaic_0001>
module attributes {stable_mosaic.version = 11 : i64} {
  func.func @dy_intra_kernel(%arg0: i32, %arg1: memref<1x8x32xbf16, #tpu.memory_space<vmem>>, %arg2: memref<1x8x32xbf16, #tpu.memory_space<vmem>>, %arg3: memref<1x8x1xf32, #tpu.memory_space<vmem>>, %arg4: memref<1x1x8xf32, #tpu.memory_space<vmem>>, %arg5: memref<1x8x1xf32, #tpu.memory_space<vmem>>, %arg6: memref<1x1x8xf32, #tpu.memory_space<vmem>>, %arg7: memref<32x32xbf16, #tpu.memory_space<vmem>>, %arg8: memref<1x32xf32, #tpu.memory_space<vmem>>, %arg9: memref<32x32xbf16, #tpu.memory_space<vmem>>, %arg10: memref<1x32xf32, #tpu.memory_space<vmem>>, %arg11: memref<32x96xbf16, #tpu.memory_space<vmem>>, %arg12: memref<1x96xf32, #tpu.memory_space<vmem>>, %arg13: memref<32x96xbf16, #tpu.memory_space<vmem>>, %arg14: memref<1x96xf32, #tpu.memory_space<vmem>>, %arg15: memref<32x32xbf16, #tpu.memory_space<vmem>>, %arg16: memref<1x32xf32, #tpu.memory_space<vmem>>, %arg17: memref<32x32xbf16, #tpu.memory_space<vmem>>, %arg18: memref<1x32xf32, #tpu.memory_space<vmem>>, %arg19: memref<1x8x32xf32, #tpu.memory_space<vmem>>, %arg20: memref<1x8x32xf32, #tpu.memory_space<vmem>>) attributes {dimension_semantics = [#tpu.dimension_semantics<parallel>], iteration_bounds = array<i64: 2>, scalar_prefetch = 0 : i64, scratch_operands = 0 : i64, tpu.core_type = #tpu.core_type<tc>, window_params = [{transform_indices = @transform_0, window_bounds = array<i64: 1, 8, 32>}, {transform_indices = @transform_1, window_bounds = array<i64: 1, 8, 32>}, {transform_indices = @transform_2, window_bounds = array<i64: 1, 8, 1>}, {transform_indices = @transform_3, window_bounds = array<i64: 1, 1, 8>}, {transform_indices = @transform_4, window_bounds = array<i64: 1, 8, 1>}, {transform_indices = @transform_5, window_bounds = array<i64: 1, 1, 8>}, {pipeline_mode = #tpu.pipeline_mode<synchronous>, transform_indices = @transform_6, window_bounds = array<i64: 32, 32>}, {pipeline_mode = #tpu.pipeline_mode<synchronous>, transform_indices = @transform_7, window_bounds = array<i64: 1, 32>}, {pipeline_mode = #tpu.pipeline_mode<synchronous>, transform_indices = @transform_8, window_bounds = array<i64: 32, 32>}, {pipeline_mode = #tpu.pipeline_mode<synchronous>, transform_indices = @transform_9, window_bounds = array<i64: 1, 32>}, {pipeline_mode = #tpu.pipeline_mode<synchronous>, transform_indices = @transform_10, window_bounds = array<i64: 32, 96>}, {pipeline_mode = #tpu.pipeline_mode<synchronous>, transform_indices = @transform_11, window_bounds = array<i64: 1, 96>}, {pipeline_mode = #tpu.pipeline_mode<synchronous>, transform_indices = @transform_12, window_bounds = array<i64: 32, 96>}, {pipeline_mode = #tpu.pipeline_mode<synchronous>, transform_indices = @transform_13, window_bounds = array<i64: 1, 96>}, {pipeline_mode = #tpu.pipeline_mode<synchronous>, transform_indices = @transform_14, window_bounds = array<i64: 32, 32>}, {pipeline_mode = #tpu.pipeline_mode<synchronous>, transform_indices = @transform_15, window_bounds = array<i64: 1, 32>}, {pipeline_mode = #tpu.pipeline_mode<synchronous>, transform_indices = @transform_16, window_bounds = array<i64: 32, 32>}, {pipeline_mode = #tpu.pipeline_mode<synchronous>, transform_indices = @transform_17, window_bounds = array<i64: 1, 32>}, {transform_indices = @transform_18, window_bounds = array<i64: 1, 8, 32>}, {transform_indices = @transform_19, window_bounds = array<i64: 1, 8, 32>}]} {
    %c0 = arith.constant 0 : index
    %c0_0 = arith.constant 0 : index
    %c0_1 = arith.constant 0 : index
    %0 = vector.load %arg1[%c0, %c0_0, %c0_1] : memref<1x8x32xbf16, #tpu.memory_space<vmem>>, vector<1x8x32xbf16>
    %1 = vector.shape_cast %0 : vector<1x8x32xbf16> to vector<8x32xbf16>
    %c0_2 = arith.constant 0 : index
    %c0_3 = arith.constant 0 : index
    %c0_4 = arith.constant 0 : index
    %2 = vector.load %arg2[%c0_2, %c0_3, %c0_4] : memref<1x8x32xbf16, #tpu.memory_space<vmem>>, vector<1x8x32xbf16>
    %3 = vector.shape_cast %2 : vector<1x8x32xbf16> to vector<8x32xbf16>
    %c0_5 = arith.constant 0 : index
    %c0_6 = arith.constant 0 : index
    %c0_7 = arith.constant 0 : index
    %4 = vector.load %arg3[%c0_5, %c0_6, %c0_7] : memref<1x8x1xf32, #tpu.memory_space<vmem>>, vector<1x8x1xf32>
    %5 = vector.shape_cast %4 : vector<1x8x1xf32> to vector<8x1xf32>
    %c0_8 = arith.constant 0 : index
    %c0_9 = arith.constant 0 : index
    %c0_10 = arith.constant 0 : index
    %6 = vector.load %arg4[%c0_8, %c0_9, %c0_10] : memref<1x1x8xf32, #tpu.memory_space<vmem>>, vector<1x1x8xf32>
    %7 = vector.shape_cast %6 : vector<1x1x8xf32> to vector<1x8xf32>
    %c0_11 = arith.constant 0 : index
    %c0_12 = arith.constant 0 : index
    %c0_13 = arith.constant 0 : index
    %8 = vector.load %arg5[%c0_11, %c0_12, %c0_13] : memref<1x8x1xf32, #tpu.memory_space<vmem>>, vector<1x8x1xf32>
    %9 = vector.shape_cast %8 : vector<1x8x1xf32> to vector<8x1xf32>
    %c0_14 = arith.constant 0 : index
    %c0_15 = arith.constant 0 : index
    %c0_16 = arith.constant 0 : index
    %10 = vector.load %arg6[%c0_14, %c0_15, %c0_16] : memref<1x1x8xf32, #tpu.memory_space<vmem>>, vector<1x1x8xf32>
    %11 = vector.shape_cast %10 : vector<1x1x8xf32> to vector<1x8xf32>
    %cst = arith.constant 0.000000e+00 : f32
    %12 = vector.broadcast %cst : f32 to vector<1x8xf32>
    %13 = arith.cmpf oeq, %7, %12 : vector<1x8xf32>
    %cst_17 = arith.constant -1.000000e+30 : f32
    %cst_18 = arith.constant 0.000000e+00 : f32
    %14 = vector.broadcast %cst_17 : f32 to vector<1x8xf32>
    %15 = vector.broadcast %cst_18 : f32 to vector<1x8xf32>
    %16 = arith.select %13, %14, %15 : vector<1x8xi1>, vector<1x8xf32>
    %cst_19 = arith.constant 0.000000e+00 : f32
    %17 = vector.broadcast %cst_19 : f32 to vector<1x8xf32>
    %18 = arith.cmpf oeq, %11, %17 : vector<1x8xf32>
    %cst_20 = arith.constant -1.000000e+30 : f32
    %cst_21 = arith.constant 0.000000e+00 : f32
    %19 = vector.broadcast %cst_20 : f32 to vector<1x8xf32>
    %20 = vector.broadcast %cst_21 : f32 to vector<1x8xf32>
    %21 = arith.select %18, %19, %20 : vector<1x8xi1>, vector<1x8xf32>
    %cst_22 = arith.constant dense<0.000000e+00> : vector<1xf32>
    %22 = vector.multi_reduction <add>, %7, %cst_22 [1] : vector<1x8xf32> to vector<1xf32>
    %23 = vector.shape_cast %22 : vector<1xf32> to vector<1x1xf32>
    %24 = tpu.reciprocal %23 : vector<1x1xf32> -> vector<1x1xf32>
    %cst_23 = arith.constant dense<0.000000e+00> : vector<1xf32>
    %25 = vector.multi_reduction <add>, %11, %cst_23 [1] : vector<1x8xf32> to vector<1xf32>
    %26 = vector.shape_cast %25 : vector<1xf32> to vector<1x1xf32>
    %27 = tpu.reciprocal %26 : vector<1x1xf32> -> vector<1x1xf32>
    %28 = arith.truncf %7 : vector<1x8xf32> to vector<1x8xbf16>
    %cst_24 = arith.constant dense<0.000000e+00> : vector<1x32xf32>
    %29 = tpu.matmul %28, %1, %cst_24 {dimension_numbers = #tpu.dot_dimension_numbers<[1], [0], [0], [1], [0, 0, 1, 1], [], []>} : vector<1x8xbf16>, vector<8x32xbf16>, vector<1x32xf32> -> vector<1x32xf32>
    %30 = vector.broadcast %24 : vector<1x1xf32> to vector<1x32xf32>
    %31 = arith.mulf %29, %30 : vector<1x32xf32>
    %32 = arith.truncf %11 : vector<1x8xf32> to vector<1x8xbf16>
    %cst_25 = arith.constant dense<0.000000e+00> : vector<1x32xf32>
    %33 = tpu.matmul %32, %3, %cst_25 {dimension_numbers = #tpu.dot_dimension_numbers<[1], [0], [0], [1], [0, 0, 1, 1], [], []>} : vector<1x8xbf16>, vector<8x32xbf16>, vector<1x32xf32> -> vector<1x32xf32>
    %34 = vector.broadcast %27 : vector<1x1xf32> to vector<1x32xf32>
    %35 = arith.mulf %33, %34 : vector<1x32xf32>
    %cst_26 = arith.constant 0.000000e+00 : f32
    %36 = vector.broadcast %cst_26 : f32 to vector<1x32xf32>
    %37 = arith.maximumf %31, %36 : vector<1x32xf32>
    %38 = arith.truncf %37 : vector<1x32xf32> to vector<1x32xbf16>
    %c0_27 = arith.constant 0 : index
    %c0_28 = arith.constant 0 : index
    %39 = vector.load %arg7[%c0_27, %c0_28] : memref<32x32xbf16, #tpu.memory_space<vmem>>, vector<32x32xbf16>
    %cst_29 = arith.constant dense<0.000000e+00> : vector<1x32xf32>
    %40 = tpu.matmul %38, %39, %cst_29 {dimension_numbers = #tpu.dot_dimension_numbers<[1], [0], [0], [1], [0, 0, 1, 1], [], []>} : vector<1x32xbf16>, vector<32x32xbf16>, vector<1x32xf32> -> vector<1x32xf32>
    %c0_30 = arith.constant 0 : index
    %c0_31 = arith.constant 0 : index
    %41 = vector.load %arg8[%c0_30, %c0_31] : memref<1x32xf32, #tpu.memory_space<vmem>>, vector<1x32xf32>
    %42 = arith.addf %40, %41 : vector<1x32xf32>
    %43 = arith.negf %42 : vector<1x32xf32>
    %44 = math.exp %43 : vector<1x32xf32>
    %cst_32 = arith.constant 1.000000e+00 : f32
    %45 = vector.broadcast %cst_32 : f32 to vector<1x32xf32>
    %46 = arith.addf %45, %44 : vector<1x32xf32>
    %47 = arith.divf %45, %46 : vector<1x32xf32>
    %cst_33 = arith.constant 0.000000e+00 : f32
    %48 = vector.broadcast %cst_33 : f32 to vector<1x32xf32>
    %49 = arith.maximumf %35, %48 : vector<1x32xf32>
    %50 = arith.truncf %49 : vector<1x32xf32> to vector<1x32xbf16>
    %c0_34 = arith.constant 0 : index
    %c0_35 = arith.constant 0 : index
    %51 = vector.load %arg9[%c0_34, %c0_35] : memref<32x32xbf16, #tpu.memory_space<vmem>>, vector<32x32xbf16>
    %cst_36 = arith.constant dense<0.000000e+00> : vector<1x32xf32>
    %52 = tpu.matmul %50, %51, %cst_36 {dimension_numbers = #tpu.dot_dimension_numbers<[1], [0], [0], [1], [0, 0, 1, 1], [], []>} : vector<1x32xbf16>, vector<32x32xbf16>, vector<1x32xf32> -> vector<1x32xf32>
    %c0_37 = arith.constant 0 : index
    %c0_38 = arith.constant 0 : index
    %53 = vector.load %arg10[%c0_37, %c0_38] : memref<1x32xf32, #tpu.memory_space<vmem>>, vector<1x32xf32>
    %54 = arith.addf %52, %53 : vector<1x32xf32>
    %55 = arith.negf %54 : vector<1x32xf32>
    %56 = math.exp %55 : vector<1x32xf32>
    %cst_39 = arith.constant 1.000000e+00 : f32
    %57 = vector.broadcast %cst_39 : f32 to vector<1x32xf32>
    %58 = arith.addf %57, %56 : vector<1x32xf32>
    %59 = arith.divf %57, %58 : vector<1x32xf32>
    %cst_40 = arith.constant 0.000000e+00 : bf16
    %60 = vector.broadcast %cst_40 : bf16 to vector<8x32xbf16>
    %61 = arith.maximumf %1, %60 : vector<8x32xbf16>
    %c0_41 = arith.constant 0 : index
    %c0_42 = arith.constant 0 : index
    %62 = vector.load %arg11[%c0_41, %c0_42] : memref<32x96xbf16, #tpu.memory_space<vmem>>, vector<32x96xbf16>
    %cst_43 = arith.constant dense<0.000000e+00> : vector<8x96xf32>
    %63 = tpu.matmul %61, %62, %cst_43 {dimension_numbers = #tpu.dot_dimension_numbers<[1], [0], [0], [1], [0, 0, 1, 1], [], []>} : vector<8x32xbf16>, vector<32x96xbf16>, vector<8x96xf32> -> vector<8x96xf32>
    %c0_44 = arith.constant 0 : index
    %c0_45 = arith.constant 0 : index
    %64 = vector.load %arg12[%c0_44, %c0_45] : memref<1x96xf32, #tpu.memory_space<vmem>>, vector<1x96xf32>
    %65 = vector.broadcast %64 : vector<1x96xf32> to vector<8x96xf32>
    %66 = arith.addf %63, %65 : vector<8x96xf32>
    %67 = vector.broadcast %5 : vector<8x1xf32> to vector<8x96xf32>
    %68 = arith.mulf %66, %67 : vector<8x96xf32>
    %cst_46 = arith.constant 0.000000e+00 : bf16
    %69 = vector.broadcast %cst_46 : bf16 to vector<8x32xbf16>
    %70 = arith.maximumf %3, %69 : vector<8x32xbf16>
    %c0_47 = arith.constant 0 : index
    %c0_48 = arith.constant 0 : index
    %71 = vector.load %arg13[%c0_47, %c0_48] : memref<32x96xbf16, #tpu.memory_space<vmem>>, vector<32x96xbf16>
    %cst_49 = arith.constant dense<0.000000e+00> : vector<8x96xf32>
    %72 = tpu.matmul %70, %71, %cst_49 {dimension_numbers = #tpu.dot_dimension_numbers<[1], [0], [0], [1], [0, 0, 1, 1], [], []>} : vector<8x32xbf16>, vector<32x96xbf16>, vector<8x96xf32> -> vector<8x96xf32>
    %c0_50 = arith.constant 0 : index
    %c0_51 = arith.constant 0 : index
    %73 = vector.load %arg14[%c0_50, %c0_51] : memref<1x96xf32, #tpu.memory_space<vmem>>, vector<1x96xf32>
    %74 = vector.broadcast %73 : vector<1x96xf32> to vector<8x96xf32>
    %75 = arith.addf %72, %74 : vector<8x96xf32>
    %76 = vector.broadcast %9 : vector<8x1xf32> to vector<8x96xf32>
    %77 = arith.mulf %75, %76 : vector<8x96xf32>
    %78 = vector.extract_strided_slice %68 {offsets = [0, 0], sizes = [8, 32], strides = [1, 1]} : vector<8x96xf32> to vector<8x32xf32>
    %79 = vector.extract_strided_slice %68 {offsets = [0, 32], sizes = [8, 32], strides = [1, 1]} : vector<8x96xf32> to vector<8x32xf32>
    %80 = vector.extract_strided_slice %68 {offsets = [0, 64], sizes = [8, 32], strides = [1, 1]} : vector<8x96xf32> to vector<8x32xf32>
    %81 = vector.extract_strided_slice %77 {offsets = [0, 0], sizes = [8, 32], strides = [1, 1]} : vector<8x96xf32> to vector<8x32xf32>
    %82 = vector.extract_strided_slice %77 {offsets = [0, 32], sizes = [8, 32], strides = [1, 1]} : vector<8x96xf32> to vector<8x32xf32>
    %83 = vector.extract_strided_slice %77 {offsets = [0, 64], sizes = [8, 32], strides = [1, 1]} : vector<8x96xf32> to vector<8x32xf32>
    %cst_52 = arith.constant 1.000000e+00 : f32
    %84 = vector.broadcast %cst_52 : f32 to vector<1x32xf32>
    %85 = arith.addf %84, %59 : vector<1x32xf32>
    %cst_53 = arith.constant 1.000000e+00 : f32
    %86 = vector.broadcast %cst_53 : f32 to vector<1x32xf32>
    %87 = arith.addf %86, %47 : vector<1x32xf32>
    %88 = vector.broadcast %85 : vector<1x32xf32> to vector<8x32xf32>
    %89 = arith.mulf %88, %79 : vector<8x32xf32>
    %90 = vector.broadcast %85 : vector<1x32xf32> to vector<8x32xf32>
    %91 = arith.mulf %90, %78 : vector<8x32xf32>
    %cst_54 = arith.constant 0.353553385 : f32
    %92 = vector.broadcast %cst_54 : f32 to vector<8x32xf32>
    %93 = arith.mulf %89, %92 : vector<8x32xf32>
    %94 = arith.truncf %93 : vector<8x32xf32> to vector<8x32xbf16>
    %95 = vector.shape_cast %94 : vector<8x32xbf16> to vector<8x4x8xbf16>
    %96 = tpu.transpose %95, [1, 0, 2] : vector<8x4x8xbf16> -> vector<4x8x8xbf16>
    %97 = arith.truncf %91 : vector<8x32xf32> to vector<8x32xbf16>
    %98 = vector.shape_cast %97 : vector<8x32xbf16> to vector<8x4x8xbf16>
    %99 = tpu.transpose %98, [1, 0, 2] : vector<8x4x8xbf16> -> vector<4x8x8xbf16>
    %100 = arith.truncf %80 : vector<8x32xf32> to vector<8x32xbf16>
    %101 = vector.shape_cast %100 : vector<8x32xbf16> to vector<8x4x8xbf16>
    %102 = tpu.transpose %101, [1, 0, 2] : vector<8x4x8xbf16> -> vector<4x8x8xbf16>
    "tpu.trace_start"() <{level = 10 : i32, message = "hqd,hkd->hqk"}> : () -> ()
    %cst_55 = arith.constant dense<0.000000e+00> : vector<4x8x8xf32>
    %103 = tpu.matmul %96, %99, %cst_55 {dimension_numbers = #tpu.dot_dimension_numbers<[2], [2], [1], [1], [0, 0, 0, 1, 1, 1], [0], [0]>} : vector<4x8x8xbf16>, vector<4x8x8xbf16>, vector<4x8x8xf32> -> vector<4x8x8xf32>
    "tpu.trace_stop"() : () -> ()
    %104 = vector.shape_cast %16 : vector<1x8xf32> to vector<1x1x8xf32>
    %105 = vector.broadcast %104 : vector<1x1x8xf32> to vector<4x8x8xf32>
    %106 = arith.addf %103, %105 : vector<4x8x8xf32>
    %cst_56 = arith.constant dense<0xFF800000> : vector<4x8xf32>
    %107 = vector.multi_reduction <maximumf>, %106, %cst_56 [2] : vector<4x8x8xf32> to vector<4x8xf32>
    %108 = vector.shape_cast %107 : vector<4x8xf32> to vector<4x8x1xf32>
    %109 = vector.broadcast %108 : vector<4x8x1xf32> to vector<4x8x8xf32>
    %110 = arith.subf %106, %109 : vector<4x8x8xf32>
    %111 = math.exp %110 : vector<4x8x8xf32>
    %cst_57 = arith.constant dense<0.000000e+00> : vector<4x8xf32>
    %112 = vector.multi_reduction <add>, %111, %cst_57 [2] : vector<4x8x8xf32> to vector<4x8xf32>
    %113 = vector.shape_cast %112 : vector<4x8xf32> to vector<4x8x1xf32>
    %114 = arith.truncf %111 : vector<4x8x8xf32> to vector<4x8x8xbf16>
    "tpu.trace_start"() <{level = 10 : i32, message = "hqk,hkd->hqd"}> : () -> ()
    %cst_58 = arith.constant dense<0.000000e+00> : vector<4x8x8xf32>
    %115 = tpu.matmul %114, %102, %cst_58 {dimension_numbers = #tpu.dot_dimension_numbers<[2], [1], [1], [2], [0, 0, 0, 1, 1, 2], [0], [0]>} : vector<4x8x8xbf16>, vector<4x8x8xbf16>, vector<4x8x8xf32> -> vector<4x8x8xf32>
    "tpu.trace_stop"() : () -> ()
    %116 = tpu.reciprocal %113 : vector<4x8x1xf32> -> vector<4x8x1xf32>
    %117 = vector.broadcast %116 : vector<4x8x1xf32> to vector<4x8x8xf32>
    %118 = arith.mulf %115, %117 : vector<4x8x8xf32>
    %119 = tpu.transpose %118, [1, 0, 2] : vector<4x8x8xf32> -> vector<8x4x8xf32>
    %120 = vector.shape_cast %119 : vector<8x4x8xf32> to vector<8x32xf32>
    %121 = vector.broadcast %87 : vector<1x32xf32> to vector<8x32xf32>
    %122 = arith.mulf %121, %82 : vector<8x32xf32>
    %123 = vector.broadcast %87 : vector<1x32xf32> to vector<8x32xf32>
    %124 = arith.mulf %123, %81 : vector<8x32xf32>
    %cst_59 = arith.constant 0.353553385 : f32
    %125 = vector.broadcast %cst_59 : f32 to vector<8x32xf32>
    %126 = arith.mulf %122, %125 : vector<8x32xf32>
    %127 = arith.truncf %126 : vector<8x32xf32> to vector<8x32xbf16>
    %128 = vector.shape_cast %127 : vector<8x32xbf16> to vector<8x4x8xbf16>
    %129 = tpu.transpose %128, [1, 0, 2] : vector<8x4x8xbf16> -> vector<4x8x8xbf16>
    %130 = arith.truncf %124 : vector<8x32xf32> to vector<8x32xbf16>
    %131 = vector.shape_cast %130 : vector<8x32xbf16> to vector<8x4x8xbf16>
    %132 = tpu.transpose %131, [1, 0, 2] : vector<8x4x8xbf16> -> vector<4x8x8xbf16>
    %133 = arith.truncf %83 : vector<8x32xf32> to vector<8x32xbf16>
    %134 = vector.shape_cast %133 : vector<8x32xbf16> to vector<8x4x8xbf16>
    %135 = tpu.transpose %134, [1, 0, 2] : vector<8x4x8xbf16> -> vector<4x8x8xbf16>
    "tpu.trace_start"() <{level = 10 : i32, message = "hqd,hkd->hqk"}> : () -> ()
    %cst_60 = arith.constant dense<0.000000e+00> : vector<4x8x8xf32>
    %136 = tpu.matmul %129, %132, %cst_60 {dimension_numbers = #tpu.dot_dimension_numbers<[2], [2], [1], [1], [0, 0, 0, 1, 1, 1], [0], [0]>} : vector<4x8x8xbf16>, vector<4x8x8xbf16>, vector<4x8x8xf32> -> vector<4x8x8xf32>
    "tpu.trace_stop"() : () -> ()
    %137 = vector.shape_cast %21 : vector<1x8xf32> to vector<1x1x8xf32>
    %138 = vector.broadcast %137 : vector<1x1x8xf32> to vector<4x8x8xf32>
    %139 = arith.addf %136, %138 : vector<4x8x8xf32>
    %cst_61 = arith.constant dense<0xFF800000> : vector<4x8xf32>
    %140 = vector.multi_reduction <maximumf>, %139, %cst_61 [2] : vector<4x8x8xf32> to vector<4x8xf32>
    %141 = vector.shape_cast %140 : vector<4x8xf32> to vector<4x8x1xf32>
    %142 = vector.broadcast %141 : vector<4x8x1xf32> to vector<4x8x8xf32>
    %143 = arith.subf %139, %142 : vector<4x8x8xf32>
    %144 = math.exp %143 : vector<4x8x8xf32>
    %cst_62 = arith.constant dense<0.000000e+00> : vector<4x8xf32>
    %145 = vector.multi_reduction <add>, %144, %cst_62 [2] : vector<4x8x8xf32> to vector<4x8xf32>
    %146 = vector.shape_cast %145 : vector<4x8xf32> to vector<4x8x1xf32>
    %147 = arith.truncf %144 : vector<4x8x8xf32> to vector<4x8x8xbf16>
    "tpu.trace_start"() <{level = 10 : i32, message = "hqk,hkd->hqd"}> : () -> ()
    %cst_63 = arith.constant dense<0.000000e+00> : vector<4x8x8xf32>
    %148 = tpu.matmul %147, %135, %cst_63 {dimension_numbers = #tpu.dot_dimension_numbers<[2], [1], [1], [2], [0, 0, 0, 1, 1, 2], [0], [0]>} : vector<4x8x8xbf16>, vector<4x8x8xbf16>, vector<4x8x8xf32> -> vector<4x8x8xf32>
    "tpu.trace_stop"() : () -> ()
    %149 = tpu.reciprocal %146 : vector<4x8x1xf32> -> vector<4x8x1xf32>
    %150 = vector.broadcast %149 : vector<4x8x1xf32> to vector<4x8x8xf32>
    %151 = arith.mulf %148, %150 : vector<4x8x8xf32>
    %152 = tpu.transpose %151, [1, 0, 2] : vector<4x8x8xf32> -> vector<8x4x8xf32>
    %153 = vector.shape_cast %152 : vector<8x4x8xf32> to vector<8x32xf32>
    %154 = arith.extf %1 : vector<8x32xbf16> to vector<8x32xf32>
    %155 = arith.addf %154, %120 : vector<8x32xf32>
    %156 = arith.truncf %155 : vector<8x32xf32> to vector<8x32xbf16>
    %c0_64 = arith.constant 0 : index
    %c0_65 = arith.constant 0 : index
    %157 = vector.load %arg15[%c0_64, %c0_65] : memref<32x32xbf16, #tpu.memory_space<vmem>>, vector<32x32xbf16>
    %cst_66 = arith.constant dense<0.000000e+00> : vector<8x32xf32>
    %158 = tpu.matmul %156, %157, %cst_66 {dimension_numbers = #tpu.dot_dimension_numbers<[1], [0], [0], [1], [0, 0, 1, 1], [], []>} : vector<8x32xbf16>, vector<32x32xbf16>, vector<8x32xf32> -> vector<8x32xf32>
    %c0_67 = arith.constant 0 : index
    %c0_68 = arith.constant 0 : index
    %159 = vector.load %arg16[%c0_67, %c0_68] : memref<1x32xf32, #tpu.memory_space<vmem>>, vector<1x32xf32>
    %160 = vector.broadcast %159 : vector<1x32xf32> to vector<8x32xf32>
    %161 = arith.addf %158, %160 : vector<8x32xf32>
    %c0_69 = arith.constant 0 : index
    %c0_70 = arith.constant 0 : index
    %c0_71 = arith.constant 0 : index
    %162 = vector.load %arg19[%c0_69, %c0_70, %c0_71] : memref<1x8x32xf32, #tpu.memory_space<vmem>>, vector<1x8x32xf32>
    %163 = vector.shape_cast %162 : vector<1x8x32xf32> to vector<8x32xf32>
    %164 = vector.shape_cast %161 : vector<8x32xf32> to vector<1x8x32xf32>
    tpu.vector_store %arg19[%c0_69, %c0_70, %c0_71], %164 {strides = array<i32>} : memref<1x8x32xf32, #tpu.memory_space<vmem>>, vector<1x8x32xf32>,
    %165 = arith.extf %3 : vector<8x32xbf16> to vector<8x32xf32>
    %166 = arith.addf %165, %153 : vector<8x32xf32>
    %167 = arith.truncf %166 : vector<8x32xf32> to vector<8x32xbf16>
    %c0_72 = arith.constant 0 : index
    %c0_73 = arith.constant 0 : index
    %168 = vector.load %arg17[%c0_72, %c0_73] : memref<32x32xbf16, #tpu.memory_space<vmem>>, vector<32x32xbf16>
    %cst_74 = arith.constant dense<0.000000e+00> : vector<8x32xf32>
    %169 = tpu.matmul %167, %168, %cst_74 {dimension_numbers = #tpu.dot_dimension_numbers<[1], [0], [0], [1], [0, 0, 1, 1], [], []>} : vector<8x32xbf16>, vector<32x32xbf16>, vector<8x32xf32> -> vector<8x32xf32>
    %c0_75 = arith.constant 0 : index
    %c0_76 = arith.constant 0 : index
    %170 = vector.load %arg18[%c0_75, %c0_76] : memref<1x32xf32, #tpu.memory_space<vmem>>, vector<1x32xf32>
    %171 = vector.broadcast %170 : vector<1x32xf32> to vector<8x32xf32>
    %172 = arith.addf %169, %171 : vector<8x32xf32>
    %c0_77 = arith.constant 0 : index
    %c0_78 = arith.constant 0 : index
    %c0_79 = arith.constant 0 : index
    %173 = vector.load %arg20[%c0_77, %c0_78, %c0_79] : memref<1x8x32xf32, #tpu.memory_space<vmem>>, vector<1x8x32xf32>
    %174 = vector.shape_cast %173 : vector<1x8x32xf32> to vector<8x32xf32>
    %175 = vector.shape_cast %172 : vector<8x32xf32> to vector<1x8x32xf32>
    tpu.vector_store %arg20[%c0_77, %c0_78, %c0_79], %175 {strides = array<i32>} : memref<1x8x32xf32, #tpu.memory_space<vmem>>, vector<1x8x32xf32>,
    return
  }
  func.func @transform_0(%arg0: i32) -> (i32, i32, i32) {
    %c0_i32 = arith.constant 0 : i32
    %c0_i32_0 = arith.constant 0 : i32
    %c0_i32_1 = arith.constant 0 : i32
    return %arg0, %c0_i32, %c0_i32_0 : i32, i32, i32
  }
  func.func @transform_1(%arg0: i32) -> (i32, i32, i32) {
    %c0_i32 = arith.constant 0 : i32
    %c0_i32_0 = arith.constant 0 : i32
    %c0_i32_1 = arith.constant 0 : i32
    return %arg0, %c0_i32, %c0_i32_0 : i32, i32, i32
  }
  func.func @transform_2(%arg0: i32) -> (i32, i32, i32) {
    %c0_i32 = arith.constant 0 : i32
    %c0_i32_0 = arith.constant 0 : i32
    %c0_i32_1 = arith.constant 0 : i32
    return %arg0, %c0_i32, %c0_i32_0 : i32, i32, i32
  }
  func.func @transform_3(%arg0: i32) -> (i32, i32, i32) {
    %c0_i32 = arith.constant 0 : i32
    %c0_i32_0 = arith.constant 0 : i32
    %c0_i32_1 = arith.constant 0 : i32
    return %arg0, %c0_i32, %c0_i32_0 : i32, i32, i32
  }
  func.func @transform_4(%arg0: i32) -> (i32, i32, i32) {
    %c0_i32 = arith.constant 0 : i32
    %c0_i32_0 = arith.constant 0 : i32
    %c0_i32_1 = arith.constant 0 : i32
    return %arg0, %c0_i32, %c0_i32_0 : i32, i32, i32
  }
  func.func @transform_5(%arg0: i32) -> (i32, i32, i32) {
    %c0_i32 = arith.constant 0 : i32
    %c0_i32_0 = arith.constant 0 : i32
    %c0_i32_1 = arith.constant 0 : i32
    return %arg0, %c0_i32, %c0_i32_0 : i32, i32, i32
  }
  func.func @transform_6(%arg0: i32) -> (i32, i32) {
    %c0_i32 = arith.constant 0 : i32
    %c0_i32_0 = arith.constant 0 : i32
    %c0_i32_1 = arith.constant 0 : i32
    return %c0_i32, %c0_i32_0 : i32, i32
  }
  func.func @transform_7(%arg0: i32) -> (i32, i32) {
    %c0_i32 = arith.constant 0 : i32
    %c0_i32_0 = arith.constant 0 : i32
    %c0_i32_1 = arith.constant 0 : i32
    return %c0_i32, %c0_i32_0 : i32, i32
  }
  func.func @transform_8(%arg0: i32) -> (i32, i32) {
    %c0_i32 = arith.constant 0 : i32
    %c0_i32_0 = arith.constant 0 : i32
    %c0_i32_1 = arith.constant 0 : i32
    return %c0_i32, %c0_i32_0 : i32, i32
  }
  func.func @transform_9(%arg0: i32) -> (i32, i32) {
    %c0_i32 = arith.constant 0 : i32
    %c0_i32_0 = arith.constant 0 : i32
    %c0_i32_1 = arith.constant 0 : i32
    return %c0_i32, %c0_i32_0 : i32, i32
  }
  func.func @transform_10(%arg0: i32) -> (i32, i32) {
    %c0_i32 = arith.constant 0 : i32
    %c0_i32_0 = arith.constant 0 : i32
    %c0_i32_1 = arith.constant 0 : i32
    return %c0_i32, %c0_i32_0 : i32, i32
  }
  func.func @transform_11(%arg0: i32) -> (i32, i32) {
    %c0_i32 = arith.constant 0 : i32
    %c0_i32_0 = arith.constant 0 : i32
    %c0_i32_1 = arith.constant 0 : i32
    return %c0_i32, %c0_i32_0 : i32, i32
  }
  func.func @transform_12(%arg0: i32) -> (i32, i32) {
    %c0_i32 = arith.constant 0 : i32
    %c0_i32_0 = arith.constant 0 : i32
    %c0_i32_1 = arith.constant 0 : i32
    return %c0_i32, %c0_i32_0 : i32, i32
  }
  func.func @transform_13(%arg0: i32) -> (i32, i32) {
    %c0_i32 = arith.constant 0 : i32
    %c0_i32_0 = arith.constant 0 : i32
    %c0_i32_1 = arith.constant 0 : i32
    return %c0_i32, %c0_i32_0 : i32, i32
  }
  func.func @transform_14(%arg0: i32) -> (i32, i32) {
    %c0_i32 = arith.constant 0 : i32
    %c0_i32_0 = arith.constant 0 : i32
    %c0_i32_1 = arith.constant 0 : i32
    return %c0_i32, %c0_i32_0 : i32, i32
  }
  func.func @transform_15(%arg0: i32) -> (i32, i32) {
    %c0_i32 = arith.constant 0 : i32
    %c0_i32_0 = arith.constant 0 : i32
    %c0_i32_1 = arith.constant 0 : i32
    return %c0_i32, %c0_i32_0 : i32, i32
  }
  func.func @transform_16(%arg0: i32) -> (i32, i32) {
    %c0_i32 = arith.constant 0 : i32
    %c0_i32_0 = arith.constant 0 : i32
    %c0_i32_1 = arith.constant 0 : i32
    return %c0_i32, %c0_i32_0 : i32, i32
  }
  func.func @transform_17(%arg0: i32) -> (i32, i32) {
    %c0_i32 = arith.constant 0 : i32
    %c0_i32_0 = arith.constant 0 : i32
    %c0_i32_1 = arith.constant 0 : i32
    return %c0_i32, %c0_i32_0 : i32, i32
  }
  func.func @transform_18(%arg0: i32) -> (i32, i32, i32) {
    %c0_i32 = arith.constant 0 : i32
    %c0_i32_0 = arith.constant 0 : i32
    %c0_i32_1 = arith.constant 0 : i32
    return %arg0, %c0_i32, %c0_i32_0 : i32, i32, i32
  }
  func.func @transform_19(%arg0: i32) -> (i32, i32, i32) {
    %c0_i32 = arith.constant 0 : i32
    %c0_i32_0 = arith.constant 0 : i32
    %c0_i32_1 = arith.constant 0 : i32
    return %arg0, %c0_i32, %c0_i32_0 : i32, i32, i32
  }
}

</mosaic_0001>

<llo_original>
// kernel: tpu_custom_call.1
$region0: #{tpu_custom_call.1}
  #allocation0 [shape = 'u32[]', space=smem, size = 0x4, offset = 0x4, fixed_abs, tag = 'smem constant byte address 0x4 - core index']
  #allocation1 [shape = 'u32[144,128]{1,0:T(1,128)}', space=vmem, size = 0x12000, scoped, tag = 'internal scratch']
  %s0 = inlined_call_operand.hbm [shape: bf16[2,8,32], index: 0, kind: input, shape index: {}]
  %s1 = inlined_call_operand.hbm [shape: bf16[2,8,32], index: 1, kind: input, shape index: {}]
  %s2 = inlined_call_operand.vmem [shape: f32[2,8,1], index: 2, kind: input, shape index: {}]
  %s3 = inlined_call_operand.hbm [shape: f32[2,1,8], index: 3, kind: input, shape index: {}]
  %s4 = inlined_call_operand.vmem [shape: f32[2,8,1], index: 4, kind: input, shape index: {}]
  %s5 = inlined_call_operand.hbm [shape: f32[2,1,8], index: 5, kind: input, shape index: {}]
  %s6 = inlined_call_operand.vmem [shape: bf16[32,32], index: 6, kind: input, shape index: {}]
  %s7 = inlined_call_operand.hbm [shape: f32[1,32], index: 7, kind: input, shape index: {}]
  %s8 = inlined_call_operand.vmem [shape: bf16[32,32], index: 8, kind: input, shape index: {}]
  %s9 = inlined_call_operand.hbm [shape: f32[1,32], index: 9, kind: input, shape index: {}]
  %s10 = inlined_call_operand.vmem [shape: bf16[32,96], index: 10, kind: input, shape index: {}]
  %s11 = inlined_call_operand.hbm [shape: f32[1,96], index: 11, kind: input, shape index: {}]
  %s12 = inlined_call_operand.vmem [shape: bf16[32,96], index: 12, kind: input, shape index: {}]
  %s13 = inlined_call_operand.hbm [shape: f32[1,96], index: 13, kind: input, shape index: {}]
  %s14 = inlined_call_operand.vmem [shape: bf16[32,32], index: 14, kind: input, shape index: {}]
  %s15 = inlined_call_operand.hbm [shape: f32[1,32], index: 15, kind: input, shape index: {}]
  %s16 = inlined_call_operand.vmem [shape: bf16[32,32], index: 16, kind: input, shape index: {}]
  %s17 = inlined_call_operand.vmem [shape: f32[1,32], index: 17, kind: input, shape index: {}]
  %s18 = inlined_call_operand.hbm [shape: f32[2,8,32], index: 18, kind: output, shape index: {0}]
  %s19 = inlined_call_operand.hbm [shape: f32[2,8,32], index: 19, kind: output, shape index: {1}]
  %20 = xla_tuple %s18, %s19
  %s21 = sld [smem:[#allocation0]]
  $region149: #{tpu_custom_call.1} parent=0
    _
  %s23 = ssub.s32 1, %s21
  %s24 = scalar_select 0, %s23, %s21
  $region1: #{tpu_custom_call.1} parent=0
    #allocation2 [shape = 'u8[4096]{0}', space=vmem, size = 0x1000, scoped, tag = 'input window, operand 0']
    #allocation3 [shape = 's32[2]{0}', space=sflag, size = 0x8, scoped, tag = 'scoped memory for tpu_custom_call.1']
    #allocation4 [shape = 's32[2]{0}', space=sflag, size = 0x8, scoped, tag = 'scoped memory for tpu_custom_call.1']
    #allocation5 [shape = 'u8[4096]{0}', space=vmem, size = 0x1000, scoped, tag = 'input window, operand 1']
    #allocation6 [shape = 's32[2]{0}', space=sflag, size = 0x8, scoped, tag = 'scoped memory for tpu_custom_call.1']
    #allocation7 [shape = 'u8[1024]{0}', space=vmem, size = 0x400, scoped, tag = 'input window, operand 3']
    #allocation8 [shape = 'u8[1024]{0}', space=vmem, size = 0x400, scoped, tag = 'input window, operand 5']
    #allocation9 [shape = 's32[2]{0}', space=sflag, size = 0x8, scoped, tag = 'scoped memory for tpu_custom_call.1']
    #allocation10 [shape = 'u8[512]{0}', space=vmem, size = 0x400, scoped, tag = 'input window, operand 7, single buffered']
    #allocation11 [shape = 'u8[512]{0}', space=vmem, size = 0x400, scoped, tag = 'input window, operand 9, single buffered']
    #allocation12 [shape = 's32[1]{0}', space=sflag, size = 0x4, scoped, tag = 'scoped memory for tpu_custom_call.1']
    #allocation13 [shape = 'u8[512]{0}', space=vmem, size = 0x400, scoped, tag = 'input window, operand 11, single buffered']
    #allocation14 [shape = 'u8[512]{0}', space=vmem, size = 0x400, scoped, tag = 'input window, operand 13, single buffered']
    #allocation15 [shape = 's32[1]{0}', space=sflag, size = 0x4, scoped, tag = 'scoped memory for tpu_custom_call.1']
    #allocation16 [shape = 'u8[512]{0}', space=vmem, size = 0x400, scoped, tag = 'input window, operand 15, single buffered']
    #allocation17 [shape = 'u8[8192]{0}', space=vmem, size = 0x2000, scoped, tag = 'output window, operand 0']
    #allocation18 [shape = 'u8[8192]{0}', space=vmem, size = 0x2000, scoped, tag = 'output window, operand 1']
    #allocation19 [shape = 's32[2]{0}', space=sflag, size = 0x8, scoped, tag = 'scoped memory for tpu_custom_call.1']
    %25 = vsyncpa [#allocation3], 0
    %s26 = scalar_lea.sflag [#allocation3], 1
    %27 = vsyncpa %s26, 0
    %28 = vsyncpa [#allocation6], 0
    %s29 = scalar_lea.sflag [#allocation6], 1
    %30 = vsyncpa %s29, 0
    %31 = vsyncpa [#allocation9], 0
    %s32 = scalar_lea.sflag [#allocation9], 1
    %33 = vsyncpa %s32, 0
    %34 = vsyncpa [#allocation12], 0
    %35 = vsyncpa [#allocation15], 0
    %36 = vsyncpa [#allocation4], 0
    %s37 = scalar_lea.sflag [#allocation4], 1
    %38 = vsyncpa %s37, 0
    %39 = vsyncpa [#allocation19], 0
    %s40 = scalar_lea.sflag [#allocation19], 1
    %41 = vsyncpa %s40, 0
    loop: start=0, step=1, limit=4
    $region2: #{tpu_custom_call.1} parent=1 // loop_pre_header
      _
    $region3: #{tpu_custom_call.1} parent=1 // loop_header
      %s43 = sphi 0, %s47
      %p44 = scmp.ge.s32.totalorder %s43, 4
      %s53 = sphi 0, %s55
      %s56 = sphi 0, %s53
      %s57 = sphi 0, %s56
      %s73 = sphi 0, %s57
      %s79 = sphi 0, %s81
      %s82 = sphi 0, %s79
      %s83 = sphi 0, %s82
      %s99 = sphi 0, %s83
      %s105 = sphi 0, %s107
      %s108 = sphi 0, %s105
      %s109 = sphi 0, %s108
      %s125 = sphi 0, %s109
      %s131 = sphi 0, %s133
      %s134 = sphi 0, %s131
      %s135 = sphi 0, %s134
      %s151 = sphi 0, %s135
      %s157 = sphi 0, %s159
      %s160 = sphi 0, %s157
      %s161 = sphi 0, %s160
      %s177 = sphi 0, %s161
      %s183 = sphi 0, %s185
      %s186 = sphi 0, %s183
      %s187 = sphi 0, %s186
      %s203 = sphi 0, %s187
      %s207 = sphi 0, %s207
      %s209 = sphi 0, %s207
      %s210 = sphi 0, %s209
      %s224 = sphi 0, %s210
      %s228 = sphi 0, %s228
      %s230 = sphi 0, %s228
      %s231 = sphi 0, %s230
      %s245 = sphi 0, %s231
      %s249 = sphi 0, %s249
      %s251 = sphi 0, %s249
      %s252 = sphi 0, %s251
      %s266 = sphi 0, %s252
      %s270 = sphi 0, %s270
      %s272 = sphi 0, %s270
      %s273 = sphi 0, %s272
      %s287 = sphi 0, %s273
      %s291 = sphi 0, %s291
      %s293 = sphi 0, %s291
      %s294 = sphi 0, %s293
      %s308 = sphi 0, %s294
      %s312 = sphi 0, %s312
      %s314 = sphi 0, %s312
      %s315 = sphi 0, %s314
      %s329 = sphi 0, %s315
      %s333 = sphi 0, %s333
      %s335 = sphi 0, %s333
      %s336 = sphi 0, %s335
      %s350 = sphi 0, %s336
      %s354 = sphi 0, %s354
      %s356 = sphi 0, %s354
      %s357 = sphi 0, %s356
      %s371 = sphi 0, %s357
      %s375 = sphi 0, %s375
      %s377 = sphi 0, %s375
      %s378 = sphi 0, %s377
      %s392 = sphi 0, %s378
      %s396 = sphi 0, %s396
      %s398 = sphi 0, %s396
      %s399 = sphi 0, %s398
      %s413 = sphi 0, %s399
      %s417 = sphi 0, %s417
      %s419 = sphi 0, %s417
      %s420 = sphi 0, %s419
      %s434 = sphi 0, %s420
      %s438 = sphi 0, %s438
      %s440 = sphi 0, %s438
      %s441 = sphi 0, %s440
      %s455 = sphi 0, %s441
      %s461 = sphi 0, %s463
      %s464 = sphi 0, %s461
      %s465 = sphi 0, %s464
      %s481 = sphi 0, %s465
      %s487 = sphi 0, %s489
      %s490 = sphi 0, %s487
      %s491 = sphi 0, %s490
      %s507 = sphi 0, %s491
    $region4: #{tpu_custom_call.1} parent=1 // loop_header_branch
      %46 = sbr.rel (%p44) target = $region8
    $region5: #{tpu_custom_call.1} parent=1 // loop_body
      %s48 = ssub.s32 %s43, 1
      %s49 = ssub.s32 %s43, 2
      %s50 = sadd.s32 %s43, 1
      %s51 = ssub.s32 %s43, %s50
      %p52 = scmp.eq.s32.totalorder %s51, 0
      %s54 = sadd.s32 %s53, 1
      %s55 = scalar_select %p52, %s53, %s54
      %p58 = pneg %p52
      %p59 = scmp.eq.s32.totalorder %s43, 1
      %p60 = por %p58, %p59
      %p61 = scmp.ne.s32.totalorder %s53, %s56
      %p62 = scmp.eq.s32.totalorder %s43, 0
      %p63 = por %p61, %p62
      %p64 = scmp.ne.s32.totalorder %s53, %s56
      %p65 = scmp.eq.s32.totalorder %s48, 1
      %p66 = por %p64, %p65
      %p67 = scmp.ne.s32.totalorder %s56, %s57
      %p68 = scmp.eq.s32.totalorder %s48, 0
      %p69 = por %p67, %p68
      %p70 = scmp.ne.s32.totalorder %s56, %s57
      %p71 = scmp.eq.s32.totalorder %s49, 1
      %p72 = por %p70, %p71
      %p74 = scmp.ne.s32.totalorder %s57, %s73
      %p75 = scmp.eq.s32.totalorder %s49, 0
      %p76 = por %p74, %p75
      %s77 = ssub.s32 %s43, %s50
      %p78 = scmp.eq.s32.totalorder %s77, 0
      %s80 = sadd.s32 %s79, 1
      %s81 = scalar_select %p78, %s79, %s80
      %p84 = pneg %p78
      %p85 = scmp.eq.s32.totalorder %s43, 1
      %p86 = por %p84, %p85
      %p87 = scmp.ne.s32.totalorder %s79, %s82
      %p88 = scmp.eq.s32.totalorder %s43, 0
      %p89 = por %p87, %p88
      %p90 = scmp.ne.s32.totalorder %s79, %s82
      %p91 = scmp.eq.s32.totalorder %s48, 1
      %p92 = por %p90, %p91
      %p93 = scmp.ne.s32.totalorder %s82, %s83
      %p94 = scmp.eq.s32.totalorder %s48, 0
      %p95 = por %p93, %p94
      %p96 = scmp.ne.s32.totalorder %s82, %s83
      %p97 = scmp.eq.s32.totalorder %s49, 1
      %p98 = por %p96, %p97
      %p100 = scmp.ne.s32.totalorder %s83, %s99
      %p101 = scmp.eq.s32.totalorder %s49, 0
      %p102 = por %p100, %p101
      %s103 = ssub.s32 %s43, %s50
      %p104 = scmp.eq.s32.totalorder %s103, 0
      %s106 = sadd.s32 %s105, 1
      %s107 = scalar_select %p104, %s105, %s106
      %p110 = pneg %p104
      %p111 = scmp.eq.s32.totalorder %s43, 1
      %p112 = por %p110, %p111
      %p113 = scmp.ne.s32.totalorder %s105, %s108
      %p114 = scmp.eq.s32.totalorder %s43, 0
      %p115 = por %p113, %p114
      %p116 = scmp.ne.s32.totalorder %s105, %s108
      %p117 = scmp.eq.s32.totalorder %s48, 1
      %p118 = por %p116, %p117
      %p119 = scmp.ne.s32.totalorder %s108, %s109
      %p120 = scmp.eq.s32.totalorder %s48, 0
      %p121 = por %p119, %p120
      %p122 = scmp.ne.s32.totalorder %s108, %s109
      %p123 = scmp.eq.s32.totalorder %s49, 1
      %p124 = por %p122, %p123
      %p126 = scmp.ne.s32.totalorder %s109, %s125
      %p127 = scmp.eq.s32.totalorder %s49, 0
      %p128 = por %p126, %p127
      %s129 = ssub.s32 %s43, %s50
      %p130 = scmp.eq.s32.totalorder %s129, 0
      %s132 = sadd.s32 %s131, 1
      %s133 = scalar_select %p130, %s131, %s132
      %p136 = pneg %p130
      %p137 = scmp.eq.s32.totalorder %s43, 1
      %p138 = por %p136, %p137
      %p139 = scmp.ne.s32.totalorder %s131, %s134
      %p140 = scmp.eq.s32.totalorder %s43, 0
      %p141 = por %p139, %p140
      %p142 = scmp.ne.s32.totalorder %s131, %s134
      %p143 = scmp.eq.s32.totalorder %s48, 1
      %p144 = por %p142, %p143
      %p145 = scmp.ne.s32.totalorder %s134, %s135
      %p146 = scmp.eq.s32.totalorder %s48, 0
      %p147 = por %p145, %p146
      %p148 = scmp.ne.s32.totalorder %s134, %s135
      %p149 = scmp.eq.s32.totalorder %s49, 1
      %p150 = por %p148, %p149
      %p152 = scmp.ne.s32.totalorder %s135, %s151
      %p153 = scmp.eq.s32.totalorder %s49, 0
      %p154 = por %p152, %p153
      %s155 = ssub.s32 %s43, %s50
      %p156 = scmp.eq.s32.totalorder %s155, 0
      %s158 = sadd.s32 %s157, 1
      %s159 = scalar_select %p156, %s157, %s158
      %p162 = pneg %p156
      %p163 = scmp.eq.s32.totalorder %s43, 1
      %p164 = por %p162, %p163
      %p165 = scmp.ne.s32.totalorder %s157, %s160
      %p166 = scmp.eq.s32.totalorder %s43, 0
      %p167 = por %p165, %p166
      %p168 = scmp.ne.s32.totalorder %s157, %s160
      %p169 = scmp.eq.s32.totalorder %s48, 1
      %p170 = por %p168, %p169
      %p171 = scmp.ne.s32.totalorder %s160, %s161
      %p172 = scmp.eq.s32.totalorder %s48, 0
      %p173 = por %p171, %p172
      %p174 = scmp.ne.s32.totalorder %s160, %s161
      %p175 = scmp.eq.s32.totalorder %s49, 1
      %p176 = por %p174, %p175
      %p178 = scmp.ne.s32.totalorder %s161, %s177
      %p179 = scmp.eq.s32.totalorder %s49, 0
      %p180 = por %p178, %p179
      %s181 = ssub.s32 %s43, %s50
      %p182 = scmp.eq.s32.totalorder %s181, 0
      %s184 = sadd.s32 %s183, 1
      %s185 = scalar_select %p182, %s183, %s184
      %p188 = pneg %p182
      %p189 = scmp.eq.s32.totalorder %s43, 1
      %p190 = por %p188, %p189
      %p191 = scmp.ne.s32.totalorder %s183, %s186
      %p192 = scmp.eq.s32.totalorder %s43, 0
      %p193 = por %p191, %p192
      %p194 = scmp.ne.s32.totalorder %s183, %s186
      %p195 = scmp.eq.s32.totalorder %s48, 1
      %p196 = por %p194, %p195
      %p197 = scmp.ne.s32.totalorder %s186, %s187
      %p198 = scmp.eq.s32.totalorder %s48, 0
      %p199 = por %p197, %p198
      %p200 = scmp.ne.s32.totalorder %s186, %s187
      %p201 = scmp.eq.s32.totalorder %s49, 1
      %p202 = por %p200, %p201
      %p204 = scmp.ne.s32.totalorder %s187, %s203
      %p205 = scmp.eq.s32.totalorder %s49, 0
      %p206 = por %p204, %p205
      %s208 = sadd.s32 %s207, 1
      %p211 = scmp.eq.s32.totalorder %s43, 1
      %p212 = scmp.ne.s32.totalorder %s207, %s209
      %p213 = scmp.eq.s32.totalorder %s43, 0
      %p214 = por %p212, %p213
      %p215 = scmp.ne.s32.totalorder %s207, %s209
      %p216 = scmp.eq.s32.totalorder %s48, 1
      %p217 = por %p215, %p216
      %p218 = scmp.ne.s32.totalorder %s209, %s210
      %p219 = scmp.eq.s32.totalorder %s48, 0
      %p220 = por %p218, %p219
      %p221 = scmp.ne.s32.totalorder %s209, %s210
      %p222 = scmp.eq.s32.totalorder %s49, 1
      %p223 = por %p221, %p222
      %p225 = scmp.ne.s32.totalorder %s210, %s224
      %p226 = scmp.eq.s32.totalorder %s49, 0
      %p227 = por %p225, %p226
      %s229 = sadd.s32 %s228, 1
      %p232 = scmp.eq.s32.totalorder %s43, 1
      %p233 = scmp.ne.s32.totalorder %s228, %s230
      %p234 = scmp.eq.s32.totalorder %s43, 0
      %p235 = por %p233, %p234
      %p236 = scmp.ne.s32.totalorder %s228, %s230
      %p237 = scmp.eq.s32.totalorder %s48, 1
      %p238 = por %p236, %p237
      %p239 = scmp.ne.s32.totalorder %s230, %s231
      %p240 = scmp.eq.s32.totalorder %s48, 0
      %p241 = por %p239, %p240
      %p242 = scmp.ne.s32.totalorder %s230, %s231
      %p243 = scmp.eq.s32.totalorder %s49, 1
      %p244 = por %p242, %p243
      %p246 = scmp.ne.s32.totalorder %s231, %s245
      %p247 = scmp.eq.s32.totalorder %s49, 0
      %p248 = por %p246, %p247
      %s250 = sadd.s32 %s249, 1
      %p253 = scmp.eq.s32.totalorder %s43, 1
      %p254 = scmp.ne.s32.totalorder %s249, %s251
      %p255 = scmp.eq.s32.totalorder %s43, 0
      %p256 = por %p254, %p255
      %p257 = scmp.ne.s32.totalorder %s249, %s251
      %p258 = scmp.eq.s32.totalorder %s48, 1
      %p259 = por %p257, %p258
      %p260 = scmp.ne.s32.totalorder %s251, %s252
      %p261 = scmp.eq.s32.totalorder %s48, 0
      %p262 = por %p260, %p261
      %p263 = scmp.ne.s32.totalorder %s251, %s252
      %p264 = scmp.eq.s32.totalorder %s49, 1
      %p265 = por %p263, %p264
      %p267 = scmp.ne.s32.totalorder %s252, %s266
      %p268 = scmp.eq.s32.totalorder %s49, 0
      %p269 = por %p267, %p268
      %s271 = sadd.s32 %s270, 1
      %p274 = scmp.eq.s32.totalorder %s43, 1
      %p275 = scmp.ne.s32.totalorder %s270, %s272
      %p276 = scmp.eq.s32.totalorder %s43, 0
      %p277 = por %p275, %p276
      %p278 = scmp.ne.s32.totalorder %s270, %s272
      %p279 = scmp.eq.s32.totalorder %s48, 1
      %p280 = por %p278, %p279
      %p281 = scmp.ne.s32.totalorder %s272, %s273
      %p282 = scmp.eq.s32.totalorder %s48, 0
      %p283 = por %p281, %p282
      %p284 = scmp.ne.s32.totalorder %s272, %s273
      %p285 = scmp.eq.s32.totalorder %s49, 1
      %p286 = por %p284, %p285
      %p288 = scmp.ne.s32.totalorder %s273, %s287
      %p289 = scmp.eq.s32.totalorder %s49, 0
      %p290 = por %p288, %p289
      %s292 = sadd.s32 %s291, 1
      %p295 = scmp.eq.s32.totalorder %s43, 1
      %p296 = scmp.ne.s32.totalorder %s291, %s293
      %p297 = scmp.eq.s32.totalorder %s43, 0
      %p298 = por %p296, %p297
      %p299 = scmp.ne.s32.totalorder %s291, %s293
      %p300 = scmp.eq.s32.totalorder %s48, 1
      %p301 = por %p299, %p300
      %p302 = scmp.ne.s32.totalorder %s293, %s294
      %p303 = scmp.eq.s32.totalorder %s48, 0
      %p304 = por %p302, %p303
      %p305 = scmp.ne.s32.totalorder %s293, %s294
      %p306 = scmp.eq.s32.totalorder %s49, 1
      %p307 = por %p305, %p306
      %p309 = scmp.ne.s32.totalorder %s294, %s308
      %p310 = scmp.eq.s32.totalorder %s49, 0
      %p311 = por %p309, %p310
      %s313 = sadd.s32 %s312, 1
      %p316 = scmp.eq.s32.totalorder %s43, 1
      %p317 = scmp.ne.s32.totalorder %s312, %s314
      %p318 = scmp.eq.s32.totalorder %s43, 0
      %p319 = por %p317, %p318
      %p320 = scmp.ne.s32.totalorder %s312, %s314
      %p321 = scmp.eq.s32.totalorder %s48, 1
      %p322 = por %p320, %p321
      %p323 = scmp.ne.s32.totalorder %s314, %s315
      %p324 = scmp.eq.s32.totalorder %s48, 0
      %p325 = por %p323, %p324
      %p326 = scmp.ne.s32.totalorder %s314, %s315
      %p327 = scmp.eq.s32.totalorder %s49, 1
      %p328 = por %p326, %p327
      %p330 = scmp.ne.s32.totalorder %s315, %s329
      %p331 = scmp.eq.s32.totalorder %s49, 0
      %p332 = por %p330, %p331
      %s334 = sadd.s32 %s333, 1
      %p337 = scmp.eq.s32.totalorder %s43, 1
      %p338 = scmp.ne.s32.totalorder %s333, %s335
      %p339 = scmp.eq.s32.totalorder %s43, 0
      %p340 = por %p338, %p339
      %p341 = scmp.ne.s32.totalorder %s333, %s335
      %p342 = scmp.eq.s32.totalorder %s48, 1
      %p343 = por %p341, %p342
      %p344 = scmp.ne.s32.totalorder %s335, %s336
      %p345 = scmp.eq.s32.totalorder %s48, 0
      %p346 = por %p344, %p345
      %p347 = scmp.ne.s32.totalorder %s335, %s336
      %p348 = scmp.eq.s32.totalorder %s49, 1
      %p349 = por %p347, %p348
      %p351 = scmp.ne.s32.totalorder %s336, %s350
      %p352 = scmp.eq.s32.totalorder %s49, 0
      %p353 = por %p351, %p352
      %s355 = sadd.s32 %s354, 1
      %p358 = scmp.eq.s32.totalorder %s43, 1
      %p359 = scmp.ne.s32.totalorder %s354, %s356
      %p360 = scmp.eq.s32.totalorder %s43, 0
      %p361 = por %p359, %p360
      %p362 = scmp.ne.s32.totalorder %s354, %s356
      %p363 = scmp.eq.s32.totalorder %s48, 1
      %p364 = por %p362, %p363
      %p365 = scmp.ne.s32.totalorder %s356, %s357
      %p366 = scmp.eq.s32.totalorder %s48, 0
      %p367 = por %p365, %p366
      %p368 = scmp.ne.s32.totalorder %s356, %s357
      %p369 = scmp.eq.s32.totalorder %s49, 1
      %p370 = por %p368, %p369
      %p372 = scmp.ne.s32.totalorder %s357, %s371
      %p373 = scmp.eq.s32.totalorder %s49, 0
      %p374 = por %p372, %p373
      %s376 = sadd.s32 %s375, 1
      %p379 = scmp.eq.s32.totalorder %s43, 1
      %p380 = scmp.ne.s32.totalorder %s375, %s377
      %p381 = scmp.eq.s32.totalorder %s43, 0
      %p382 = por %p380, %p381
      %p383 = scmp.ne.s32.totalorder %s375, %s377
      %p384 = scmp.eq.s32.totalorder %s48, 1
      %p385 = por %p383, %p384
      %p386 = scmp.ne.s32.totalorder %s377, %s378
      %p387 = scmp.eq.s32.totalorder %s48, 0
      %p388 = por %p386, %p387
      %p389 = scmp.ne.s32.totalorder %s377, %s378
      %p390 = scmp.eq.s32.totalorder %s49, 1
      %p391 = por %p389, %p390
      %p393 = scmp.ne.s32.totalorder %s378, %s392
      %p394 = scmp.eq.s32.totalorder %s49, 0
      %p395 = por %p393, %p394
      %s397 = sadd.s32 %s396, 1
      %p400 = scmp.eq.s32.totalorder %s43, 1
      %p401 = scmp.ne.s32.totalorder %s396, %s398
      %p402 = scmp.eq.s32.totalorder %s43, 0
      %p403 = por %p401, %p402
      %p404 = scmp.ne.s32.totalorder %s396, %s398
      %p405 = scmp.eq.s32.totalorder %s48, 1
      %p406 = por %p404, %p405
      %p407 = scmp.ne.s32.totalorder %s398, %s399
      %p408 = scmp.eq.s32.totalorder %s48, 0
      %p409 = por %p407, %p408
      %p410 = scmp.ne.s32.totalorder %s398, %s399
      %p411 = scmp.eq.s32.totalorder %s49, 1
      %p412 = por %p410, %p411
      %p414 = scmp.ne.s32.totalorder %s399, %s413
      %p415 = scmp.eq.s32.totalorder %s49, 0
      %p416 = por %p414, %p415
      %s418 = sadd.s32 %s417, 1
      %p421 = scmp.eq.s32.totalorder %s43, 1
      %p422 = scmp.ne.s32.totalorder %s417, %s419
      %p423 = scmp.eq.s32.totalorder %s43, 0
      %p424 = por %p422, %p423
      %p425 = scmp.ne.s32.totalorder %s417, %s419
      %p426 = scmp.eq.s32.totalorder %s48, 1
      %p427 = por %p425, %p426
      %p428 = scmp.ne.s32.totalorder %s419, %s420
      %p429 = scmp.eq.s32.totalorder %s48, 0
      %p430 = por %p428, %p429
      %p431 = scmp.ne.s32.totalorder %s419, %s420
      %p432 = scmp.eq.s32.totalorder %s49, 1
      %p433 = por %p431, %p432
      %p435 = scmp.ne.s32.totalorder %s420, %s434
      %p436 = scmp.eq.s32.totalorder %s49, 0
      %p437 = por %p435, %p436
      %s439 = sadd.s32 %s438, 1
      %p442 = scmp.eq.s32.totalorder %s43, 1
      %p443 = scmp.ne.s32.totalorder %s438, %s440
      %p444 = scmp.eq.s32.totalorder %s43, 0
      %p445 = por %p443, %p444
      %p446 = scmp.ne.s32.totalorder %s438, %s440
      %p447 = scmp.eq.s32.totalorder %s48, 1
      %p448 = por %p446, %p447
      %p449 = scmp.ne.s32.totalorder %s440, %s441
      %p450 = scmp.eq.s32.totalorder %s48, 0
      %p451 = por %p449, %p450
      %p452 = scmp.ne.s32.totalorder %s440, %s441
      %p453 = scmp.eq.s32.totalorder %s49, 1
      %p454 = por %p452, %p453
      %p456 = scmp.ne.s32.totalorder %s441, %s455
      %p457 = scmp.eq.s32.totalorder %s49, 0
      %p458 = por %p456, %p457
      %s459 = ssub.s32 %s43, %s50
      %p460 = scmp.eq.s32.totalorder %s459, 0
      %s462 = sadd.s32 %s461, 1
      %s463 = scalar_select %p460, %s461, %s462
      %p466 = pneg %p460
      %p467 = scmp.eq.s32.totalorder %s43, 1
      %p468 = por %p466, %p467
      %p469 = scmp.ne.s32.totalorder %s461, %s464
      %p470 = scmp.eq.s32.totalorder %s43, 0
      %p471 = por %p469, %p470
      %p472 = scmp.ne.s32.totalorder %s461, %s464
      %p473 = scmp.eq.s32.totalorder %s48, 1
      %p474 = por %p472, %p473
      %p475 = scmp.ne.s32.totalorder %s464, %s465
      %p476 = scmp.eq.s32.totalorder %s48, 0
      %p477 = por %p475, %p476
      %p478 = scmp.ne.s32.totalorder %s464, %s465
      %p479 = scmp.eq.s32.totalorder %s49, 1
      %p480 = por %p478, %p479
      %p482 = scmp.ne.s32.totalorder %s465, %s481
      %p483 = scmp.eq.s32.totalorder %s49, 0
      %p484 = por %p482, %p483
      %s485 = ssub.s32 %s43, %s50
      %p486 = scmp.eq.s32.totalorder %s485, 0
      %s488 = sadd.s32 %s487, 1
      %s489 = scalar_select %p486, %s487, %s488
      %p492 = pneg %p486
      %p493 = scmp.eq.s32.totalorder %s43, 1
      %p494 = por %p492, %p493
      %p495 = scmp.ne.s32.totalorder %s487, %s490
      %p496 = scmp.eq.s32.totalorder %s43, 0
      %p497 = por %p495, %p496
      %p498 = scmp.ne.s32.totalorder %s487, %s490
      %p499 = scmp.eq.s32.totalorder %s48, 1
      %p500 = por %p498, %p499
      %p501 = scmp.ne.s32.totalorder %s490, %s491
      %p502 = scmp.eq.s32.totalorder %s48, 0
      %p503 = por %p501, %p502
      %p504 = scmp.ne.s32.totalorder %s490, %s491
      %p505 = scmp.eq.s32.totalorder %s49, 1
      %p506 = por %p504, %p505
      %p508 = scmp.ne.s32.totalorder %s491, %s507
      %p509 = scmp.eq.s32.totalorder %s49, 0
      %p510 = por %p508, %p509
      %p511 = scmp.le.s32.totalorder 1, %s43
      %p512 = scmp.lt.s32.totalorder %s43, 3
      %p513 = pnand %p511, %p512
      %p514 = pneg %p513
      // Predicated region
      $region9: #{tpu_custom_call.1} parent=5 // pred_check
        _
      $region10: #{tpu_custom_call.1} parent=5 // pred_check_branch
        %516 = sbr.rel (%p513) target = $region12
      $region11: #{tpu_custom_call.1} parent=5 // pred_region
        %s517 = ssub.s32 %s43, 1
        // Predicated region
        $region13: #{tpu_custom_call.1} parent=11 // pred_check
          %p518 = pneg %p220
        $region14: #{tpu_custom_call.1} parent=11 // pred_check_branch
          %520 = sbr.rel (%p518) target = $region16
        $region15: #{tpu_custom_call.1} parent=11 // pred_region
          _
        $region16: #{tpu_custom_call.1} parent=11 // pred_fallthru
          _
        // Predicated region
        $region17: #{tpu_custom_call.1} parent=11 // pred_check
          %p521 = pneg %p241
        $region18: #{tpu_custom_call.1} parent=11 // pred_check_branch
          %523 = sbr.rel (%p521) target = $region20
        $region19: #{tpu_custom_call.1} parent=11 // pred_region
          %s525 = ssub.s32 16, 16
          %526 = vsyncadd [#allocation9], %s525
          %s528 = sshll.u32 [#allocation10], 4
          %s529 = int_to_ptr.vmem [resolvable:$true] %s528
          %531 = dma.hbm_to_vmem [thread:$0]  %s7, 16, %s529, [#allocation9]
        $region20: #{tpu_custom_call.1} parent=11 // pred_fallthru
          _
        // Predicated region
        $region21: #{tpu_custom_call.1} parent=11 // pred_check
          %p532 = pneg %p262
        $region22: #{tpu_custom_call.1} parent=11 // pred_check_branch
          %534 = sbr.rel (%p532) target = $region24
        $region23: #{tpu_custom_call.1} parent=11 // pred_region
          _
        $region24: #{tpu_custom_call.1} parent=11 // pred_fallthru
          _
        // Predicated region
        $region25: #{tpu_custom_call.1} parent=11 // pred_check
          %p535 = pneg %p283
        $region26: #{tpu_custom_call.1} parent=11 // pred_check_branch
          %537 = sbr.rel (%p535) target = $region28
        $region27: #{tpu_custom_call.1} parent=11 // pred_region
          %s539 = ssub.s32 16, 16
          %540 = vsyncadd [#allocation12], %s539
          %s542 = sshll.u32 [#allocation11], 4
          %s543 = int_to_ptr.vmem [resolvable:$true] %s542
          %545 = dma.hbm_to_vmem [thread:$0]  %s9, 16, %s543, [#allocation12]
        $region28: #{tpu_custom_call.1} parent=11 // pred_fallthru
          _
        // Predicated region
        $region29: #{tpu_custom_call.1} parent=11 // pred_check
          %p546 = pneg %p304
        $region30: #{tpu_custom_call.1} parent=11 // pred_check_branch
          %548 = sbr.rel (%p546) target = $region32
        $region31: #{tpu_custom_call.1} parent=11 // pred_region
          _
        $region32: #{tpu_custom_call.1} parent=11 // pred_fallthru
          _
        // Predicated region
        $region33: #{tpu_custom_call.1} parent=11 // pred_check
          %p549 = pneg %p325
        $region34: #{tpu_custom_call.1} parent=11 // pred_check_branch
          %551 = sbr.rel (%p549) target = $region36
        $region35: #{tpu_custom_call.1} parent=11 // pred_region
          %s553 = ssub.s32 16, 16
          %554 = vsyncadd [#allocation12], %s553
          %s556 = sshll.u32 [#allocation13], 4
          %s557 = int_to_ptr.vmem [resolvable:$true] %s556
          %559 = dma.hbm_to_vmem [thread:$0]  %s11, 16, %s557, [#allocation12]
        $region36: #{tpu_custom_call.1} parent=11 // pred_fallthru
          _
        // Predicated region
        $region37: #{tpu_custom_call.1} parent=11 // pred_check
          %p560 = pneg %p346
        $region38: #{tpu_custom_call.1} parent=11 // pred_check_branch
          %562 = sbr.rel (%p560) target = $region40
        $region39: #{tpu_custom_call.1} parent=11 // pred_region
          _
        $region40: #{tpu_custom_call.1} parent=11 // pred_fallthru
          _
        // Predicated region
        $region41: #{tpu_custom_call.1} parent=11 // pred_check
          %p563 = pneg %p367
        $region42: #{tpu_custom_call.1} parent=11 // pred_check_branch
          %565 = sbr.rel (%p563) target = $region44
        $region43: #{tpu_custom_call.1} parent=11 // pred_region
          %s567 = ssub.s32 16, 16
          %568 = vsyncadd [#allocation15], %s567
          %s570 = sshll.u32 [#allocation14], 4
          %s571 = int_to_ptr.vmem [resolvable:$true] %s570
          %573 = dma.hbm_to_vmem [thread:$0]  %s13, 16, %s571, [#allocation15]
        $region44: #{tpu_custom_call.1} parent=11 // pred_fallthru
          _
        // Predicated region
        $region45: #{tpu_custom_call.1} parent=11 // pred_check
          %p574 = pneg %p388
        $region46: #{tpu_custom_call.1} parent=11 // pred_check_branch
          %576 = sbr.rel (%p574) target = $region48
        $region47: #{tpu_custom_call.1} parent=11 // pred_region
          _
        $region48: #{tpu_custom_call.1} parent=11 // pred_fallthru
          _
        // Predicated region
        $region49: #{tpu_custom_call.1} parent=11 // pred_check
          %p577 = pneg %p409
        $region50: #{tpu_custom_call.1} parent=11 // pred_check_branch
          %579 = sbr.rel (%p577) target = $region52
        $region51: #{tpu_custom_call.1} parent=11 // pred_region
          %s581 = ssub.s32 16, 16
          %582 = vsyncadd [#allocation15], %s581
          %s584 = sshll.u32 [#allocation16], 4
          %s585 = int_to_ptr.vmem [resolvable:$true] %s584
          %587 = dma.hbm_to_vmem [thread:$0]  %s15, 16, %s585, [#allocation15]
        $region52: #{tpu_custom_call.1} parent=11 // pred_fallthru
          _
        // Predicated region
        $region53: #{tpu_custom_call.1} parent=11 // pred_check
          %p588 = pneg %p430
        $region54: #{tpu_custom_call.1} parent=11 // pred_check_branch
          %590 = sbr.rel (%p588) target = $region56
        $region55: #{tpu_custom_call.1} parent=11 // pred_region
          _
        $region56: #{tpu_custom_call.1} parent=11 // pred_fallthru
          _
        // Predicated region
        $region57: #{tpu_custom_call.1} parent=11 // pred_check
          %p591 = pneg %p451
        $region58: #{tpu_custom_call.1} parent=11 // pred_check_branch
          %593 = sbr.rel (%p591) target = $region60
        $region59: #{tpu_custom_call.1} parent=11 // pred_region
          _
        $region60: #{tpu_custom_call.1} parent=11 // pred_fallthru
          _
      $region12: #{tpu_custom_call.1} parent=5 // pred_fallthru
        _
      %p594 = scmp.lt.s32.totalorder %s43, 2
      // Predicated region
      $region61: #{tpu_custom_call.1} parent=5 // pred_check
        %p595 = pneg %p594
      $region62: #{tpu_custom_call.1} parent=5 // pred_check_branch
        %597 = sbr.rel (%p595) target = $region64
      $region63: #{tpu_custom_call.1} parent=5 // pred_region
        // Predicated region
        $region65: #{tpu_custom_call.1} parent=63 // pred_check
          %p598 = pneg %p63
        $region66: #{tpu_custom_call.1} parent=63 // pred_check_branch
          %600 = sbr.rel (%p598) target = $region68
        $region67: #{tpu_custom_call.1} parent=63 // pred_region
          %s601 = sand.u32 %s53, 1
          %s602 = scalar_lea.sflag [#allocation3], %s601
          %s603 = sand.u32 %s53, 1
          %s604 = smul.addr %s603, 4
          %s605 = scalar_lea.vmem [#allocation2], %s604
          %s607 = ssub.s32 64, 64
          %608 = vsyncadd %s602, %s607
          %s609 = smul.addr %s43, 64
          %s610 = scalar_lea.hbm %s0, %s609
          %s612 = sshll.u32 %s605, 4
          %s613 = int_to_ptr.vmem [resolvable:$true] %s612
          %615 = dma.hbm_to_vmem [thread:$0]  %s610, 64, %s613, %s602
        $region68: #{tpu_custom_call.1} parent=63 // pred_fallthru
          _
        // Predicated region
        $region69: #{tpu_custom_call.1} parent=63 // pred_check
          %p616 = pneg %p89
        $region70: #{tpu_custom_call.1} parent=63 // pred_check_branch
          %618 = sbr.rel (%p616) target = $region72
        $region71: #{tpu_custom_call.1} parent=63 // pred_region
          %s619 = sand.u32 %s43, 1
          %s620 = scalar_lea.sflag [#allocation6], %s619
          %s621 = sand.u32 %s79, 1
          %s622 = smul.addr %s621, 4
          %s623 = scalar_lea.vmem [#allocation5], %s622
          %s625 = ssub.s32 64, 64
          %626 = vsyncadd %s620, %s625
          %s627 = smul.addr %s43, 64
          %s628 = scalar_lea.hbm %s1, %s627
          %s630 = sshll.u32 %s623, 4
          %s631 = int_to_ptr.vmem [resolvable:$true] %s630
          %633 = dma.hbm_to_vmem [thread:$0]  %s628, 64, %s631, %s620
        $region72: #{tpu_custom_call.1} parent=63 // pred_fallthru
          _
        // Predicated region
        $region73: #{tpu_custom_call.1} parent=63 // pred_check
          %p634 = pneg %p115
        $region74: #{tpu_custom_call.1} parent=63 // pred_check_branch
          %636 = sbr.rel (%p634) target = $region76
        $region75: #{tpu_custom_call.1} parent=63 // pred_region
          %p637 = scmp.lt.s32.totalorder %s43, 1
          %s638 = scalar_select %p637, %s43, 1
          %s639 = smul.addr %s638, 8
          %s640 = scalar_lea.vmem %s2, %s639
        $region76: #{tpu_custom_call.1} parent=63 // pred_fallthru
          _
        // Predicated region
        $region77: #{tpu_custom_call.1} parent=63 // pred_check
          %p641 = pneg %p141
        $region78: #{tpu_custom_call.1} parent=63 // pred_check_branch
          %643 = sbr.rel (%p641) target = $region80
        $region79: #{tpu_custom_call.1} parent=63 // pred_region
          %s644 = sand.u32 %s43, 1
          %s645 = scalar_lea.sflag [#allocation6], %s644
          %s646 = sand.u32 %s131, 1
          %s647 = scalar_lea.vmem [#allocation7], %s646
          %s649 = ssub.s32 16, 16
          %650 = vsyncadd %s645, %s649
          %s651 = smul.addr %s43, 16
          %s652 = scalar_lea.hbm %s3, %s651
          %s654 = sshll.u32 %s647, 4
          %s655 = int_to_ptr.vmem [resolvable:$true] %s654
          %657 = dma.hbm_to_vmem [thread:$0]  %s652, 16, %s655, %s645
        $region80: #{tpu_custom_call.1} parent=63 // pred_fallthru
          _
        // Predicated region
        $region81: #{tpu_custom_call.1} parent=63 // pred_check
          %p658 = pneg %p167
        $region82: #{tpu_custom_call.1} parent=63 // pred_check_branch
          %660 = sbr.rel (%p658) target = $region84
        $region83: #{tpu_custom_call.1} parent=63 // pred_region
          %p661 = scmp.lt.s32.totalorder %s43, 1
          %s662 = scalar_select %p661, %s43, 1
          %s663 = smul.addr %s662, 8
          %s664 = scalar_lea.vmem %s4, %s663
        $region84: #{tpu_custom_call.1} parent=63 // pred_fallthru
          _
        // Predicated region
        $region85: #{tpu_custom_call.1} parent=63 // pred_check
          %p665 = pneg %p193
        $region86: #{tpu_custom_call.1} parent=63 // pred_check_branch
          %667 = sbr.rel (%p665) target = $region88
        $region87: #{tpu_custom_call.1} parent=63 // pred_region
          %s668 = sand.u32 %s43, 1
          %s669 = scalar_lea.sflag [#allocation9], %s668
          %s670 = sand.u32 %s183, 1
          %s671 = scalar_lea.vmem [#allocation8], %s670
          %s673 = ssub.s32 16, 16
          %674 = vsyncadd %s669, %s673
          %s675 = smul.addr %s43, 16
          %s676 = scalar_lea.hbm %s5, %s675
          %s678 = sshll.u32 %s671, 4
          %s679 = int_to_ptr.vmem [resolvable:$true] %s678
          %681 = dma.hbm_to_vmem [thread:$0]  %s676, 16, %s679, %s669
        $region88: #{tpu_custom_call.1} parent=63 // pred_fallthru
          _
      $region64: #{tpu_custom_call.1} parent=5 // pred_fallthru
        _
      %p682 = scmp.le.s32.totalorder 1, %s43
      %p683 = scmp.lt.s32.totalorder %s43, 3
      %p684 = pnand %p682, %p683
      %p685 = pneg %p684
      // Predicated region
      $region89: #{tpu_custom_call.1} parent=5 // pred_check
        _
      $region90: #{tpu_custom_call.1} parent=5 // pred_check_branch
        %687 = sbr.rel (%p684) target = $region92
      $region91: #{tpu_custom_call.1} parent=5 // pred_region
        %s688 = ssub.s32 %s43, 1
        %s689 = sand.u32 %s56, 1
        %s690 = scalar_lea.sflag [#allocation3], %s689
        %s691 = sand.u32 %s56, 1
        %s692 = smul.addr %s691, 4
        %s693 = scalar_lea.vmem [#allocation2], %s692
        // Predicated region
        $region93: #{tpu_custom_call.1} parent=91 // pred_check
          %p694 = pneg %p69
        $region94: #{tpu_custom_call.1} parent=91 // pred_check_branch
          %696 = sbr.rel (%p694) target = $region96
        $region95: #{tpu_custom_call.1} parent=91 // pred_region
          %697 = dma.done %s690, 64
        $region96: #{tpu_custom_call.1} parent=91 // pred_fallthru
          _
        %s698 = sand.u32 %s48, 1
        %s699 = scalar_lea.sflag [#allocation6], %s698
        %s700 = sand.u32 %s82, 1
        %s701 = smul.addr %s700, 4
        %s702 = scalar_lea.vmem [#allocation5], %s701
        // Predicated region
        $region97: #{tpu_custom_call.1} parent=91 // pred_check
          %p703 = pneg %p95
        $region98: #{tpu_custom_call.1} parent=91 // pred_check_branch
          %705 = sbr.rel (%p703) target = $region100
        $region99: #{tpu_custom_call.1} parent=91 // pred_region
          %706 = dma.done %s699, 64
        $region100: #{tpu_custom_call.1} parent=91 // pred_fallthru
          _
        %s707 = sand.u32 %s48, 1
        %s708 = scalar_lea.sflag [#allocation6], %s707
        %s709 = sand.u32 %s134, 1
        %s710 = scalar_lea.vmem [#allocation7], %s709
        // Predicated region
        $region101: #{tpu_custom_call.1} parent=91 // pred_check
          %p711 = pneg %p147
        $region102: #{tpu_custom_call.1} parent=91 // pred_check_branch
          %713 = sbr.rel (%p711) target = $region104
        $region103: #{tpu_custom_call.1} parent=91 // pred_region
          %714 = dma.done %s708, 16
        $region104: #{tpu_custom_call.1} parent=91 // pred_fallthru
          _
        %s715 = sand.u32 %s48, 1
        %s716 = scalar_lea.sflag [#allocation9], %s715
        %s717 = sand.u32 %s186, 1
        %s718 = scalar_lea.vmem [#allocation8], %s717
        // Predicated region
        $region105: #{tpu_custom_call.1} parent=91 // pred_check
          %p719 = pneg %p199
        $region106: #{tpu_custom_call.1} parent=91 // pred_check_branch
          %721 = sbr.rel (%p719) target = $region108
        $region107: #{tpu_custom_call.1} parent=91 // pred_region
          %722 = dma.done %s716, 16
        $region108: #{tpu_custom_call.1} parent=91 // pred_fallthru
          _
        // Predicated region
        $region109: #{tpu_custom_call.1} parent=91 // pred_check
          %p723 = pneg %p241
        $region110: #{tpu_custom_call.1} parent=91 // pred_check_branch
          %725 = sbr.rel (%p723) target = $region112
        $region111: #{tpu_custom_call.1} parent=91 // pred_region
          %726 = dma.done [#allocation9], 16
        $region112: #{tpu_custom_call.1} parent=91 // pred_fallthru
          _
        // Predicated region
        $region113: #{tpu_custom_call.1} parent=91 // pred_check
          %p727 = pneg %p283
        $region114: #{tpu_custom_call.1} parent=91 // pred_check_branch
          %729 = sbr.rel (%p727) target = $region116
        $region115: #{tpu_custom_call.1} parent=91 // pred_region
          %730 = dma.done [#allocation12], 16
        $region116: #{tpu_custom_call.1} parent=91 // pred_fallthru
          _
        // Predicated region
        $region117: #{tpu_custom_call.1} parent=91 // pred_check
          %p731 = pneg %p325
        $region118: #{tpu_custom_call.1} parent=91 // pred_check_branch
          %733 = sbr.rel (%p731) target = $region120
        $region119: #{tpu_custom_call.1} parent=91 // pred_region
          %734 = dma.done [#allocation12], 16
        $region120: #{tpu_custom_call.1} parent=91 // pred_fallthru
          _
        // Predicated region
        $region121: #{tpu_custom_call.1} parent=91 // pred_check
          %p735 = pneg %p367
        $region122: #{tpu_custom_call.1} parent=91 // pred_check_branch
          %737 = sbr.rel (%p735) target = $region124
        $region123: #{tpu_custom_call.1} parent=91 // pred_region
          %738 = dma.done [#allocation15], 16
        $region124: #{tpu_custom_call.1} parent=91 // pred_fallthru
          _
        // Predicated region
        $region125: #{tpu_custom_call.1} parent=91 // pred_check
          %p739 = pneg %p409
        $region126: #{tpu_custom_call.1} parent=91 // pred_check_branch
          %741 = sbr.rel (%p739) target = $region128
        $region127: #{tpu_custom_call.1} parent=91 // pred_region
          %742 = dma.done [#allocation15], 16
        $region128: #{tpu_custom_call.1} parent=91 // pred_fallthru
          _
        %s743 = sand.u32 %s56, 1
        %s744 = scalar_lea.sflag [#allocation3], %s743
        %s745 = sand.u32 %s56, 1
        %s746 = smul.addr %s745, 4
        %s747 = scalar_lea.vmem [#allocation2], %s746
        %p748 = pneg %p69
        %p749 = pneg %p66
        %s750 = sand.u32 %s48, 1
        %s751 = scalar_lea.sflag [#allocation6], %s750
        %s752 = sand.u32 %s82, 1
        %s753 = smul.addr %s752, 4
        %s754 = scalar_lea.vmem [#allocation5], %s753
        %p755 = pneg %p95
        %p756 = pneg %p92
        %p757 = scmp.lt.s32.totalorder %s48, 1
        %s758 = scalar_select %p757, %s48, 1
        %s759 = smul.addr %s758, 8
        %s760 = scalar_lea.vmem %s2, %s759
        %p761 = pneg %p121
        %p762 = pneg %p118
        %s763 = sand.u32 %s48, 1
        %s764 = scalar_lea.sflag [#allocation6], %s763
        %s765 = sand.u32 %s134, 1
        %s766 = scalar_lea.vmem [#allocation7], %s765
        %p767 = pneg %p147
        %p768 = pneg %p144
        %p769 = scmp.lt.s32.totalorder %s48, 1
        %s770 = scalar_select %p769, %s48, 1
        %s771 = smul.addr %s770, 8
        %s772 = scalar_lea.vmem %s4, %s771
        %p773 = pneg %p173
        %p774 = pneg %p170
        %s775 = sand.u32 %s48, 1
        %s776 = scalar_lea.sflag [#allocation9], %s775
        %s777 = sand.u32 %s186, 1
        %s778 = scalar_lea.vmem [#allocation8], %s777
        %p779 = pneg %p199
        %p780 = pneg %p196
        %p781 = pneg %p220
        %p782 = pneg %p217
        %p783 = pneg %p241
        %p784 = pneg %p238
        %p785 = pneg %p262
        %p786 = pneg %p259
        %p787 = pneg %p283
        %p788 = pneg %p280
        %p789 = pneg %p304
        %p790 = pneg %p301
        %p791 = pneg %p325
        %p792 = pneg %p322
        %p793 = pneg %p346
        %p794 = pneg %p343
        %p795 = pneg %p367
        %p796 = pneg %p364
        %p797 = pneg %p388
        %p798 = pneg %p385
        %p799 = pneg %p409
        %p800 = pneg %p406
        %p801 = pneg %p430
        %p802 = pneg %p427
        %p803 = pneg %p451
        %p804 = pneg %p448
        %p805 = pneg %p477
        %p806 = pneg %p474
        %s807 = sand.u32 %s464, 1
        %s808 = scalar_lea.sflag [#allocation4], %s807
        %s809 = sand.u32 %s464, 1
        %s810 = smul.addr %s809, 8
        %s811 = scalar_lea.vmem [#allocation17], %s810
        %p812 = pneg %p503
        %p813 = pneg %p500
        %s814 = sand.u32 %s490, 1
        %s815 = scalar_lea.sflag [#allocation19], %s814
        %s816 = sand.u32 %s490, 1
        %s817 = smul.addr %s816, 8
        %s818 = scalar_lea.vmem [#allocation18], %s817
        %p819 = scmp.lt.s32.totalorder %s48, 1
        %s820 = scalar_select %p819, %s48, 1
        %s821 = smul.addr %s820, 8
        %s822 = scalar_lea.vmem %s2, %s821
        %p823 = scmp.lt.s32.totalorder %s48, 1
        %s824 = scalar_select %p823, %s48, 1
        %s825 = smul.addr %s824, 8
        %s826 = scalar_lea.vmem %s4, %s825
        %v828 = vld [vmem:[%s693] sm:$0xf]
        %v829 = vld [vmem:[%s702] sm:$0xf]
        %v830 = vld [vmem:[%s822] sm:$0xff]
        %v831 = vld [vmem:[%s710] sm:$0x1]
        %v832 = vld [vmem:[%s826] sm:$0xff]
        %v833 = vld [vmem:[%s718] sm:$0x1]
        %vm834 = vcmp.eq.f32.partialorder %v831, 0.0
        %v835 = vsel %vm834, -1e+30, 0.0
        %vm836 = vcmp.eq.f32.partialorder %v833, 0.0
        %v837 = vsel %vm836, -1e+30, 0.0
        %vm838 = vcmask 57344
        %v839 = vsel %vm838, %v831, 0.0
        %840 = vadd.xlane.f32.xlu0 %v839
        %v841 = vpop.xlane.xlu0 %840
        %v842 = vrcp.pop %v841
        %v843 = vsel %vm838, %v833, 0.0
        %844 = vadd.xlane.f32.xlu0 %v843
        %v845 = vpop.xlane.xlu0 %844
        %v846 = vrcp.pop %v845
        %v847 = vpack.c.bf16 %v831, %v831
        %vm848 = vcmask 64512
        %v850 = vsel %vm848, %v847, 0
        %vm852 = vcmask 1043456
        %v854 = vsel %vm852, %v828, 0
        %856 = vmatprep.subr.bf16.mxu0 0
        %857 = vmatpush1.bf16.msra.mxu0 %v854
        %858 = vmatprep.subr.bf16.mxu0 0
        %859 = vmatpush1.bf16.msra.mxu0 0
        %860 = vmatprep.subr.bf16.mxu0 0
        %861 = vmatpush1.bf16.msra.mxu0 0
        %862 = vmatprep.subr.bf16.mxu0 0
        %863 = vmatpush1.bf16.msra.mxu0 0
        %864 = vmatprep.subr.bf16.mxu0 0
        %865 = vmatpush1.bf16.msra.mxu0 0
        %866 = vmatprep.subr.bf16.mxu0 0
        %867 = vmatpush1.bf16.msra.mxu0 0
        %868 = vmatprep.subr.bf16.mxu0 0
        %869 = vmatpush1.bf16.msra.mxu0 0
        %870 = vmatprep.subr.bf16.mxu0 0
        %871 = vmatpush1.bf16.msra.mxu0 0
        %872 = vmatprep.subr.bf16.mxu0 0
        %873 = vmatpush1.bf16.msra.mxu0 0
        %874 = vmatprep.subr.bf16.mxu0 0
        %875 = vmatpush1.bf16.msra.mxu0 0
        %876 = vmatprep.subr.bf16.mxu0 0
        %877 = vmatpush1.bf16.msra.mxu0 0
        %878 = vmatprep.subr.bf16.mxu0 0
        %879 = vmatpush1.bf16.msra.mxu0 0
        %880 = vmatprep.subr.bf16.mxu0 0
        %881 = vmatpush1.bf16.msra.mxu0 0
        %882 = vmatprep.subr.bf16.mxu0 0
        %883 = vmatpush1.bf16.msra.mxu0 0
        %884 = vmatprep.subr.bf16.mxu0 0
        %885 = vmatpush1.bf16.msra.mxu0 0
        %886 = vmatprep.subr.bf16.mxu0 0
        %887 = vmatpush1.bf16.msra.mxu0 0
        %888 = vmatprep.mubr.bf16.mxu0 0
        %889 = vmatmul.mubr.bf16.gmra.mrb[0].mxu0 %v850
        %v890 = vpop.f32.mrb[0].mxu0
        %v891 = vadd.f32 0.0, %v890
        %v892 = vpop.f32.mrb[0].mxu0
        %v893 = vpop.f32.mrb[0].mxu0
        %v894 = vpop.f32.mrb[0].mxu0
        %895 = vdwg.mxu0
        %v896 = vmul.f32 %v891, %v842
        %v897 = vpack.c.bf16 %v833, %v833
        %v899 = vsel %vm848, %v897, 0
        %v902 = vsel %vm852, %v829, 0
        %904 = vmatprep.subr.bf16.mxu0 0
        %905 = vmatpush1.bf16.msra.mxu0 %v902
        %906 = vmatprep.subr.bf16.mxu0 0
        %907 = vmatpush1.bf16.msra.mxu0 0
        %908 = vmatprep.subr.bf16.mxu0 0
        %909 = vmatpush1.bf16.msra.mxu0 0
        %910 = vmatprep.subr.bf16.mxu0 0
        %911 = vmatpush1.bf16.msra.mxu0 0
        %912 = vmatprep.subr.bf16.mxu0 0
        %913 = vmatpush1.bf16.msra.mxu0 0
        %914 = vmatprep.subr.bf16.mxu0 0
        %915 = vmatpush1.bf16.msra.mxu0 0
        %916 = vmatprep.subr.bf16.mxu0 0
        %917 = vmatpush1.bf16.msra.mxu0 0
        %918 = vmatprep.subr.bf16.mxu0 0
        %919 = vmatpush1.bf16.msra.mxu0 0
        %920 = vmatprep.subr.bf16.mxu0 0
        %921 = vmatpush1.bf16.msra.mxu0 0
        %922 = vmatprep.subr.bf16.mxu0 0
        %923 = vmatpush1.bf16.msra.mxu0 0
        %924 = vmatprep.subr.bf16.mxu0 0
        %925 = vmatpush1.bf16.msra.mxu0 0
        %926 = vmatprep.subr.bf16.mxu0 0
        %927 = vmatpush1.bf16.msra.mxu0 0
        %928 = vmatprep.subr.bf16.mxu0 0
        %929 = vmatpush1.bf16.msra.mxu0 0
        %930 = vmatprep.subr.bf16.mxu0 0
        %931 = vmatpush1.bf16.msra.mxu0 0
        %932 = vmatprep.subr.bf16.mxu0 0
        %933 = vmatpush1.bf16.msra.mxu0 0
        %934 = vmatprep.subr.bf16.mxu0 0
        %935 = vmatpush1.bf16.msra.mxu0 0
        %936 = vmatprep.mubr.bf16.mxu0 0
        %937 = vmatmul.mubr.bf16.gmra.mrb[0].mxu0 %v899
        %v938 = vpop.f32.mrb[0].mxu0
        %v939 = vadd.f32 0.0, %v938
        %v940 = vpop.f32.mrb[0].mxu0
        %v941 = vpop.f32.mrb[0].mxu0
        %v942 = vpop.f32.mrb[0].mxu0
        %943 = vdwg.mxu0
        %v944 = vmul.f32 %v939, %v846
        %v945 = vmax.f32 %v896, 0.0
        %v946 = vpack.c.bf16 %v945, %v945
        %v947 = vld [vmem:[%s6] sm:$0xf]
        %v948 = vld [vmem:[%s6 + $0x4] sm:$0xf]
        %v949 = vld [vmem:[%s6 + $0x8] sm:$0xf]
        %v950 = vld [vmem:[%s6 + $0xc] sm:$0xf]
        %v951 = vld [vmem:[#allocation10] sm:$0x1]
        %v956 = vunpack.c.l.b16 %v947
        %v957 = vunpack.c.l.b16 %v948
        %v958 = vunpack.c.l.b16 %v949
        %v959 = vunpack.c.l.b16 %v950
        %v960 = vpack.c.b16 %v957, %v956
        %v961 = vpack.c.b16 %v959, %v958
        %vm964 = vcmask 261120
        %v966 = vsel %vm964, %v946, 0
        %968 = vmatprep.subr.bf16.mxu0 0
        %969 = vmatpush1.bf16.msra.mxu0 %v960
        %970 = vmatprep.subr.bf16.mxu0 0
        %971 = vmatpush1.bf16.msra.mxu0 %v961
        %972 = vmatprep.subr.bf16.mxu0 0
        %973 = vmatpush1.bf16.msra.mxu0 0
        %974 = vmatprep.subr.bf16.mxu0 0
        %975 = vmatpush1.bf16.msra.mxu0 0
        %976 = vmatprep.subr.bf16.mxu0 0
        %977 = vmatpush1.bf16.msra.mxu0 0
        %978 = vmatprep.subr.bf16.mxu0 0
        %979 = vmatpush1.bf16.msra.mxu0 0
        %980 = vmatprep.subr.bf16.mxu0 0
        %981 = vmatpush1.bf16.msra.mxu0 0
        %982 = vmatprep.subr.bf16.mxu0 0
        %983 = vmatpush1.bf16.msra.mxu0 0
        %984 = vmatprep.subr.bf16.mxu0 0
        %985 = vmatpush1.bf16.msra.mxu0 0
        %986 = vmatprep.subr.bf16.mxu0 0
        %987 = vmatpush1.bf16.msra.mxu0 0
        %988 = vmatprep.subr.bf16.mxu0 0
        %989 = vmatpush1.bf16.msra.mxu0 0
        %990 = vmatprep.subr.bf16.mxu0 0
        %991 = vmatpush1.bf16.msra.mxu0 0
        %992 = vmatprep.subr.bf16.mxu0 0
        %993 = vmatpush1.bf16.msra.mxu0 0
        %994 = vmatprep.subr.bf16.mxu0 0
        %995 = vmatpush1.bf16.msra.mxu0 0
        %996 = vmatprep.subr.bf16.mxu0 0
        %997 = vmatpush1.bf16.msra.mxu0 0
        %998 = vmatprep.subr.bf16.mxu0 0
        %999 = vmatpush1.bf16.msra.mxu0 0
        %1000 = vmatprep.mubr.bf16.mxu0 0
        %1001 = vmatmul.mubr.bf16.gmra.mrb[0].mxu0 %v966
        %v1002 = vpop.f32.mrb[0].mxu0
        %v1003 = vadd.f32 %v951, %v1002
        %v1004 = vpop.f32.mrb[0].mxu0
        %v1005 = vpop.f32.mrb[0].mxu0
        %v1006 = vpop.f32.mrb[0].mxu0
        %1007 = vdwg.mxu0
        %v1008 = vxor.u32 %v1003, 2147483648
        %v1009 = vmul.f32 %v1008, 1.442695
        %v1010 = vpow.pop %v1009
        %v1011 = vadd.f32 %v1010, 1.0
        %v1012 = vrcp.pop %v1011
        %v1013 = vmul.f32 1.0, %v1012
        %v1014 = vmax.f32 %v944, 0.0
        %v1015 = vpack.c.bf16 %v1014, %v1014
        %v1016 = vld [vmem:[%s8] sm:$0xf]
        %v1017 = vld [vmem:[%s8 + $0x4] sm:$0xf]
        %v1018 = vld [vmem:[%s8 + $0x8] sm:$0xf]
        %v1019 = vld [vmem:[%s8 + $0xc] sm:$0xf]
        %v1020 = vld [vmem:[#allocation11] sm:$0x1]
        %v1025 = vunpack.c.l.b16 %v1016
        %v1026 = vunpack.c.l.b16 %v1017
        %v1027 = vunpack.c.l.b16 %v1018
        %v1028 = vunpack.c.l.b16 %v1019
        %v1029 = vpack.c.b16 %v1026, %v1025
        %v1030 = vpack.c.b16 %v1028, %v1027
        %v1034 = vsel %vm964, %v1015, 0
        %1036 = vmatprep.subr.bf16.mxu0 0
        %1037 = vmatpush1.bf16.msra.mxu0 %v1029
        %1038 = vmatprep.subr.bf16.mxu0 0
        %1039 = vmatpush1.bf16.msra.mxu0 %v1030
        %1040 = vmatprep.subr.bf16.mxu0 0
        %1041 = vmatpush1.bf16.msra.mxu0 0
        %1042 = vmatprep.subr.bf16.mxu0 0
        %1043 = vmatpush1.bf16.msra.mxu0 0
        %1044 = vmatprep.subr.bf16.mxu0 0
        %1045 = vmatpush1.bf16.msra.mxu0 0
        %1046 = vmatprep.subr.bf16.mxu0 0
        %1047 = vmatpush1.bf16.msra.mxu0 0
        %1048 = vmatprep.subr.bf16.mxu0 0
        %1049 = vmatpush1.bf16.msra.mxu0 0
        %1050 = vmatprep.subr.bf16.mxu0 0
        %1051 = vmatpush1.bf16.msra.mxu0 0
        %1052 = vmatprep.subr.bf16.mxu0 0
        %1053 = vmatpush1.bf16.msra.mxu0 0
        %1054 = vmatprep.subr.bf16.mxu0 0
        %1055 = vmatpush1.bf16.msra.mxu0 0
        %1056 = vmatprep.subr.bf16.mxu0 0
        %1057 = vmatpush1.bf16.msra.mxu0 0
        %1058 = vmatprep.subr.bf16.mxu0 0
        %1059 = vmatpush1.bf16.msra.mxu0 0
        %1060 = vmatprep.subr.bf16.mxu0 0
        %1061 = vmatpush1.bf16.msra.mxu0 0
        %1062 = vmatprep.subr.bf16.mxu0 0
        %1063 = vmatpush1.bf16.msra.mxu0 0
        %1064 = vmatprep.subr.bf16.mxu0 0
        %1065 = vmatpush1.bf16.msra.mxu0 0
        %1066 = vmatprep.subr.bf16.mxu0 0
        %1067 = vmatpush1.bf16.msra.mxu0 0
        %1068 = vmatprep.mubr.bf16.mxu0 0
        %1069 = vmatmul.mubr.bf16.gmra.mrb[0].mxu0 %v1034
        %v1070 = vpop.f32.mrb[0].mxu0
        %v1071 = vadd.f32 %v1020, %v1070
        %v1072 = vpop.f32.mrb[0].mxu0
        %v1073 = vpop.f32.mrb[0].mxu0
        %v1074 = vpop.f32.mrb[0].mxu0
        %1075 = vdwg.mxu0
        %v1076 = vxor.u32 %v1071, 2147483648
        %v1077 = vmul.f32 %v1076, 1.442695
        %v1078 = vpow.pop %v1077
        %v1079 = vadd.f32 %v1078, 1.0
        %v1080 = vrcp.pop %v1079
        %v1081 = vmul.f32 1.0, %v1080
        %v1082 = vmax.bf16 %v828, 0
        %v1083 = vld [vmem:[%s10] sm:$0xf]
        %v1084 = vld [vmem:[%s10 + $0x4] sm:$0xf]
        %v1085 = vld [vmem:[%s10 + $0x8] sm:$0xf]
        %v1086 = vld [vmem:[%s10 + $0xc] sm:$0xf]
        %v1087 = vld [vmem:[#allocation13] sm:$0x1]
        %v1089 = vlaneseq
        %v1090 = vshrl.u32 %v1089, 7
        %v1091 = vsub.s32 0, %v1090
        %v1092 = vrot.slane %v1087, %v1091
        %v1098 = vunpack.c.l.b16 %v1083
        %v1099 = vunpack.c.l.b16 %v1084
        %v1100 = vunpack.c.l.b16 %v1085
        %v1101 = vunpack.c.l.b16 %v1086
        %v1102 = vpack.c.b16 %v1099, %v1098
        %v1103 = vpack.c.b16 %v1101, %v1100
        %v1107 = vsel %vm964, %v1082, 0
        %1109 = vmatprep.subr.bf16.mxu0 0
        %1110 = vmatpush1.bf16.msra.mxu0 %v1102
        %1111 = vmatprep.subr.bf16.mxu0 0
        %1112 = vmatpush1.bf16.msra.mxu0 %v1103
        %1113 = vmatprep.subr.bf16.mxu0 0
        %1114 = vmatpush1.bf16.msra.mxu0 0
        %1115 = vmatprep.subr.bf16.mxu0 0
        %1116 = vmatpush1.bf16.msra.mxu0 0
        %1117 = vmatprep.subr.bf16.mxu0 0
        %1118 = vmatpush1.bf16.msra.mxu0 0
        %1119 = vmatprep.subr.bf16.mxu0 0
        %1120 = vmatpush1.bf16.msra.mxu0 0
        %1121 = vmatprep.subr.bf16.mxu0 0
        %1122 = vmatpush1.bf16.msra.mxu0 0
        %1123 = vmatprep.subr.bf16.mxu0 0
        %1124 = vmatpush1.bf16.msra.mxu0 0
        %1125 = vmatprep.subr.bf16.mxu0 0
        %1126 = vmatpush1.bf16.msra.mxu0 0
        %1127 = vmatprep.subr.bf16.mxu0 0
        %1128 = vmatpush1.bf16.msra.mxu0 0
        %1129 = vmatprep.subr.bf16.mxu0 0
        %1130 = vmatpush1.bf16.msra.mxu0 0
        %1131 = vmatprep.subr.bf16.mxu0 0
        %1132 = vmatpush1.bf16.msra.mxu0 0
        %1133 = vmatprep.subr.bf16.mxu0 0
        %1134 = vmatpush1.bf16.msra.mxu0 0
        %1135 = vmatprep.subr.bf16.mxu0 0
        %1136 = vmatpush1.bf16.msra.mxu0 0
        %1137 = vmatprep.subr.bf16.mxu0 0
        %1138 = vmatpush1.bf16.msra.mxu0 0
        %1139 = vmatprep.subr.bf16.mxu0 0
        %1140 = vmatpush1.bf16.msra.mxu0 0
        %1141 = vmatprep.mubr.bf16.mxu0 0
        %1142 = vmatmul.mubr.bf16.gmra.mrb[0].mxu0 %v1107
        %v1143 = vpop.f32.mrb[0].mxu0
        %v1144 = vadd.f32 %v1092, %v1143
        %v1145 = vpop.f32.mrb[0].mxu0
        %v1146 = vpop.f32.mrb[0].mxu0
        %v1147 = vpop.f32.mrb[0].mxu0
        %1148 = vdwg.mxu0
        %1150 = vset.pattern.permute.xlu0 0
        %1151 = vperm.xlu0 %1150, %v830
        %v1152 = vpop.permute.xlu0 %1151
        %v1154 = vmul.f32 %v1144, %v1152
        %v1155 = vmax.bf16 %v829, 0
        %v1156 = vld [vmem:[%s12] sm:$0xf]
        %v1157 = vld [vmem:[%s12 + $0x4] sm:$0xf]
        %v1158 = vld [vmem:[%s12 + $0x8] sm:$0xf]
        %v1159 = vld [vmem:[%s12 + $0xc] sm:$0xf]
        %v1160 = vld [vmem:[#allocation14] sm:$0x1]
        %v1162 = vlaneseq
        %v1163 = vshrl.u32 %v1162, 7
        %v1164 = vsub.s32 0, %v1163
        %v1165 = vrot.slane %v1160, %v1164
        %v1171 = vunpack.c.l.b16 %v1156
        %v1172 = vunpack.c.l.b16 %v1157
        %v1173 = vunpack.c.l.b16 %v1158
        %v1174 = vunpack.c.l.b16 %v1159
        %v1175 = vpack.c.b16 %v1172, %v1171
        %v1176 = vpack.c.b16 %v1174, %v1173
        %v1180 = vsel %vm964, %v1155, 0
        %1182 = vmatprep.subr.bf16.mxu0 0
        %1183 = vmatpush1.bf16.msra.mxu0 %v1175
        %1184 = vmatprep.subr.bf16.mxu0 0
        %1185 = vmatpush1.bf16.msra.mxu0 %v1176
        %1186 = vmatprep.subr.bf16.mxu0 0
        %1187 = vmatpush1.bf16.msra.mxu0 0
        %1188 = vmatprep.subr.bf16.mxu0 0
        %1189 = vmatpush1.bf16.msra.mxu0 0
        %1190 = vmatprep.subr.bf16.mxu0 0
        %1191 = vmatpush1.bf16.msra.mxu0 0
        %1192 = vmatprep.subr.bf16.mxu0 0
        %1193 = vmatpush1.bf16.msra.mxu0 0
        %1194 = vmatprep.subr.bf16.mxu0 0
        %1195 = vmatpush1.bf16.msra.mxu0 0
        %1196 = vmatprep.subr.bf16.mxu0 0
        %1197 = vmatpush1.bf16.msra.mxu0 0
        %1198 = vmatprep.subr.bf16.mxu0 0
        %1199 = vmatpush1.bf16.msra.mxu0 0
        %1200 = vmatprep.subr.bf16.mxu0 0
        %1201 = vmatpush1.bf16.msra.mxu0 0
        %1202 = vmatprep.subr.bf16.mxu0 0
        %1203 = vmatpush1.bf16.msra.mxu0 0
        %1204 = vmatprep.subr.bf16.mxu0 0
        %1205 = vmatpush1.bf16.msra.mxu0 0
        %1206 = vmatprep.subr.bf16.mxu0 0
        %1207 = vmatpush1.bf16.msra.mxu0 0
        %1208 = vmatprep.subr.bf16.mxu0 0
        %1209 = vmatpush1.bf16.msra.mxu0 0
        %1210 = vmatprep.subr.bf16.mxu0 0
        %1211 = vmatpush1.bf16.msra.mxu0 0
        %1212 = vmatprep.subr.bf16.mxu0 0
        %1213 = vmatpush1.bf16.msra.mxu0 0
        %1214 = vmatprep.mubr.bf16.mxu0 0
        %1215 = vmatmul.mubr.bf16.gmra.mrb[0].mxu0 %v1180
        %v1216 = vpop.f32.mrb[0].mxu0
        %v1217 = vadd.f32 %v1165, %v1216
        %v1218 = vpop.f32.mrb[0].mxu0
        %v1219 = vpop.f32.mrb[0].mxu0
        %v1220 = vpop.f32.mrb[0].mxu0
        %1221 = vdwg.mxu0
        %1223 = vset.pattern.permute.xlu0 0
        %1224 = vperm.xlu0 %1223, %v832
        %v1225 = vpop.permute.xlu0 %1224
        %v1227 = vmul.f32 %v1217, %v1225
        %v1228 = vadd.f32 %v1081, 1.0
        %v1229 = vadd.f32 %v1013, 1.0
        %v1230 = vlaneseq
        %v1231 = vshrl.u32 %v1230, 7
        %v1232 = vsub.s32 0, %v1231
        %v1233 = vrot.slane %v1228, %v1232
        %1235 = vrot.lane.b32.xlu0 %v1154, 96
        %v1236 = vpop.permute.xlu0 %1235
        %v1238 = vmul.f32 %v1233, %v1236
        %v1239 = vmul.f32 %v1233, %v1154
        %v1240 = vmul.f32 %v1238, 0.35355338
        %v1241 = vpack.c.bf16 %v1240, %v1240
        %1243 = vrot.lane.b32.xlu0 %v1241, 120
        %v1244 = vpop.permute.xlu0 %1243
        %1245 = vrot.lane.b32.xlu0 %v1241, 112
        %v1246 = vpop.permute.xlu0 %1245
        %1247 = vrot.lane.b32.xlu0 %v1241, 104
        %v1248 = vpop.permute.xlu0 %1247
        %v1250 = vunpack.c.l.s4 1983009808
        %v1251 = vunpack.c.0.s8 %v1250
        %v1252 = vlaneseq
        %v1253 = vshrl.u32 %v1252, 7
        %v1254 = vsub.s32 %v1251, %v1253
        %v1255 = vrot.slane %v1241, %v1254
        %v1258 = vunpack.c.l.s4 1983009808
        %v1259 = vunpack.c.0.s8 %v1258
        %v1260 = vlaneseq
        %v1261 = vshrl.u32 %v1260, 7
        %v1262 = vsub.s32 %v1259, %v1261
        %v1263 = vrot.slane %v1246, %v1262
        %v1264 = vcombine.low %v1255, %v1263
        %v1265 = vcombine.high %v1255, %v1263
        %v1267 = vunpack.c.l.s4 1934713408
        %v1268 = vunpack.c.0.s8 %v1267
        %v1269 = vlaneseq
        %v1270 = vshrl.u32 %v1269, 7
        %v1271 = vsub.s32 %v1268, %v1270
        %v1272 = vrot.slane %v1264, %v1271
        %v1274 = vunpack.c.l.s4 1934713408
        %v1275 = vunpack.c.0.s8 %v1274
        %v1276 = vlaneseq
        %v1277 = vshrl.u32 %v1276, 7
        %v1278 = vsub.s32 %v1275, %v1277
        %v1279 = vrot.slane %v1265, %v1278
        %v1280 = vcombine.high %v1272, 0
        %v1281 = vcombine.high %v1279, 0
        %v1284 = vunpack.c.l.s4 1983009808
        %v1285 = vunpack.c.0.s8 %v1284
        %v1286 = vlaneseq
        %v1287 = vshrl.u32 %v1286, 7
        %v1288 = vsub.s32 %v1285, %v1287
        %v1289 = vrot.slane %v1244, %v1288
        %v1292 = vunpack.c.l.s4 1983009808
        %v1293 = vunpack.c.0.s8 %v1292
        %v1294 = vlaneseq
        %v1295 = vshrl.u32 %v1294, 7
        %v1296 = vsub.s32 %v1293, %v1295
        %v1297 = vrot.slane %v1248, %v1296
        %v1298 = vcombine.low %v1289, %v1297
        %v1299 = vcombine.high %v1289, %v1297
        %v1301 = vunpack.c.l.s4 1934713408
        %v1302 = vunpack.c.0.s8 %v1301
        %v1303 = vlaneseq
        %v1304 = vshrl.u32 %v1303, 7
        %v1305 = vsub.s32 %v1302, %v1304
        %v1306 = vrot.slane %v1298, %v1305
        %v1308 = vunpack.c.l.s4 1934713408
        %v1309 = vunpack.c.0.s8 %v1308
        %v1310 = vlaneseq
        %v1311 = vshrl.u32 %v1310, 7
        %v1312 = vsub.s32 %v1309, %v1311
        %v1313 = vrot.slane %v1299, %v1312
        %v1314 = vcombine.high %v1306, 0
        %v1315 = vcombine.high %v1313, 0
        %v1318 = vpack.i.b16 %v1306, %v1272
        %v1320 = vshrl.u32 %v1272, 16
        %v1321 = vshrl.u32 %v1306, 16
        %v1322 = vpack.i.b16 %v1321, %v1320
        %v1326 = vpack.i.b16 %v1314, %v1280
        %v1328 = vshrl.u32 %v1280, 16
        %v1329 = vshrl.u32 %v1314, 16
        %v1330 = vpack.i.b16 %v1329, %v1328
        %v1334 = vpack.i.b16 %v1313, %v1279
        %v1336 = vshrl.u32 %v1279, 16
        %v1337 = vshrl.u32 %v1313, 16
        %v1338 = vpack.i.b16 %v1337, %v1336
        %v1342 = vpack.i.b16 %v1315, %v1281
        %v1344 = vshrl.u32 %v1281, 16
        %v1345 = vshrl.u32 %v1315, 16
        %v1346 = vpack.i.b16 %v1345, %v1344
        %v1348 = vcombine.low %v1318, %v1334
        %v1350 = vunpack.c.l.s4 1983009808
        %v1351 = vunpack.c.0.s8 %v1350
        %v1352 = vlaneseq
        %v1353 = vshrl.u32 %v1352, 7
        %v1354 = vsub.s32 %v1351, %v1353
        %v1355 = vrot.slane %v1348, %v1354
        %v1356 = vcombine.low %v1326, %v1342
        %v1358 = vunpack.c.l.s4 1983009808
        %v1359 = vunpack.c.0.s8 %v1358
        %v1360 = vlaneseq
        %v1361 = vshrl.u32 %v1360, 7
        %v1362 = vsub.s32 %v1359, %v1361
        %v1363 = vrot.slane %v1356, %v1362
        %v1364 = vcombine.low %v1355, %v1363
        %v1366 = vunpack.c.l.s4 1934713408
        %v1367 = vunpack.c.0.s8 %v1366
        %v1368 = vlaneseq
        %v1369 = vshrl.u32 %v1368, 7
        %v1370 = vsub.s32 %v1367, %v1369
        %v1371 = vrot.slane %v1364, %v1370
        %v1372 = vcombine.high %v1371, 0
        %v1373 = vcombine.low %v1322, %v1338
        %v1375 = vunpack.c.l.s4 1983009808
        %v1376 = vunpack.c.0.s8 %v1375
        %v1377 = vlaneseq
        %v1378 = vshrl.u32 %v1377, 7
        %v1379 = vsub.s32 %v1376, %v1378
        %v1380 = vrot.slane %v1373, %v1379
        %v1381 = vcombine.low %v1330, %v1346
        %v1383 = vunpack.c.l.s4 1983009808
        %v1384 = vunpack.c.0.s8 %v1383
        %v1385 = vlaneseq
        %v1386 = vshrl.u32 %v1385, 7
        %v1387 = vsub.s32 %v1384, %v1386
        %v1388 = vrot.slane %v1381, %v1387
        %v1389 = vcombine.low %v1380, %v1388
        %v1391 = vunpack.c.l.s4 1934713408
        %v1392 = vunpack.c.0.s8 %v1391
        %v1393 = vlaneseq
        %v1394 = vshrl.u32 %v1393, 7
        %v1395 = vsub.s32 %v1392, %v1394
        %v1396 = vrot.slane %v1389, %v1395
        %v1397 = vcombine.high %v1396, 0
        %v1400 = vpack.i.b16 %v1396, %v1371
        %v1401 = vshrl.u32 %v1371, 16
        %v1402 = vshrl.u32 %v1396, 16
        %v1403 = vpack.i.b16 %v1402, %v1401
        %v1406 = vpack.i.b16 %v1397, %v1372
        %v1407 = vshrl.u32 %v1372, 16
        %v1408 = vshrl.u32 %v1397, 16
        %v1409 = vpack.i.b16 %v1408, %v1407
        %v1410 = vpack.c.bf16 %v1239, %v1239
        %1412 = vrot.lane.b32.xlu0 %v1410, 120
        %v1413 = vpop.permute.xlu0 %1412
        %1414 = vrot.lane.b32.xlu0 %v1410, 112
        %v1415 = vpop.permute.xlu0 %1414
        %1416 = vrot.lane.b32.xlu0 %v1410, 104
        %v1417 = vpop.permute.xlu0 %1416
        %v1419 = vunpack.c.l.s4 1983009808
        %v1420 = vunpack.c.0.s8 %v1419
        %v1421 = vlaneseq
        %v1422 = vshrl.u32 %v1421, 7
        %v1423 = vsub.s32 %v1420, %v1422
        %v1424 = vrot.slane %v1410, %v1423
        %v1427 = vunpack.c.l.s4 1983009808
        %v1428 = vunpack.c.0.s8 %v1427
        %v1429 = vlaneseq
        %v1430 = vshrl.u32 %v1429, 7
        %v1431 = vsub.s32 %v1428, %v1430
        %v1432 = vrot.slane %v1415, %v1431
        %v1433 = vcombine.low %v1424, %v1432
        %v1434 = vcombine.high %v1424, %v1432
        %v1436 = vunpack.c.l.s4 1934713408
        %v1437 = vunpack.c.0.s8 %v1436
        %v1438 = vlaneseq
        %v1439 = vshrl.u32 %v1438, 7
        %v1440 = vsub.s32 %v1437, %v1439
        %v1441 = vrot.slane %v1433, %v1440
        %v1443 = vunpack.c.l.s4 1934713408
        %v1444 = vunpack.c.0.s8 %v1443
        %v1445 = vlaneseq
        %v1446 = vshrl.u32 %v1445, 7
        %v1447 = vsub.s32 %v1444, %v1446
        %v1448 = vrot.slane %v1434, %v1447
        %v1449 = vcombine.high %v1441, 0
        %v1450 = vcombine.high %v1448, 0
        %v1453 = vunpack.c.l.s4 1983009808
        %v1454 = vunpack.c.0.s8 %v1453
        %v1455 = vlaneseq
        %v1456 = vshrl.u32 %v1455, 7
        %v1457 = vsub.s32 %v1454, %v1456
        %v1458 = vrot.slane %v1413, %v1457
        %v1461 = vunpack.c.l.s4 1983009808
        %v1462 = vunpack.c.0.s8 %v1461
        %v1463 = vlaneseq
        %v1464 = vshrl.u32 %v1463, 7
        %v1465 = vsub.s32 %v1462, %v1464
        %v1466 = vrot.slane %v1417, %v1465
        %v1467 = vcombine.low %v1458, %v1466
        %v1468 = vcombine.high %v1458, %v1466
        %v1470 = vunpack.c.l.s4 1934713408
        %v1471 = vunpack.c.0.s8 %v1470
        %v1472 = vlaneseq
        %v1473 = vshrl.u32 %v1472, 7
        %v1474 = vsub.s32 %v1471, %v1473
        %v1475 = vrot.slane %v1467, %v1474
        %v1477 = vunpack.c.l.s4 1934713408
        %v1478 = vunpack.c.0.s8 %v1477
        %v1479 = vlaneseq
        %v1480 = vshrl.u32 %v1479, 7
        %v1481 = vsub.s32 %v1478, %v1480
        %v1482 = vrot.slane %v1468, %v1481
        %v1483 = vcombine.high %v1475, 0
        %v1484 = vcombine.high %v1482, 0
        %v1487 = vpack.i.b16 %v1475, %v1441
        %v1489 = vshrl.u32 %v1441, 16
        %v1490 = vshrl.u32 %v1475, 16
        %v1491 = vpack.i.b16 %v1490, %v1489
        %v1495 = vpack.i.b16 %v1483, %v1449
        %v1497 = vshrl.u32 %v1449, 16
        %v1498 = vshrl.u32 %v1483, 16
        %v1499 = vpack.i.b16 %v1498, %v1497
        %v1503 = vpack.i.b16 %v1482, %v1448
        %v1505 = vshrl.u32 %v1448, 16
        %v1506 = vshrl.u32 %v1482, 16
        %v1507 = vpack.i.b16 %v1506, %v1505
        %v1511 = vpack.i.b16 %v1484, %v1450
        %v1513 = vshrl.u32 %v1450, 16
        %v1514 = vshrl.u32 %v1484, 16
        %v1515 = vpack.i.b16 %v1514, %v1513
        %v1517 = vcombine.low %v1487, %v1503
        %v1519 = vunpack.c.l.s4 1983009808
        %v1520 = vunpack.c.0.s8 %v1519
        %v1521 = vlaneseq
        %v1522 = vshrl.u32 %v1521, 7
        %v1523 = vsub.s32 %v1520, %v1522
        %v1524 = vrot.slane %v1517, %v1523
        %v1525 = vcombine.low %v1495, %v1511
        %v1527 = vunpack.c.l.s4 1983009808
        %v1528 = vunpack.c.0.s8 %v1527
        %v1529 = vlaneseq
        %v1530 = vshrl.u32 %v1529, 7
        %v1531 = vsub.s32 %v1528, %v1530
        %v1532 = vrot.slane %v1525, %v1531
        %v1533 = vcombine.low %v1524, %v1532
        %v1535 = vunpack.c.l.s4 1934713408
        %v1536 = vunpack.c.0.s8 %v1535
        %v1537 = vlaneseq
        %v1538 = vshrl.u32 %v1537, 7
        %v1539 = vsub.s32 %v1536, %v1538
        %v1540 = vrot.slane %v1533, %v1539
        %v1541 = vcombine.high %v1540, 0
        %v1542 = vcombine.low %v1491, %v1507
        %v1544 = vunpack.c.l.s4 1983009808
        %v1545 = vunpack.c.0.s8 %v1544
        %v1546 = vlaneseq
        %v1547 = vshrl.u32 %v1546, 7
        %v1548 = vsub.s32 %v1545, %v1547
        %v1549 = vrot.slane %v1542, %v1548
        %v1550 = vcombine.low %v1499, %v1515
        %v1552 = vunpack.c.l.s4 1983009808
        %v1553 = vunpack.c.0.s8 %v1552
        %v1554 = vlaneseq
        %v1555 = vshrl.u32 %v1554, 7
        %v1556 = vsub.s32 %v1553, %v1555
        %v1557 = vrot.slane %v1550, %v1556
        %v1558 = vcombine.low %v1549, %v1557
        %v1560 = vunpack.c.l.s4 1934713408
        %v1561 = vunpack.c.0.s8 %v1560
        %v1562 = vlaneseq
        %v1563 = vshrl.u32 %v1562, 7
        %v1564 = vsub.s32 %v1561, %v1563
        %v1565 = vrot.slane %v1558, %v1564
        %v1566 = vcombine.high %v1565, 0
        %v1569 = vpack.i.b16 %v1565, %v1540
        %v1570 = vshrl.u32 %v1540, 16
        %v1571 = vshrl.u32 %v1565, 16
        %v1572 = vpack.i.b16 %v1571, %v1570
        %v1575 = vpack.i.b16 %v1566, %v1541
        %v1576 = vshrl.u32 %v1541, 16
        %v1577 = vshrl.u32 %v1566, 16
        %v1578 = vpack.i.b16 %v1577, %v1576
        %v1579 = vpack.c.bf16 %v1154, %v1154
        %1581 = vrot.lane.b32.xlu0 %v1579, 120
        %v1582 = vpop.permute.xlu0 %1581
        %1583 = vrot.lane.b32.xlu0 %v1579, 112
        %v1584 = vpop.permute.xlu0 %1583
        %1585 = vrot.lane.b32.xlu0 %v1579, 104
        %v1586 = vpop.permute.xlu0 %1585
        %1587 = vrot.lane.b32.xlu0 %v1579, 64
        %v1588 = vpop.permute.xlu0 %1587
        %1589 = vrot.lane.b32.xlu0 %v1582, 64
        %v1590 = vpop.permute.xlu0 %1589
        %1591 = vrot.lane.b32.xlu0 %v1584, 64
        %v1592 = vpop.permute.xlu0 %1591
        %1593 = vrot.lane.b32.xlu0 %v1586, 64
        %v1594 = vpop.permute.xlu0 %1593
        %v1597 = vunpack.c.l.s4 1983009808
        %v1598 = vunpack.c.0.s8 %v1597
        %v1599 = vlaneseq
        %v1600 = vshrl.u32 %v1599, 7
        %v1601 = vsub.s32 %v1598, %v1600
        %v1602 = vrot.slane %v1588, %v1601
        %v1605 = vunpack.c.l.s4 1983009808
        %v1606 = vunpack.c.0.s8 %v1605
        %v1607 = vlaneseq
        %v1608 = vshrl.u32 %v1607, 7
        %v1609 = vsub.s32 %v1606, %v1608
        %v1610 = vrot.slane %v1592, %v1609
        %v1611 = vcombine.low %v1602, %v1610
        %v1612 = vcombine.high %v1602, %v1610
        %v1614 = vunpack.c.l.s4 1934713408
        %v1615 = vunpack.c.0.s8 %v1614
        %v1616 = vlaneseq
        %v1617 = vshrl.u32 %v1616, 7
        %v1618 = vsub.s32 %v1615, %v1617
        %v1619 = vrot.slane %v1611, %v1618
        %v1621 = vunpack.c.l.s4 1934713408
        %v1622 = vunpack.c.0.s8 %v1621
        %v1623 = vlaneseq
        %v1624 = vshrl.u32 %v1623, 7
        %v1625 = vsub.s32 %v1622, %v1624
        %v1626 = vrot.slane %v1612, %v1625
        %v1627 = vcombine.high %v1619, 0
        %v1628 = vcombine.high %v1626, 0
        %v1631 = vunpack.c.l.s4 1983009808
        %v1632 = vunpack.c.0.s8 %v1631
        %v1633 = vlaneseq
        %v1634 = vshrl.u32 %v1633, 7
        %v1635 = vsub.s32 %v1632, %v1634
        %v1636 = vrot.slane %v1590, %v1635
        %v1639 = vunpack.c.l.s4 1983009808
        %v1640 = vunpack.c.0.s8 %v1639
        %v1641 = vlaneseq
        %v1642 = vshrl.u32 %v1641, 7
        %v1643 = vsub.s32 %v1640, %v1642
        %v1644 = vrot.slane %v1594, %v1643
        %v1645 = vcombine.low %v1636, %v1644
        %v1646 = vcombine.high %v1636, %v1644
        %v1648 = vunpack.c.l.s4 1934713408
        %v1649 = vunpack.c.0.s8 %v1648
        %v1650 = vlaneseq
        %v1651 = vshrl.u32 %v1650, 7
        %v1652 = vsub.s32 %v1649, %v1651
        %v1653 = vrot.slane %v1645, %v1652
        %v1655 = vunpack.c.l.s4 1934713408
        %v1656 = vunpack.c.0.s8 %v1655
        %v1657 = vlaneseq
        %v1658 = vshrl.u32 %v1657, 7
        %v1659 = vsub.s32 %v1656, %v1658
        %v1660 = vrot.slane %v1646, %v1659
        %v1661 = vcombine.high %v1653, 0
        %v1662 = vcombine.high %v1660, 0
        %v1665 = vpack.i.b16 %v1653, %v1619
        %v1667 = vshrl.u32 %v1619, 16
        %v1668 = vshrl.u32 %v1653, 16
        %v1669 = vpack.i.b16 %v1668, %v1667
        %v1673 = vpack.i.b16 %v1661, %v1627
        %v1675 = vshrl.u32 %v1627, 16
        %v1676 = vshrl.u32 %v1661, 16
        %v1677 = vpack.i.b16 %v1676, %v1675
        %v1681 = vpack.i.b16 %v1660, %v1626
        %v1683 = vshrl.u32 %v1626, 16
        %v1684 = vshrl.u32 %v1660, 16
        %v1685 = vpack.i.b16 %v1684, %v1683
        %v1689 = vpack.i.b16 %v1662, %v1628
        %v1691 = vshrl.u32 %v1628, 16
        %v1692 = vshrl.u32 %v1662, 16
        %v1693 = vpack.i.b16 %v1692, %v1691
        %v1695 = vcombine.low %v1665, %v1681
        %v1697 = vunpack.c.l.s4 1983009808
        %v1698 = vunpack.c.0.s8 %v1697
        %v1699 = vlaneseq
        %v1700 = vshrl.u32 %v1699, 7
        %v1701 = vsub.s32 %v1698, %v1700
        %v1702 = vrot.slane %v1695, %v1701
        %v1703 = vcombine.low %v1673, %v1689
        %v1705 = vunpack.c.l.s4 1983009808
        %v1706 = vunpack.c.0.s8 %v1705
        %v1707 = vlaneseq
        %v1708 = vshrl.u32 %v1707, 7
        %v1709 = vsub.s32 %v1706, %v1708
        %v1710 = vrot.slane %v1703, %v1709
        %v1711 = vcombine.low %v1702, %v1710
        %v1713 = vunpack.c.l.s4 1934713408
        %v1714 = vunpack.c.0.s8 %v1713
        %v1715 = vlaneseq
        %v1716 = vshrl.u32 %v1715, 7
        %v1717 = vsub.s32 %v1714, %v1716
        %v1718 = vrot.slane %v1711, %v1717
        %v1719 = vcombine.high %v1718, 0
        %v1720 = vcombine.low %v1669, %v1685
        %v1722 = vunpack.c.l.s4 1983009808
        %v1723 = vunpack.c.0.s8 %v1722
        %v1724 = vlaneseq
        %v1725 = vshrl.u32 %v1724, 7
        %v1726 = vsub.s32 %v1723, %v1725
        %v1727 = vrot.slane %v1720, %v1726
        %v1728 = vcombine.low %v1677, %v1693
        %v1730 = vunpack.c.l.s4 1983009808
        %v1731 = vunpack.c.0.s8 %v1730
        %v1732 = vlaneseq
        %v1733 = vshrl.u32 %v1732, 7
        %v1734 = vsub.s32 %v1731, %v1733
        %v1735 = vrot.slane %v1728, %v1734
        %v1736 = vcombine.low %v1727, %v1735
        %v1738 = vunpack.c.l.s4 1934713408
        %v1739 = vunpack.c.0.s8 %v1738
        %v1740 = vlaneseq
        %v1741 = vshrl.u32 %v1740, 7
        %v1742 = vsub.s32 %v1739, %v1741
        %v1743 = vrot.slane %v1736, %v1742
        %v1744 = vcombine.high %v1743, 0
        %v1747 = vpack.i.b16 %v1743, %v1718
        %v1748 = vshrl.u32 %v1718, 16
        %v1749 = vshrl.u32 %v1743, 16
        %v1750 = vpack.i.b16 %v1749, %v1748
        %v1753 = vpack.i.b16 %v1744, %v1719
        %v1754 = vshrl.u32 %v1719, 16
        %v1755 = vshrl.u32 %v1744, 16
        %v1756 = vpack.i.b16 %v1755, %v1754
        %v1758 = vlaneseq
        %v1759 = vshrl.u32 %v1758, 7
        %v1760 = vsub.s32 0, %v1759
        %v1761 = vrot.slane %v835, %v1760
        %v1764 = vsel %vm848, %v1400, 0
        %v1767 = vsel %vm848, %v1569, 0
        %1769 = vmatprep.subr.bf16.mxu0 0
        %1770 = vmatpush1.bf16.xpose.msra.mxu0 %v1767
        %1771 = vmatprep.subr.bf16.mxu0 0
        %1772 = vmatpush1.bf16.xpose.msra.mxu0 0
        %1773 = vmatprep.subr.bf16.mxu0 0
        %1774 = vmatpush1.bf16.xpose.msra.mxu0 0
        %1775 = vmatprep.subr.bf16.mxu0 0
        %1776 = vmatpush1.bf16.xpose.msra.mxu0 0
        %1777 = vmatprep.subr.bf16.mxu0 0
        %1778 = vmatpush1.bf16.xpose.msra.mxu0 0
        %1779 = vmatprep.subr.bf16.mxu0 0
        %1780 = vmatpush1.bf16.xpose.msra.mxu0 0
        %1781 = vmatprep.subr.bf16.mxu0 0
        %1782 = vmatpush1.bf16.xpose.msra.mxu0 0
        %1783 = vmatprep.subr.bf16.mxu0 0
        %1784 = vmatpush1.bf16.xpose.msra.mxu0 0
        %1785 = vmatprep.subr.bf16.mxu0 0
        %1786 = vmatpush1.bf16.xpose.msra.mxu0 0
        %1787 = vmatprep.subr.bf16.mxu0 0
        %1788 = vmatpush1.bf16.xpose.msra.mxu0 0
        %1789 = vmatprep.subr.bf16.mxu0 0
        %1790 = vmatpush1.bf16.xpose.msra.mxu0 0
        %1791 = vmatprep.subr.bf16.mxu0 0
        %1792 = vmatpush1.bf16.xpose.msra.mxu0 0
        %1793 = vmatprep.subr.bf16.mxu0 0
        %1794 = vmatpush1.bf16.xpose.msra.mxu0 0
        %1795 = vmatprep.subr.bf16.mxu0 0
        %1796 = vmatpush1.bf16.xpose.msra.mxu0 0
        %1797 = vmatprep.subr.bf16.mxu0 0
        %1798 = vmatpush1.bf16.xpose.msra.mxu0 0
        %1799 = vmatprep.subr.bf16.mxu0 0
        %1800 = vmatpush1.bf16.xpose.msra.mxu0 0
        %1801 = vmatprep.mubr.bf16.mxu0 0
        %1802 = vmatmul.mubr.bf16.gmra.mrb[0].mxu0 %v1764
        %v1803 = vpop.f32.mrb[0].mxu0
        %v1804 = vadd.f32 %v1761, %v1803
        %v1805 = vpop.f32.mrb[0].mxu0
        %v1806 = vpop.f32.mrb[0].mxu0
        %v1807 = vpop.f32.mrb[0].mxu0
        %1808 = vdwg.mxu0
        %v1810 = vsel %vm848, %v1403, 0
        %v1813 = vsel %vm848, %v1572, 0
        %1815 = vmatprep.subr.bf16.mxu0 0
        %1816 = vmatpush1.bf16.xpose.msra.mxu0 %v1813
        %1817 = vmatprep.subr.bf16.mxu0 0
        %1818 = vmatpush1.bf16.xpose.msra.mxu0 0
        %1819 = vmatprep.subr.bf16.mxu0 0
        %1820 = vmatpush1.bf16.xpose.msra.mxu0 0
        %1821 = vmatprep.subr.bf16.mxu0 0
        %1822 = vmatpush1.bf16.xpose.msra.mxu0 0
        %1823 = vmatprep.subr.bf16.mxu0 0
        %1824 = vmatpush1.bf16.xpose.msra.mxu0 0
        %1825 = vmatprep.subr.bf16.mxu0 0
        %1826 = vmatpush1.bf16.xpose.msra.mxu0 0
        %1827 = vmatprep.subr.bf16.mxu0 0
        %1828 = vmatpush1.bf16.xpose.msra.mxu0 0
        %1829 = vmatprep.subr.bf16.mxu0 0
        %1830 = vmatpush1.bf16.xpose.msra.mxu0 0
        %1831 = vmatprep.subr.bf16.mxu0 0
        %1832 = vmatpush1.bf16.xpose.msra.mxu0 0
        %1833 = vmatprep.subr.bf16.mxu0 0
        %1834 = vmatpush1.bf16.xpose.msra.mxu0 0
        %1835 = vmatprep.subr.bf16.mxu0 0
        %1836 = vmatpush1.bf16.xpose.msra.mxu0 0
        %1837 = vmatprep.subr.bf16.mxu0 0
        %1838 = vmatpush1.bf16.xpose.msra.mxu0 0
        %1839 = vmatprep.subr.bf16.mxu0 0
        %1840 = vmatpush1.bf16.xpose.msra.mxu0 0
        %1841 = vmatprep.subr.bf16.mxu0 0
        %1842 = vmatpush1.bf16.xpose.msra.mxu0 0
        %1843 = vmatprep.subr.bf16.mxu0 0
        %1844 = vmatpush1.bf16.xpose.msra.mxu0 0
        %1845 = vmatprep.subr.bf16.mxu0 0
        %1846 = vmatpush1.bf16.xpose.msra.mxu0 0
        %1847 = vmatprep.mubr.bf16.mxu0 0
        %1848 = vmatmul.mubr.bf16.gmra.mrb[0].mxu0 %v1810
        %v1849 = vpop.f32.mrb[0].mxu0
        %v1850 = vadd.f32 %v1761, %v1849
        %v1851 = vpop.f32.mrb[0].mxu0
        %v1852 = vpop.f32.mrb[0].mxu0
        %v1853 = vpop.f32.mrb[0].mxu0
        %1854 = vdwg.mxu0
        %v1856 = vsel %vm848, %v1406, 0
        %v1859 = vsel %vm848, %v1575, 0
        %1861 = vmatprep.subr.bf16.mxu0 0
        %1862 = vmatpush1.bf16.xpose.msra.mxu0 %v1859
        %1863 = vmatprep.subr.bf16.mxu0 0
        %1864 = vmatpush1.bf16.xpose.msra.mxu0 0
        %1865 = vmatprep.subr.bf16.mxu0 0
        %1866 = vmatpush1.bf16.xpose.msra.mxu0 0
        %1867 = vmatprep.subr.bf16.mxu0 0
        %1868 = vmatpush1.bf16.xpose.msra.mxu0 0
        %1869 = vmatprep.subr.bf16.mxu0 0
        %1870 = vmatpush1.bf16.xpose.msra.mxu0 0
        %1871 = vmatprep.subr.bf16.mxu0 0
        %1872 = vmatpush1.bf16.xpose.msra.mxu0 0
        %1873 = vmatprep.subr.bf16.mxu0 0
        %1874 = vmatpush1.bf16.xpose.msra.mxu0 0
        %1875 = vmatprep.subr.bf16.mxu0 0
        %1876 = vmatpush1.bf16.xpose.msra.mxu0 0
        %1877 = vmatprep.subr.bf16.mxu0 0
        %1878 = vmatpush1.bf16.xpose.msra.mxu0 0
        %1879 = vmatprep.subr.bf16.mxu0 0
        %1880 = vmatpush1.bf16.xpose.msra.mxu0 0
        %1881 = vmatprep.subr.bf16.mxu0 0
        %1882 = vmatpush1.bf16.xpose.msra.mxu0 0
        %1883 = vmatprep.subr.bf16.mxu0 0
        %1884 = vmatpush1.bf16.xpose.msra.mxu0 0
        %1885 = vmatprep.subr.bf16.mxu0 0
        %1886 = vmatpush1.bf16.xpose.msra.mxu0 0
        %1887 = vmatprep.subr.bf16.mxu0 0
        %1888 = vmatpush1.bf16.xpose.msra.mxu0 0
        %1889 = vmatprep.subr.bf16.mxu0 0
        %1890 = vmatpush1.bf16.xpose.msra.mxu0 0
        %1891 = vmatprep.subr.bf16.mxu0 0
        %1892 = vmatpush1.bf16.xpose.msra.mxu0 0
        %1893 = vmatprep.mubr.bf16.mxu0 0
        %1894 = vmatmul.mubr.bf16.gmra.mrb[0].mxu0 %v1856
        %v1895 = vpop.f32.mrb[0].mxu0
        %v1896 = vadd.f32 %v1761, %v1895
        %v1897 = vpop.f32.mrb[0].mxu0
        %v1898 = vpop.f32.mrb[0].mxu0
        %v1899 = vpop.f32.mrb[0].mxu0
        %1900 = vdwg.mxu0
        %v1902 = vsel %vm848, %v1409, 0
        %v1905 = vsel %vm848, %v1578, 0
        %1907 = vmatprep.subr.bf16.mxu0 0
        %1908 = vmatpush1.bf16.xpose.msra.mxu0 %v1905
        %1909 = vmatprep.subr.bf16.mxu0 0
        %1910 = vmatpush1.bf16.xpose.msra.mxu0 0
        %1911 = vmatprep.subr.bf16.mxu0 0
        %1912 = vmatpush1.bf16.xpose.msra.mxu0 0
        %1913 = vmatprep.subr.bf16.mxu0 0
        %1914 = vmatpush1.bf16.xpose.msra.mxu0 0
        %1915 = vmatprep.subr.bf16.mxu0 0
        %1916 = vmatpush1.bf16.xpose.msra.mxu0 0
        %1917 = vmatprep.subr.bf16.mxu0 0
        %1918 = vmatpush1.bf16.xpose.msra.mxu0 0
        %1919 = vmatprep.subr.bf16.mxu0 0
        %1920 = vmatpush1.bf16.xpose.msra.mxu0 0
        %1921 = vmatprep.subr.bf16.mxu0 0
        %1922 = vmatpush1.bf16.xpose.msra.mxu0 0
        %1923 = vmatprep.subr.bf16.mxu0 0
        %1924 = vmatpush1.bf16.xpose.msra.mxu0 0
        %1925 = vmatprep.subr.bf16.mxu0 0
        %1926 = vmatpush1.bf16.xpose.msra.mxu0 0
        %1927 = vmatprep.subr.bf16.mxu0 0
        %1928 = vmatpush1.bf16.xpose.msra.mxu0 0
        %1929 = vmatprep.subr.bf16.mxu0 0
        %1930 = vmatpush1.bf16.xpose.msra.mxu0 0
        %1931 = vmatprep.subr.bf16.mxu0 0
        %1932 = vmatpush1.bf16.xpose.msra.mxu0 0
        %1933 = vmatprep.subr.bf16.mxu0 0
        %1934 = vmatpush1.bf16.xpose.msra.mxu0 0
        %1935 = vmatprep.subr.bf16.mxu0 0
        %1936 = vmatpush1.bf16.xpose.msra.mxu0 0
        %1937 = vmatprep.subr.bf16.mxu0 0
        %1938 = vmatpush1.bf16.xpose.msra.mxu0 0
        %1939 = vmatprep.mubr.bf16.mxu0 0
        %1940 = vmatmul.mubr.bf16.gmra.mrb[0].mxu0 %v1902
        %v1941 = vpop.f32.mrb[0].mxu0
        %v1942 = vadd.f32 %v1761, %v1941
        %v1943 = vpop.f32.mrb[0].mxu0
        %v1944 = vpop.f32.mrb[0].mxu0
        %v1945 = vpop.f32.mrb[0].mxu0
        %1946 = vdwg.mxu0
        %v1947 = vsel %vm848, %v1804, -inf
        %1948 = vmax.xlane.f32.xlu0 %v1947
        %v1949 = vpop.xlane.xlu0 %1948
        %v1950 = vsel %vm848, %v1850, -inf
        %1951 = vmax.xlane.f32.xlu0 %v1950
        %v1952 = vpop.xlane.xlu0 %1951
        %v1953 = vsel %vm848, %v1896, -inf
        %1954 = vmax.xlane.f32.xlu0 %v1953
        %v1955 = vpop.xlane.xlu0 %1954
        %v1956 = vsel %vm848, %v1942, -inf
        %1957 = vmax.xlane.f32.xlu0 %v1956
        %v1958 = vpop.xlane.xlu0 %1957
        %v1959 = vsub.f32 %v1804, %v1949
        %v1960 = vsub.f32 %v1850, %v1952
        %v1961 = vsub.f32 %v1896, %v1955
        %v1962 = vsub.f32 %v1942, %v1958
        %v1963 = vmul.f32 %v1959, 1.442695
        %v1964 = vpow.pop %v1963
        %v1965 = vmul.f32 %v1960, 1.442695
        %v1966 = vpow.pop %v1965
        %v1967 = vmul.f32 %v1961, 1.442695
        %v1968 = vpow.pop %v1967
        %v1969 = vmul.f32 %v1962, 1.442695
        %v1970 = vpow.pop %v1969
        %v1971 = vsel %vm848, %v1964, 0.0
        %1972 = vadd.xlane.f32.xlu0 %v1971
        %v1973 = vpop.xlane.xlu0 %1972
        %v1974 = vsel %vm848, %v1966, 0.0
        %1975 = vadd.xlane.f32.xlu0 %v1974
        %v1976 = vpop.xlane.xlu0 %1975
        %v1977 = vsel %vm848, %v1968, 0.0
        %1978 = vadd.xlane.f32.xlu0 %v1977
        %v1979 = vpop.xlane.xlu0 %1978
        %v1980 = vsel %vm848, %v1970, 0.0
        %1981 = vadd.xlane.f32.xlu0 %v1980
        %v1982 = vpop.xlane.xlu0 %1981
        %v1983 = vpack.c.bf16 %v1964, %v1964
        %v1984 = vpack.c.bf16 %v1966, %v1966
        %v1985 = vpack.c.bf16 %v1968, %v1968
        %v1986 = vpack.c.bf16 %v1970, %v1970
        %v1988 = vsel %vm848, %v1983, 0
        %v1991 = vsel %vm852, %v1747, 0
        %1993 = vmatprep.subr.bf16.mxu0 0
        %1994 = vmatpush1.bf16.msra.mxu0 %v1991
        %1995 = vmatprep.subr.bf16.mxu0 0
        %1996 = vmatpush1.bf16.msra.mxu0 0
        %1997 = vmatprep.subr.bf16.mxu0 0
        %1998 = vmatpush1.bf16.msra.mxu0 0
        %1999 = vmatprep.subr.bf16.mxu0 0
        %2000 = vmatpush1.bf16.msra.mxu0 0
        %2001 = vmatprep.subr.bf16.mxu0 0
        %2002 = vmatpush1.bf16.msra.mxu0 0
        %2003 = vmatprep.subr.bf16.mxu0 0
        %2004 = vmatpush1.bf16.msra.mxu0 0
        %2005 = vmatprep.subr.bf16.mxu0 0
        %2006 = vmatpush1.bf16.msra.mxu0 0
        %2007 = vmatprep.subr.bf16.mxu0 0
        %2008 = vmatpush1.bf16.msra.mxu0 0
        %2009 = vmatprep.subr.bf16.mxu0 0
        %2010 = vmatpush1.bf16.msra.mxu0 0
        %2011 = vmatprep.subr.bf16.mxu0 0
        %2012 = vmatpush1.bf16.msra.mxu0 0
        %2013 = vmatprep.subr.bf16.mxu0 0
        %2014 = vmatpush1.bf16.msra.mxu0 0
        %2015 = vmatprep.subr.bf16.mxu0 0
        %2016 = vmatpush1.bf16.msra.mxu0 0
        %2017 = vmatprep.subr.bf16.mxu0 0
        %2018 = vmatpush1.bf16.msra.mxu0 0
        %2019 = vmatprep.subr.bf16.mxu0 0
        %2020 = vmatpush1.bf16.msra.mxu0 0
        %2021 = vmatprep.subr.bf16.mxu0 0
        %2022 = vmatpush1.bf16.msra.mxu0 0
        %2023 = vmatprep.subr.bf16.mxu0 0
        %2024 = vmatpush1.bf16.msra.mxu0 0
        %2025 = vmatprep.mubr.bf16.mxu0 0
        %2026 = vmatmul.mubr.bf16.gmra.mrb[0].mxu0 %v1988
        %v2027 = vpop.f32.mrb[0].mxu0
        %v2028 = vadd.f32 0.0, %v2027
        %v2029 = vpop.f32.mrb[0].mxu0
        %v2030 = vpop.f32.mrb[0].mxu0
        %v2031 = vpop.f32.mrb[0].mxu0
        %2032 = vdwg.mxu0
        %v2034 = vsel %vm848, %v1984, 0
        %v2037 = vsel %vm852, %v1750, 0
        %2039 = vmatprep.subr.bf16.mxu0 0
        %2040 = vmatpush1.bf16.msra.mxu0 %v2037
        %2041 = vmatprep.subr.bf16.mxu0 0
        %2042 = vmatpush1.bf16.msra.mxu0 0
        %2043 = vmatprep.subr.bf16.mxu0 0
        %2044 = vmatpush1.bf16.msra.mxu0 0
        %2045 = vmatprep.subr.bf16.mxu0 0
        %2046 = vmatpush1.bf16.msra.mxu0 0
        %2047 = vmatprep.subr.bf16.mxu0 0
        %2048 = vmatpush1.bf16.msra.mxu0 0
        %2049 = vmatprep.subr.bf16.mxu0 0
        %2050 = vmatpush1.bf16.msra.mxu0 0
        %2051 = vmatprep.subr.bf16.mxu0 0
        %2052 = vmatpush1.bf16.msra.mxu0 0
        %2053 = vmatprep.subr.bf16.mxu0 0
        %2054 = vmatpush1.bf16.msra.mxu0 0
        %2055 = vmatprep.subr.bf16.mxu0 0
        %2056 = vmatpush1.bf16.msra.mxu0 0
        %2057 = vmatprep.subr.bf16.mxu0 0
        %2058 = vmatpush1.bf16.msra.mxu0 0
        %2059 = vmatprep.subr.bf16.mxu0 0
        %2060 = vmatpush1.bf16.msra.mxu0 0
        %2061 = vmatprep.subr.bf16.mxu0 0
        %2062 = vmatpush1.bf16.msra.mxu0 0
        %2063 = vmatprep.subr.bf16.mxu0 0
        %2064 = vmatpush1.bf16.msra.mxu0 0
        %2065 = vmatprep.subr.bf16.mxu0 0
        %2066 = vmatpush1.bf16.msra.mxu0 0
        %2067 = vmatprep.subr.bf16.mxu0 0
        %2068 = vmatpush1.bf16.msra.mxu0 0
        %2069 = vmatprep.subr.bf16.mxu0 0
        %2070 = vmatpush1.bf16.msra.mxu0 0
        %2071 = vmatprep.mubr.bf16.mxu0 0
        %2072 = vmatmul.mubr.bf16.gmra.mrb[0].mxu0 %v2034
        %v2073 = vpop.f32.mrb[0].mxu0
        %v2074 = vadd.f32 0.0, %v2073
        %v2075 = vpop.f32.mrb[0].mxu0
        %v2076 = vpop.f32.mrb[0].mxu0
        %v2077 = vpop.f32.mrb[0].mxu0
        %2078 = vdwg.mxu0
        %v2080 = vsel %vm848, %v1985, 0
        %v2083 = vsel %vm852, %v1753, 0
        %2085 = vmatprep.subr.bf16.mxu0 0
        %2086 = vmatpush1.bf16.msra.mxu0 %v2083
        %2087 = vmatprep.subr.bf16.mxu0 0
        %2088 = vmatpush1.bf16.msra.mxu0 0
        %2089 = vmatprep.subr.bf16.mxu0 0
        %2090 = vmatpush1.bf16.msra.mxu0 0
        %2091 = vmatprep.subr.bf16.mxu0 0
        %2092 = vmatpush1.bf16.msra.mxu0 0
        %2093 = vmatprep.subr.bf16.mxu0 0
        %2094 = vmatpush1.bf16.msra.mxu0 0
        %2095 = vmatprep.subr.bf16.mxu0 0
        %2096 = vmatpush1.bf16.msra.mxu0 0
        %2097 = vmatprep.subr.bf16.mxu0 0
        %2098 = vmatpush1.bf16.msra.mxu0 0
        %2099 = vmatprep.subr.bf16.mxu0 0
        %2100 = vmatpush1.bf16.msra.mxu0 0
        %2101 = vmatprep.subr.bf16.mxu0 0
        %2102 = vmatpush1.bf16.msra.mxu0 0
        %2103 = vmatprep.subr.bf16.mxu0 0
        %2104 = vmatpush1.bf16.msra.mxu0 0
        %2105 = vmatprep.subr.bf16.mxu0 0
        %2106 = vmatpush1.bf16.msra.mxu0 0
        %2107 = vmatprep.subr.bf16.mxu0 0
        %2108 = vmatpush1.bf16.msra.mxu0 0
        %2109 = vmatprep.subr.bf16.mxu0 0
        %2110 = vmatpush1.bf16.msra.mxu0 0
        %2111 = vmatprep.subr.bf16.mxu0 0
        %2112 = vmatpush1.bf16.msra.mxu0 0
        %2113 = vmatprep.subr.bf16.mxu0 0
        %2114 = vmatpush1.bf16.msra.mxu0 0
        %2115 = vmatprep.subr.bf16.mxu0 0
        %2116 = vmatpush1.bf16.msra.mxu0 0
        %2117 = vmatprep.mubr.bf16.mxu0 0
        %2118 = vmatmul.mubr.bf16.gmra.mrb[0].mxu0 %v2080
        %v2119 = vpop.f32.mrb[0].mxu0
        %v2120 = vadd.f32 0.0, %v2119
        %v2121 = vpop.f32.mrb[0].mxu0
        %v2122 = vpop.f32.mrb[0].mxu0
        %v2123 = vpop.f32.mrb[0].mxu0
        %2124 = vdwg.mxu0
        %v2126 = vsel %vm848, %v1986, 0
        %v2129 = vsel %vm852, %v1756, 0
        %2131 = vmatprep.subr.bf16.mxu0 0
        %2132 = vmatpush1.bf16.msra.mxu0 %v2129
        %2133 = vmatprep.subr.bf16.mxu0 0
        %2134 = vmatpush1.bf16.msra.mxu0 0
        %2135 = vmatprep.subr.bf16.mxu0 0
        %2136 = vmatpush1.bf16.msra.mxu0 0
        %2137 = vmatprep.subr.bf16.mxu0 0
        %2138 = vmatpush1.bf16.msra.mxu0 0
        %2139 = vmatprep.subr.bf16.mxu0 0
        %2140 = vmatpush1.bf16.msra.mxu0 0
        %2141 = vmatprep.subr.bf16.mxu0 0
        %2142 = vmatpush1.bf16.msra.mxu0 0
        %2143 = vmatprep.subr.bf16.mxu0 0
        %2144 = vmatpush1.bf16.msra.mxu0 0
        %2145 = vmatprep.subr.bf16.mxu0 0
        %2146 = vmatpush1.bf16.msra.mxu0 0
        %2147 = vmatprep.subr.bf16.mxu0 0
        %2148 = vmatpush1.bf16.msra.mxu0 0
        %2149 = vmatprep.subr.bf16.mxu0 0
        %2150 = vmatpush1.bf16.msra.mxu0 0
        %2151 = vmatprep.subr.bf16.mxu0 0
        %2152 = vmatpush1.bf16.msra.mxu0 0
        %2153 = vmatprep.subr.bf16.mxu0 0
        %2154 = vmatpush1.bf16.msra.mxu0 0
        %2155 = vmatprep.subr.bf16.mxu0 0
        %2156 = vmatpush1.bf16.msra.mxu0 0
        %2157 = vmatprep.subr.bf16.mxu0 0
        %2158 = vmatpush1.bf16.msra.mxu0 0
        %2159 = vmatprep.subr.bf16.mxu0 0
        %2160 = vmatpush1.bf16.msra.mxu0 0
        %2161 = vmatprep.subr.bf16.mxu0 0
        %2162 = vmatpush1.bf16.msra.mxu0 0
        %2163 = vmatprep.mubr.bf16.mxu0 0
        %2164 = vmatmul.mubr.bf16.gmra.mrb[0].mxu0 %v2126
        %v2165 = vpop.f32.mrb[0].mxu0
        %v2166 = vadd.f32 0.0, %v2165
        %v2167 = vpop.f32.mrb[0].mxu0
        %v2168 = vpop.f32.mrb[0].mxu0
        %v2169 = vpop.f32.mrb[0].mxu0
        %2170 = vdwg.mxu0
        %v2171 = vrcp.pop %v1973
        %v2172 = vrcp.pop %v1976
        %v2173 = vrcp.pop %v1979
        %v2174 = vrcp.pop %v1982
        %v2175 = vmul.f32 %v2028, %v2171
        %v2176 = vmul.f32 %v2074, %v2172
        %v2177 = vmul.f32 %v2120, %v2173
        %v2178 = vmul.f32 %v2166, %v2174
        %v2179 = vcombine.low %v2175, %v2177
        %v2180 = vcombine.high %v2175, %v2177
        %v2182 = vunpack.c.l.s4 1983009808
        %v2183 = vunpack.c.0.s8 %v2182
        %v2184 = vlaneseq
        %v2185 = vshrl.u32 %v2184, 7
        %v2186 = vsub.s32 %v2183, %v2185
        %v2187 = vrot.slane %v2179, %v2186
        %v2189 = vunpack.c.l.s4 1983009808
        %v2190 = vunpack.c.0.s8 %v2189
        %v2191 = vlaneseq
        %v2192 = vshrl.u32 %v2191, 7
        %v2193 = vsub.s32 %v2190, %v2192
        %v2194 = vrot.slane %v2180, %v2193
        %v2195 = vcombine.low %v2176, %v2178
        %v2196 = vcombine.high %v2176, %v2178
        %v2198 = vunpack.c.l.s4 1983009808
        %v2199 = vunpack.c.0.s8 %v2198
        %v2200 = vlaneseq
        %v2201 = vshrl.u32 %v2200, 7
        %v2202 = vsub.s32 %v2199, %v2201
        %v2203 = vrot.slane %v2195, %v2202
        %v2205 = vunpack.c.l.s4 1983009808
        %v2206 = vunpack.c.0.s8 %v2205
        %v2207 = vlaneseq
        %v2208 = vshrl.u32 %v2207, 7
        %v2209 = vsub.s32 %v2206, %v2208
        %v2210 = vrot.slane %v2196, %v2209
        %v2211 = vcombine.low %v2187, %v2203
        %v2212 = vcombine.high %v2187, %v2203
        %v2214 = vunpack.c.l.s4 1934713408
        %v2215 = vunpack.c.0.s8 %v2214
        %v2216 = vlaneseq
        %v2217 = vshrl.u32 %v2216, 7
        %v2218 = vsub.s32 %v2215, %v2217
        %v2219 = vrot.slane %v2211, %v2218
        %v2221 = vunpack.c.l.s4 1934713408
        %v2222 = vunpack.c.0.s8 %v2221
        %v2223 = vlaneseq
        %v2224 = vshrl.u32 %v2223, 7
        %v2225 = vsub.s32 %v2222, %v2224
        %v2226 = vrot.slane %v2212, %v2225
        %v2227 = vcombine.low %v2194, %v2210
        %v2228 = vcombine.high %v2194, %v2210
        %v2230 = vunpack.c.l.s4 1934713408
        %v2231 = vunpack.c.0.s8 %v2230
        %v2232 = vlaneseq
        %v2233 = vshrl.u32 %v2232, 7
        %v2234 = vsub.s32 %v2231, %v2233
        %v2235 = vrot.slane %v2227, %v2234
        %v2237 = vunpack.c.l.s4 1934713408
        %v2238 = vunpack.c.0.s8 %v2237
        %v2239 = vlaneseq
        %v2240 = vshrl.u32 %v2239, 7
        %v2241 = vsub.s32 %v2238, %v2240
        %v2242 = vrot.slane %v2228, %v2241
        %v2243 = vcombine.high %v2219, 0.0
        %v2244 = vcombine.high %v2226, 0.0
        %v2245 = vcombine.high %v2235, 0.0
        %v2246 = vcombine.high %v2242, 0.0
        %v2247 = vcombine.low %v2219, %v2226
        %v2249 = vunpack.c.l.s4 1983009808
        %v2250 = vunpack.c.0.s8 %v2249
        %v2251 = vlaneseq
        %v2252 = vshrl.u32 %v2251, 7
        %v2253 = vsub.s32 %v2250, %v2252
        %v2254 = vrot.slane %v2247, %v2253
        %v2255 = vcombine.low %v2243, %v2244
        %v2257 = vunpack.c.l.s4 1983009808
        %v2258 = vunpack.c.0.s8 %v2257
        %v2259 = vlaneseq
        %v2260 = vshrl.u32 %v2259, 7
        %v2261 = vsub.s32 %v2258, %v2260
        %v2262 = vrot.slane %v2255, %v2261
        %v2263 = vcombine.low %v2235, %v2242
        %v2265 = vunpack.c.l.s4 1983009808
        %v2266 = vunpack.c.0.s8 %v2265
        %v2267 = vlaneseq
        %v2268 = vshrl.u32 %v2267, 7
        %v2269 = vsub.s32 %v2266, %v2268
        %v2270 = vrot.slane %v2263, %v2269
        %v2271 = vcombine.low %v2245, %v2246
        %v2273 = vunpack.c.l.s4 1983009808
        %v2274 = vunpack.c.0.s8 %v2273
        %v2275 = vlaneseq
        %v2276 = vshrl.u32 %v2275, 7
        %v2277 = vsub.s32 %v2274, %v2276
        %v2278 = vrot.slane %v2271, %v2277
        %v2279 = vcombine.low %v2254, %v2262
        %v2280 = vcombine.high %v2254, %v2262
        %v2282 = vunpack.c.l.s4 1934713408
        %v2283 = vunpack.c.0.s8 %v2282
        %v2284 = vlaneseq
        %v2285 = vshrl.u32 %v2284, 7
        %v2286 = vsub.s32 %v2283, %v2285
        %v2287 = vrot.slane %v2279, %v2286
        %v2289 = vunpack.c.l.s4 1934713408
        %v2290 = vunpack.c.0.s8 %v2289
        %v2291 = vlaneseq
        %v2292 = vshrl.u32 %v2291, 7
        %v2293 = vsub.s32 %v2290, %v2292
        %v2294 = vrot.slane %v2280, %v2293
        %v2295 = vcombine.low %v2270, %v2278
        %v2296 = vcombine.high %v2270, %v2278
        %v2298 = vunpack.c.l.s4 1934713408
        %v2299 = vunpack.c.0.s8 %v2298
        %v2300 = vlaneseq
        %v2301 = vshrl.u32 %v2300, 7
        %v2302 = vsub.s32 %v2299, %v2301
        %v2303 = vrot.slane %v2295, %v2302
        %v2305 = vunpack.c.l.s4 1934713408
        %v2306 = vunpack.c.0.s8 %v2305
        %v2307 = vlaneseq
        %v2308 = vshrl.u32 %v2307, 7
        %v2309 = vsub.s32 %v2306, %v2308
        %v2310 = vrot.slane %v2296, %v2309
        %v2311 = vcombine.low %v2287, %v2303
        %v2312 = vcombine.high %v2287, %v2303
        %v2313 = vcombine.low %v2294, %v2310
        %v2314 = vcombine.high %v2294, %v2310
        %2316 = vrot.lane.b32.xlu0 %v2312, 8
        %v2317 = vpop.permute.xlu0 %2316
        %2320 = vrot.lane.b32.xlu0 %v2313, 16
        %v2321 = vpop.permute.xlu0 %2320
        %2324 = vrot.lane.b32.xlu0 %v2314, 24
        %v2325 = vpop.permute.xlu0 %2324
        %v2327 = vsel %vm848, %v2311, %v2317
        %vm2328 = vcmask 130048
        %v2329 = vsel %vm2328, %v2327, %v2321
        %vm2330 = vcmask 195584
        %v2331 = vsel %vm2330, %v2329, %v2325
        %v2332 = vlaneseq
        %v2333 = vshrl.u32 %v2332, 7
        %v2334 = vsub.s32 0, %v2333
        %v2335 = vrot.slane %v1229, %v2334
        %2337 = vrot.lane.b32.xlu0 %v1227, 96
        %v2338 = vpop.permute.xlu0 %2337
        %v2340 = vmul.f32 %v2335, %v2338
        %v2341 = vmul.f32 %v2335, %v1227
        %v2342 = vmul.f32 %v2340, 0.35355338
        %v2343 = vpack.c.bf16 %v2342, %v2342
        %2345 = vrot.lane.b32.xlu0 %v2343, 120
        %v2346 = vpop.permute.xlu0 %2345
        %2347 = vrot.lane.b32.xlu0 %v2343, 112
        %v2348 = vpop.permute.xlu0 %2347
        %2349 = vrot.lane.b32.xlu0 %v2343, 104
        %v2350 = vpop.permute.xlu0 %2349
        %v2352 = vunpack.c.l.s4 1983009808
        %v2353 = vunpack.c.0.s8 %v2352
        %v2354 = vlaneseq
        %v2355 = vshrl.u32 %v2354, 7
        %v2356 = vsub.s32 %v2353, %v2355
        %v2357 = vrot.slane %v2343, %v2356
        %v2360 = vunpack.c.l.s4 1983009808
        %v2361 = vunpack.c.0.s8 %v2360
        %v2362 = vlaneseq
        %v2363 = vshrl.u32 %v2362, 7
        %v2364 = vsub.s32 %v2361, %v2363
        %v2365 = vrot.slane %v2348, %v2364
        %v2366 = vcombine.low %v2357, %v2365
        %v2367 = vcombine.high %v2357, %v2365
        %v2369 = vunpack.c.l.s4 1934713408
        %v2370 = vunpack.c.0.s8 %v2369
        %v2371 = vlaneseq
        %v2372 = vshrl.u32 %v2371, 7
        %v2373 = vsub.s32 %v2370, %v2372
        %v2374 = vrot.slane %v2366, %v2373
        %v2376 = vunpack.c.l.s4 1934713408
        %v2377 = vunpack.c.0.s8 %v2376
        %v2378 = vlaneseq
        %v2379 = vshrl.u32 %v2378, 7
        %v2380 = vsub.s32 %v2377, %v2379
        %v2381 = vrot.slane %v2367, %v2380
        %v2382 = vcombine.high %v2374, 0
        %v2383 = vcombine.high %v2381, 0
        %v2386 = vunpack.c.l.s4 1983009808
        %v2387 = vunpack.c.0.s8 %v2386
        %v2388 = vlaneseq
        %v2389 = vshrl.u32 %v2388, 7
        %v2390 = vsub.s32 %v2387, %v2389
        %v2391 = vrot.slane %v2346, %v2390
        %v2394 = vunpack.c.l.s4 1983009808
        %v2395 = vunpack.c.0.s8 %v2394
        %v2396 = vlaneseq
        %v2397 = vshrl.u32 %v2396, 7
        %v2398 = vsub.s32 %v2395, %v2397
        %v2399 = vrot.slane %v2350, %v2398
        %v2400 = vcombine.low %v2391, %v2399
        %v2401 = vcombine.high %v2391, %v2399
        %v2403 = vunpack.c.l.s4 1934713408
        %v2404 = vunpack.c.0.s8 %v2403
        %v2405 = vlaneseq
        %v2406 = vshrl.u32 %v2405, 7
        %v2407 = vsub.s32 %v2404, %v2406
        %v2408 = vrot.slane %v2400, %v2407
        %v2410 = vunpack.c.l.s4 1934713408
        %v2411 = vunpack.c.0.s8 %v2410
        %v2412 = vlaneseq
        %v2413 = vshrl.u32 %v2412, 7
        %v2414 = vsub.s32 %v2411, %v2413
        %v2415 = vrot.slane %v2401, %v2414
        %v2416 = vcombine.high %v2408, 0
        %v2417 = vcombine.high %v2415, 0
        %v2420 = vpack.i.b16 %v2408, %v2374
        %v2422 = vshrl.u32 %v2374, 16
        %v2423 = vshrl.u32 %v2408, 16
        %v2424 = vpack.i.b16 %v2423, %v2422
        %v2428 = vpack.i.b16 %v2416, %v2382
        %v2430 = vshrl.u32 %v2382, 16
        %v2431 = vshrl.u32 %v2416, 16
        %v2432 = vpack.i.b16 %v2431, %v2430
        %v2436 = vpack.i.b16 %v2415, %v2381
        %v2438 = vshrl.u32 %v2381, 16
        %v2439 = vshrl.u32 %v2415, 16
        %v2440 = vpack.i.b16 %v2439, %v2438
        %v2444 = vpack.i.b16 %v2417, %v2383
        %v2446 = vshrl.u32 %v2383, 16
        %v2447 = vshrl.u32 %v2417, 16
        %v2448 = vpack.i.b16 %v2447, %v2446
        %v2450 = vcombine.low %v2420, %v2436
        %v2452 = vunpack.c.l.s4 1983009808
        %v2453 = vunpack.c.0.s8 %v2452
        %v2454 = vlaneseq
        %v2455 = vshrl.u32 %v2454, 7
        %v2456 = vsub.s32 %v2453, %v2455
        %v2457 = vrot.slane %v2450, %v2456
        %v2458 = vcombine.low %v2428, %v2444
        %v2460 = vunpack.c.l.s4 1983009808
        %v2461 = vunpack.c.0.s8 %v2460
        %v2462 = vlaneseq
        %v2463 = vshrl.u32 %v2462, 7
        %v2464 = vsub.s32 %v2461, %v2463
        %v2465 = vrot.slane %v2458, %v2464
        %v2466 = vcombine.low %v2457, %v2465
        %v2468 = vunpack.c.l.s4 1934713408
        %v2469 = vunpack.c.0.s8 %v2468
        %v2470 = vlaneseq
        %v2471 = vshrl.u32 %v2470, 7
        %v2472 = vsub.s32 %v2469, %v2471
        %v2473 = vrot.slane %v2466, %v2472
        %v2474 = vcombine.high %v2473, 0
        %v2475 = vcombine.low %v2424, %v2440
        %v2477 = vunpack.c.l.s4 1983009808
        %v2478 = vunpack.c.0.s8 %v2477
        %v2479 = vlaneseq
        %v2480 = vshrl.u32 %v2479, 7
        %v2481 = vsub.s32 %v2478, %v2480
        %v2482 = vrot.slane %v2475, %v2481
        %v2483 = vcombine.low %v2432, %v2448
        %v2485 = vunpack.c.l.s4 1983009808
        %v2486 = vunpack.c.0.s8 %v2485
        %v2487 = vlaneseq
        %v2488 = vshrl.u32 %v2487, 7
        %v2489 = vsub.s32 %v2486, %v2488
        %v2490 = vrot.slane %v2483, %v2489
        %v2491 = vcombine.low %v2482, %v2490
        %v2493 = vunpack.c.l.s4 1934713408
        %v2494 = vunpack.c.0.s8 %v2493
        %v2495 = vlaneseq
        %v2496 = vshrl.u32 %v2495, 7
        %v2497 = vsub.s32 %v2494, %v2496
        %v2498 = vrot.slane %v2491, %v2497
        %v2499 = vcombine.high %v2498, 0
        %v2502 = vpack.i.b16 %v2498, %v2473
        %v2503 = vshrl.u32 %v2473, 16
        %v2504 = vshrl.u32 %v2498, 16
        %v2505 = vpack.i.b16 %v2504, %v2503
        %v2508 = vpack.i.b16 %v2499, %v2474
        %v2509 = vshrl.u32 %v2474, 16
        %v2510 = vshrl.u32 %v2499, 16
        %v2511 = vpack.i.b16 %v2510, %v2509
        %v2512 = vpack.c.bf16 %v2341, %v2341
        %2514 = vrot.lane.b32.xlu0 %v2512, 120
        %v2515 = vpop.permute.xlu0 %2514
        %2516 = vrot.lane.b32.xlu0 %v2512, 112
        %v2517 = vpop.permute.xlu0 %2516
        %2518 = vrot.lane.b32.xlu0 %v2512, 104
        %v2519 = vpop.permute.xlu0 %2518
        %v2521 = vunpack.c.l.s4 1983009808
        %v2522 = vunpack.c.0.s8 %v2521
        %v2523 = vlaneseq
        %v2524 = vshrl.u32 %v2523, 7
        %v2525 = vsub.s32 %v2522, %v2524
        %v2526 = vrot.slane %v2512, %v2525
        %v2529 = vunpack.c.l.s4 1983009808
        %v2530 = vunpack.c.0.s8 %v2529
        %v2531 = vlaneseq
        %v2532 = vshrl.u32 %v2531, 7
        %v2533 = vsub.s32 %v2530, %v2532
        %v2534 = vrot.slane %v2517, %v2533
        %v2535 = vcombine.low %v2526, %v2534
        %v2536 = vcombine.high %v2526, %v2534
        %v2538 = vunpack.c.l.s4 1934713408
        %v2539 = vunpack.c.0.s8 %v2538
        %v2540 = vlaneseq
        %v2541 = vshrl.u32 %v2540, 7
        %v2542 = vsub.s32 %v2539, %v2541
        %v2543 = vrot.slane %v2535, %v2542
        %v2545 = vunpack.c.l.s4 1934713408
        %v2546 = vunpack.c.0.s8 %v2545
        %v2547 = vlaneseq
        %v2548 = vshrl.u32 %v2547, 7
        %v2549 = vsub.s32 %v2546, %v2548
        %v2550 = vrot.slane %v2536, %v2549
        %v2551 = vcombine.high %v2543, 0
        %v2552 = vcombine.high %v2550, 0
        %v2555 = vunpack.c.l.s4 1983009808
        %v2556 = vunpack.c.0.s8 %v2555
        %v2557 = vlaneseq
        %v2558 = vshrl.u32 %v2557, 7
        %v2559 = vsub.s32 %v2556, %v2558
        %v2560 = vrot.slane %v2515, %v2559
        %v2563 = vunpack.c.l.s4 1983009808
        %v2564 = vunpack.c.0.s8 %v2563
        %v2565 = vlaneseq
        %v2566 = vshrl.u32 %v2565, 7
        %v2567 = vsub.s32 %v2564, %v2566
        %v2568 = vrot.slane %v2519, %v2567
        %v2569 = vcombine.low %v2560, %v2568
        %v2570 = vcombine.high %v2560, %v2568
        %v2572 = vunpack.c.l.s4 1934713408
        %v2573 = vunpack.c.0.s8 %v2572
        %v2574 = vlaneseq
        %v2575 = vshrl.u32 %v2574, 7
        %v2576 = vsub.s32 %v2573, %v2575
        %v2577 = vrot.slane %v2569, %v2576
        %v2579 = vunpack.c.l.s4 1934713408
        %v2580 = vunpack.c.0.s8 %v2579
        %v2581 = vlaneseq
        %v2582 = vshrl.u32 %v2581, 7
        %v2583 = vsub.s32 %v2580, %v2582
        %v2584 = vrot.slane %v2570, %v2583
        %v2585 = vcombine.high %v2577, 0
        %v2586 = vcombine.high %v2584, 0
        %v2589 = vpack.i.b16 %v2577, %v2543
        %v2591 = vshrl.u32 %v2543, 16
        %v2592 = vshrl.u32 %v2577, 16
        %v2593 = vpack.i.b16 %v2592, %v2591
        %v2597 = vpack.i.b16 %v2585, %v2551
        %v2599 = vshrl.u32 %v2551, 16
        %v2600 = vshrl.u32 %v2585, 16
        %v2601 = vpack.i.b16 %v2600, %v2599
        %v2605 = vpack.i.b16 %v2584, %v2550
        %v2607 = vshrl.u32 %v2550, 16
        %v2608 = vshrl.u32 %v2584, 16
        %v2609 = vpack.i.b16 %v2608, %v2607
        %v2613 = vpack.i.b16 %v2586, %v2552
        %v2615 = vshrl.u32 %v2552, 16
        %v2616 = vshrl.u32 %v2586, 16
        %v2617 = vpack.i.b16 %v2616, %v2615
        %v2619 = vcombine.low %v2589, %v2605
        %v2621 = vunpack.c.l.s4 1983009808
        %v2622 = vunpack.c.0.s8 %v2621
        %v2623 = vlaneseq
        %v2624 = vshrl.u32 %v2623, 7
        %v2625 = vsub.s32 %v2622, %v2624
        %v2626 = vrot.slane %v2619, %v2625
        %v2627 = vcombine.low %v2597, %v2613
        %v2629 = vunpack.c.l.s4 1983009808
        %v2630 = vunpack.c.0.s8 %v2629
        %v2631 = vlaneseq
        %v2632 = vshrl.u32 %v2631, 7
        %v2633 = vsub.s32 %v2630, %v2632
        %v2634 = vrot.slane %v2627, %v2633
        %v2635 = vcombine.low %v2626, %v2634
        %v2637 = vunpack.c.l.s4 1934713408
        %v2638 = vunpack.c.0.s8 %v2637
        %v2639 = vlaneseq
        %v2640 = vshrl.u32 %v2639, 7
        %v2641 = vsub.s32 %v2638, %v2640
        %v2642 = vrot.slane %v2635, %v2641
        %v2643 = vcombine.high %v2642, 0
        %v2644 = vcombine.low %v2593, %v2609
        %v2646 = vunpack.c.l.s4 1983009808
        %v2647 = vunpack.c.0.s8 %v2646
        %v2648 = vlaneseq
        %v2649 = vshrl.u32 %v2648, 7
        %v2650 = vsub.s32 %v2647, %v2649
        %v2651 = vrot.slane %v2644, %v2650
        %v2652 = vcombine.low %v2601, %v2617
        %v2654 = vunpack.c.l.s4 1983009808
        %v2655 = vunpack.c.0.s8 %v2654
        %v2656 = vlaneseq
        %v2657 = vshrl.u32 %v2656, 7
        %v2658 = vsub.s32 %v2655, %v2657
        %v2659 = vrot.slane %v2652, %v2658
        %v2660 = vcombine.low %v2651, %v2659
        %v2662 = vunpack.c.l.s4 1934713408
        %v2663 = vunpack.c.0.s8 %v2662
        %v2664 = vlaneseq
        %v2665 = vshrl.u32 %v2664, 7
        %v2666 = vsub.s32 %v2663, %v2665
        %v2667 = vrot.slane %v2660, %v2666
        %v2668 = vcombine.high %v2667, 0
        %v2671 = vpack.i.b16 %v2667, %v2642
        %v2672 = vshrl.u32 %v2642, 16
        %v2673 = vshrl.u32 %v2667, 16
        %v2674 = vpack.i.b16 %v2673, %v2672
        %v2677 = vpack.i.b16 %v2668, %v2643
        %v2678 = vshrl.u32 %v2643, 16
        %v2679 = vshrl.u32 %v2668, 16
        %v2680 = vpack.i.b16 %v2679, %v2678
        %v2681 = vpack.c.bf16 %v1227, %v1227
        %2683 = vrot.lane.b32.xlu0 %v2681, 120
        %v2684 = vpop.permute.xlu0 %2683
        %2685 = vrot.lane.b32.xlu0 %v2681, 112
        %v2686 = vpop.permute.xlu0 %2685
        %2687 = vrot.lane.b32.xlu0 %v2681, 104
        %v2688 = vpop.permute.xlu0 %2687
        %2689 = vrot.lane.b32.xlu0 %v2681, 64
        %v2690 = vpop.permute.xlu0 %2689
        %2691 = vrot.lane.b32.xlu0 %v2684, 64
        %v2692 = vpop.permute.xlu0 %2691
        %2693 = vrot.lane.b32.xlu0 %v2686, 64
        %v2694 = vpop.permute.xlu0 %2693
        %2695 = vrot.lane.b32.xlu0 %v2688, 64
        %v2696 = vpop.permute.xlu0 %2695
        %v2699 = vunpack.c.l.s4 1983009808
        %v2700 = vunpack.c.0.s8 %v2699
        %v2701 = vlaneseq
        %v2702 = vshrl.u32 %v2701, 7
        %v2703 = vsub.s32 %v2700, %v2702
        %v2704 = vrot.slane %v2690, %v2703
        %v2707 = vunpack.c.l.s4 1983009808
        %v2708 = vunpack.c.0.s8 %v2707
        %v2709 = vlaneseq
        %v2710 = vshrl.u32 %v2709, 7
        %v2711 = vsub.s32 %v2708, %v2710
        %v2712 = vrot.slane %v2694, %v2711
        %v2713 = vcombine.low %v2704, %v2712
        %v2714 = vcombine.high %v2704, %v2712
        %v2716 = vunpack.c.l.s4 1934713408
        %v2717 = vunpack.c.0.s8 %v2716
        %v2718 = vlaneseq
        %v2719 = vshrl.u32 %v2718, 7
        %v2720 = vsub.s32 %v2717, %v2719
        %v2721 = vrot.slane %v2713, %v2720
        %v2723 = vunpack.c.l.s4 1934713408
        %v2724 = vunpack.c.0.s8 %v2723
        %v2725 = vlaneseq
        %v2726 = vshrl.u32 %v2725, 7
        %v2727 = vsub.s32 %v2724, %v2726
        %v2728 = vrot.slane %v2714, %v2727
        %v2729 = vcombine.high %v2721, 0
        %v2730 = vcombine.high %v2728, 0
        %v2733 = vunpack.c.l.s4 1983009808
        %v2734 = vunpack.c.0.s8 %v2733
        %v2735 = vlaneseq
        %v2736 = vshrl.u32 %v2735, 7
        %v2737 = vsub.s32 %v2734, %v2736
        %v2738 = vrot.slane %v2692, %v2737
        %v2741 = vunpack.c.l.s4 1983009808
        %v2742 = vunpack.c.0.s8 %v2741
        %v2743 = vlaneseq
        %v2744 = vshrl.u32 %v2743, 7
        %v2745 = vsub.s32 %v2742, %v2744
        %v2746 = vrot.slane %v2696, %v2745
        %v2747 = vcombine.low %v2738, %v2746
        %v2748 = vcombine.high %v2738, %v2746
        %v2750 = vunpack.c.l.s4 1934713408
        %v2751 = vunpack.c.0.s8 %v2750
        %v2752 = vlaneseq
        %v2753 = vshrl.u32 %v2752, 7
        %v2754 = vsub.s32 %v2751, %v2753
        %v2755 = vrot.slane %v2747, %v2754
        %v2757 = vunpack.c.l.s4 1934713408
        %v2758 = vunpack.c.0.s8 %v2757
        %v2759 = vlaneseq
        %v2760 = vshrl.u32 %v2759, 7
        %v2761 = vsub.s32 %v2758, %v2760
        %v2762 = vrot.slane %v2748, %v2761
        %v2763 = vcombine.high %v2755, 0
        %v2764 = vcombine.high %v2762, 0
        %v2767 = vpack.i.b16 %v2755, %v2721
        %v2769 = vshrl.u32 %v2721, 16
        %v2770 = vshrl.u32 %v2755, 16
        %v2771 = vpack.i.b16 %v2770, %v2769
        %v2775 = vpack.i.b16 %v2763, %v2729
        %v2777 = vshrl.u32 %v2729, 16
        %v2778 = vshrl.u32 %v2763, 16
        %v2779 = vpack.i.b16 %v2778, %v2777
        %v2783 = vpack.i.b16 %v2762, %v2728
        %v2785 = vshrl.u32 %v2728, 16
        %v2786 = vshrl.u32 %v2762, 16
        %v2787 = vpack.i.b16 %v2786, %v2785
        %v2791 = vpack.i.b16 %v2764, %v2730
        %v2793 = vshrl.u32 %v2730, 16
        %v2794 = vshrl.u32 %v2764, 16
        %v2795 = vpack.i.b16 %v2794, %v2793
        %v2797 = vcombine.low %v2767, %v2783
        %v2799 = vunpack.c.l.s4 1983009808
        %v2800 = vunpack.c.0.s8 %v2799
        %v2801 = vlaneseq
        %v2802 = vshrl.u32 %v2801, 7
        %v2803 = vsub.s32 %v2800, %v2802
        %v2804 = vrot.slane %v2797, %v2803
        %v2805 = vcombine.low %v2775, %v2791
        %v2807 = vunpack.c.l.s4 1983009808
        %v2808 = vunpack.c.0.s8 %v2807
        %v2809 = vlaneseq
        %v2810 = vshrl.u32 %v2809, 7
        %v2811 = vsub.s32 %v2808, %v2810
        %v2812 = vrot.slane %v2805, %v2811
        %v2813 = vcombine.low %v2804, %v2812
        %v2815 = vunpack.c.l.s4 1934713408
        %v2816 = vunpack.c.0.s8 %v2815
        %v2817 = vlaneseq
        %v2818 = vshrl.u32 %v2817, 7
        %v2819 = vsub.s32 %v2816, %v2818
        %v2820 = vrot.slane %v2813, %v2819
        %v2821 = vcombine.high %v2820, 0
        %v2822 = vcombine.low %v2771, %v2787
        %v2824 = vunpack.c.l.s4 1983009808
        %v2825 = vunpack.c.0.s8 %v2824
        %v2826 = vlaneseq
        %v2827 = vshrl.u32 %v2826, 7
        %v2828 = vsub.s32 %v2825, %v2827
        %v2829 = vrot.slane %v2822, %v2828
        %v2830 = vcombine.low %v2779, %v2795
        %v2832 = vunpack.c.l.s4 1983009808
        %v2833 = vunpack.c.0.s8 %v2832
        %v2834 = vlaneseq
        %v2835 = vshrl.u32 %v2834, 7
        %v2836 = vsub.s32 %v2833, %v2835
        %v2837 = vrot.slane %v2830, %v2836
        %v2838 = vcombine.low %v2829, %v2837
        %v2840 = vunpack.c.l.s4 1934713408
        %v2841 = vunpack.c.0.s8 %v2840
        %v2842 = vlaneseq
        %v2843 = vshrl.u32 %v2842, 7
        %v2844 = vsub.s32 %v2841, %v2843
        %v2845 = vrot.slane %v2838, %v2844
        %v2846 = vcombine.high %v2845, 0
        %v2849 = vpack.i.b16 %v2845, %v2820
        %v2850 = vshrl.u32 %v2820, 16
        %v2851 = vshrl.u32 %v2845, 16
        %v2852 = vpack.i.b16 %v2851, %v2850
        %v2855 = vpack.i.b16 %v2846, %v2821
        %v2856 = vshrl.u32 %v2821, 16
        %v2857 = vshrl.u32 %v2846, 16
        %v2858 = vpack.i.b16 %v2857, %v2856
        %v2860 = vlaneseq
        %v2861 = vshrl.u32 %v2860, 7
        %v2862 = vsub.s32 0, %v2861
        %v2863 = vrot.slane %v837, %v2862
        %v2866 = vsel %vm848, %v2502, 0
        %v2869 = vsel %vm848, %v2671, 0
        %2871 = vmatprep.subr.bf16.mxu0 0
        %2872 = vmatpush1.bf16.xpose.msra.mxu0 %v2869
        %2873 = vmatprep.subr.bf16.mxu0 0
        %2874 = vmatpush1.bf16.xpose.msra.mxu0 0
        %2875 = vmatprep.subr.bf16.mxu0 0
        %2876 = vmatpush1.bf16.xpose.msra.mxu0 0
        %2877 = vmatprep.subr.bf16.mxu0 0
        %2878 = vmatpush1.bf16.xpose.msra.mxu0 0
        %2879 = vmatprep.subr.bf16.mxu0 0
        %2880 = vmatpush1.bf16.xpose.msra.mxu0 0
        %2881 = vmatprep.subr.bf16.mxu0 0
        %2882 = vmatpush1.bf16.xpose.msra.mxu0 0
        %2883 = vmatprep.subr.bf16.mxu0 0
        %2884 = vmatpush1.bf16.xpose.msra.mxu0 0
        %2885 = vmatprep.subr.bf16.mxu0 0
        %2886 = vmatpush1.bf16.xpose.msra.mxu0 0
        %2887 = vmatprep.subr.bf16.mxu0 0
        %2888 = vmatpush1.bf16.xpose.msra.mxu0 0
        %2889 = vmatprep.subr.bf16.mxu0 0
        %2890 = vmatpush1.bf16.xpose.msra.mxu0 0
        %2891 = vmatprep.subr.bf16.mxu0 0
        %2892 = vmatpush1.bf16.xpose.msra.mxu0 0
        %2893 = vmatprep.subr.bf16.mxu0 0
        %2894 = vmatpush1.bf16.xpose.msra.mxu0 0
        %2895 = vmatprep.subr.bf16.mxu0 0
        %2896 = vmatpush1.bf16.xpose.msra.mxu0 0
        %2897 = vmatprep.subr.bf16.mxu0 0
        %2898 = vmatpush1.bf16.xpose.msra.mxu0 0
        %2899 = vmatprep.subr.bf16.mxu0 0
        %2900 = vmatpush1.bf16.xpose.msra.mxu0 0
        %2901 = vmatprep.subr.bf16.mxu0 0
        %2902 = vmatpush1.bf16.xpose.msra.mxu0 0
        %2903 = vmatprep.mubr.bf16.mxu0 0
        %2904 = vmatmul.mubr.bf16.gmra.mrb[0].mxu0 %v2866
        %v2905 = vpop.f32.mrb[0].mxu0
        %v2906 = vadd.f32 %v2863, %v2905
        %v2907 = vpop.f32.mrb[0].mxu0
        %v2908 = vpop.f32.mrb[0].mxu0
        %v2909 = vpop.f32.mrb[0].mxu0
        %2910 = vdwg.mxu0
        %v2912 = vsel %vm848, %v2505, 0
        %v2915 = vsel %vm848, %v2674, 0
        %2917 = vmatprep.subr.bf16.mxu0 0
        %2918 = vmatpush1.bf16.xpose.msra.mxu0 %v2915
        %2919 = vmatprep.subr.bf16.mxu0 0
        %2920 = vmatpush1.bf16.xpose.msra.mxu0 0
        %2921 = vmatprep.subr.bf16.mxu0 0
        %2922 = vmatpush1.bf16.xpose.msra.mxu0 0
        %2923 = vmatprep.subr.bf16.mxu0 0
        %2924 = vmatpush1.bf16.xpose.msra.mxu0 0
        %2925 = vmatprep.subr.bf16.mxu0 0
        %2926 = vmatpush1.bf16.xpose.msra.mxu0 0
        %2927 = vmatprep.subr.bf16.mxu0 0
        %2928 = vmatpush1.bf16.xpose.msra.mxu0 0
        %2929 = vmatprep.subr.bf16.mxu0 0
        %2930 = vmatpush1.bf16.xpose.msra.mxu0 0
        %2931 = vmatprep.subr.bf16.mxu0 0
        %2932 = vmatpush1.bf16.xpose.msra.mxu0 0
        %2933 = vmatprep.subr.bf16.mxu0 0
        %2934 = vmatpush1.bf16.xpose.msra.mxu0 0
        %2935 = vmatprep.subr.bf16.mxu0 0
        %2936 = vmatpush1.bf16.xpose.msra.mxu0 0
        %2937 = vmatprep.subr.bf16.mxu0 0
        %2938 = vmatpush1.bf16.xpose.msra.mxu0 0
        %2939 = vmatprep.subr.bf16.mxu0 0
        %2940 = vmatpush1.bf16.xpose.msra.mxu0 0
        %2941 = vmatprep.subr.bf16.mxu0 0
        %2942 = vmatpush1.bf16.xpose.msra.mxu0 0
        %2943 = vmatprep.subr.bf16.mxu0 0
        %2944 = vmatpush1.bf16.xpose.msra.mxu0 0
        %2945 = vmatprep.subr.bf16.mxu0 0
        %2946 = vmatpush1.bf16.xpose.msra.mxu0 0
        %2947 = vmatprep.subr.bf16.mxu0 0
        %2948 = vmatpush1.bf16.xpose.msra.mxu0 0
        %2949 = vmatprep.mubr.bf16.mxu0 0
        %2950 = vmatmul.mubr.bf16.gmra.mrb[0].mxu0 %v2912
        %v2951 = vpop.f32.mrb[0].mxu0
        %v2952 = vadd.f32 %v2863, %v2951
        %v2953 = vpop.f32.mrb[0].mxu0
        %v2954 = vpop.f32.mrb[0].mxu0
        %v2955 = vpop.f32.mrb[0].mxu0
        %2956 = vdwg.mxu0
        %v2958 = vsel %vm848, %v2508, 0
        %v2961 = vsel %vm848, %v2677, 0
        %2963 = vmatprep.subr.bf16.mxu0 0
        %2964 = vmatpush1.bf16.xpose.msra.mxu0 %v2961
        %2965 = vmatprep.subr.bf16.mxu0 0
        %2966 = vmatpush1.bf16.xpose.msra.mxu0 0
        %2967 = vmatprep.subr.bf16.mxu0 0
        %2968 = vmatpush1.bf16.xpose.msra.mxu0 0
        %2969 = vmatprep.subr.bf16.mxu0 0
        %2970 = vmatpush1.bf16.xpose.msra.mxu0 0
        %2971 = vmatprep.subr.bf16.mxu0 0
        %2972 = vmatpush1.bf16.xpose.msra.mxu0 0
        %2973 = vmatprep.subr.bf16.mxu0 0
        %2974 = vmatpush1.bf16.xpose.msra.mxu0 0
        %2975 = vmatprep.subr.bf16.mxu0 0
        %2976 = vmatpush1.bf16.xpose.msra.mxu0 0
        %2977 = vmatprep.subr.bf16.mxu0 0
        %2978 = vmatpush1.bf16.xpose.msra.mxu0 0
        %2979 = vmatprep.subr.bf16.mxu0 0
        %2980 = vmatpush1.bf16.xpose.msra.mxu0 0
        %2981 = vmatprep.subr.bf16.mxu0 0
        %2982 = vmatpush1.bf16.xpose.msra.mxu0 0
        %2983 = vmatprep.subr.bf16.mxu0 0
        %2984 = vmatpush1.bf16.xpose.msra.mxu0 0
        %2985 = vmatprep.subr.bf16.mxu0 0
        %2986 = vmatpush1.bf16.xpose.msra.mxu0 0
        %2987 = vmatprep.subr.bf16.mxu0 0
        %2988 = vmatpush1.bf16.xpose.msra.mxu0 0
        %2989 = vmatprep.subr.bf16.mxu0 0
        %2990 = vmatpush1.bf16.xpose.msra.mxu0 0
        %2991 = vmatprep.subr.bf16.mxu0 0
        %2992 = vmatpush1.bf16.xpose.msra.mxu0 0
        %2993 = vmatprep.subr.bf16.mxu0 0
        %2994 = vmatpush1.bf16.xpose.msra.mxu0 0
        %2995 = vmatprep.mubr.bf16.mxu0 0
        %2996 = vmatmul.mubr.bf16.gmra.mrb[0].mxu0 %v2958
        %v2997 = vpop.f32.mrb[0].mxu0
        %v2998 = vadd.f32 %v2863, %v2997
        %v2999 = vpop.f32.mrb[0].mxu0
        %v3000 = vpop.f32.mrb[0].mxu0
        %v3001 = vpop.f32.mrb[0].mxu0
        %3002 = vdwg.mxu0
        %v3004 = vsel %vm848, %v2511, 0
        %v3007 = vsel %vm848, %v2680, 0
        %3009 = vmatprep.subr.bf16.mxu0 0
        %3010 = vmatpush1.bf16.xpose.msra.mxu0 %v3007
        %3011 = vmatprep.subr.bf16.mxu0 0
        %3012 = vmatpush1.bf16.xpose.msra.mxu0 0
        %3013 = vmatprep.subr.bf16.mxu0 0
        %3014 = vmatpush1.bf16.xpose.msra.mxu0 0
        %3015 = vmatprep.subr.bf16.mxu0 0
        %3016 = vmatpush1.bf16.xpose.msra.mxu0 0
        %3017 = vmatprep.subr.bf16.mxu0 0
        %3018 = vmatpush1.bf16.xpose.msra.mxu0 0
        %3019 = vmatprep.subr.bf16.mxu0 0
        %3020 = vmatpush1.bf16.xpose.msra.mxu0 0
        %3021 = vmatprep.subr.bf16.mxu0 0
        %3022 = vmatpush1.bf16.xpose.msra.mxu0 0
        %3023 = vmatprep.subr.bf16.mxu0 0
        %3024 = vmatpush1.bf16.xpose.msra.mxu0 0
        %3025 = vmatprep.subr.bf16.mxu0 0
        %3026 = vmatpush1.bf16.xpose.msra.mxu0 0
        %3027 = vmatprep.subr.bf16.mxu0 0
        %3028 = vmatpush1.bf16.xpose.msra.mxu0 0
        %3029 = vmatprep.subr.bf16.mxu0 0
        %3030 = vmatpush1.bf16.xpose.msra.mxu0 0
        %3031 = vmatprep.subr.bf16.mxu0 0
        %3032 = vmatpush1.bf16.xpose.msra.mxu0 0
        %3033 = vmatprep.subr.bf16.mxu0 0
        %3034 = vmatpush1.bf16.xpose.msra.mxu0 0
        %3035 = vmatprep.subr.bf16.mxu0 0
        %3036 = vmatpush1.bf16.xpose.msra.mxu0 0
        %3037 = vmatprep.subr.bf16.mxu0 0
        %3038 = vmatpush1.bf16.xpose.msra.mxu0 0
        %3039 = vmatprep.subr.bf16.mxu0 0
        %3040 = vmatpush1.bf16.xpose.msra.mxu0 0
        %3041 = vmatprep.mubr.bf16.mxu0 0
        %3042 = vmatmul.mubr.bf16.gmra.mrb[0].mxu0 %v3004
        %v3043 = vpop.f32.mrb[0].mxu0
        %v3044 = vadd.f32 %v2863, %v3043
        %v3045 = vpop.f32.mrb[0].mxu0
        %v3046 = vpop.f32.mrb[0].mxu0
        %v3047 = vpop.f32.mrb[0].mxu0
        %3048 = vdwg.mxu0
        %v3049 = vsel %vm848, %v2906, -inf
        %3050 = vmax.xlane.f32.xlu0 %v3049
        %v3051 = vpop.xlane.xlu0 %3050
        %v3052 = vsel %vm848, %v2952, -inf
        %3053 = vmax.xlane.f32.xlu0 %v3052
        %v3054 = vpop.xlane.xlu0 %3053
        %v3055 = vsel %vm848, %v2998, -inf
        %3056 = vmax.xlane.f32.xlu0 %v3055
        %v3057 = vpop.xlane.xlu0 %3056
        %v3058 = vsel %vm848, %v3044, -inf
        %3059 = vmax.xlane.f32.xlu0 %v3058
        %v3060 = vpop.xlane.xlu0 %3059
        %v3061 = vsub.f32 %v2906, %v3051
        %v3062 = vsub.f32 %v2952, %v3054
        %v3063 = vsub.f32 %v2998, %v3057
        %v3064 = vsub.f32 %v3044, %v3060
        %v3065 = vmul.f32 %v3061, 1.442695
        %v3066 = vpow.pop %v3065
        %v3067 = vmul.f32 %v3062, 1.442695
        %v3068 = vpow.pop %v3067
        %v3069 = vmul.f32 %v3063, 1.442695
        %v3070 = vpow.pop %v3069
        %v3071 = vmul.f32 %v3064, 1.442695
        %v3072 = vpow.pop %v3071
        %v3073 = vsel %vm848, %v3066, 0.0
        %3074 = vadd.xlane.f32.xlu0 %v3073
        %v3075 = vpop.xlane.xlu0 %3074
        %v3076 = vsel %vm848, %v3068, 0.0
        %3077 = vadd.xlane.f32.xlu0 %v3076
        %v3078 = vpop.xlane.xlu0 %3077
        %v3079 = vsel %vm848, %v3070, 0.0
        %3080 = vadd.xlane.f32.xlu0 %v3079
        %v3081 = vpop.xlane.xlu0 %3080
        %v3082 = vsel %vm848, %v3072, 0.0
        %3083 = vadd.xlane.f32.xlu0 %v3082
        %v3084 = vpop.xlane.xlu0 %3083
        %v3085 = vpack.c.bf16 %v3066, %v3066
        %v3086 = vpack.c.bf16 %v3068, %v3068
        %v3087 = vpack.c.bf16 %v3070, %v3070
        %v3088 = vpack.c.bf16 %v3072, %v3072
        %v3090 = vsel %vm848, %v3085, 0
        %v3093 = vsel %vm852, %v2849, 0
        %3095 = vmatprep.subr.bf16.mxu0 0
        %3096 = vmatpush1.bf16.msra.mxu0 %v3093
        %3097 = vmatprep.subr.bf16.mxu0 0
        %3098 = vmatpush1.bf16.msra.mxu0 0
        %3099 = vmatprep.subr.bf16.mxu0 0
        %3100 = vmatpush1.bf16.msra.mxu0 0
        %3101 = vmatprep.subr.bf16.mxu0 0
        %3102 = vmatpush1.bf16.msra.mxu0 0
        %3103 = vmatprep.subr.bf16.mxu0 0
        %3104 = vmatpush1.bf16.msra.mxu0 0
        %3105 = vmatprep.subr.bf16.mxu0 0
        %3106 = vmatpush1.bf16.msra.mxu0 0
        %3107 = vmatprep.subr.bf16.mxu0 0
        %3108 = vmatpush1.bf16.msra.mxu0 0
        %3109 = vmatprep.subr.bf16.mxu0 0
        %3110 = vmatpush1.bf16.msra.mxu0 0
        %3111 = vmatprep.subr.bf16.mxu0 0
        %3112 = vmatpush1.bf16.msra.mxu0 0
        %3113 = vmatprep.subr.bf16.mxu0 0
        %3114 = vmatpush1.bf16.msra.mxu0 0
        %3115 = vmatprep.subr.bf16.mxu0 0
        %3116 = vmatpush1.bf16.msra.mxu0 0
        %3117 = vmatprep.subr.bf16.mxu0 0
        %3118 = vmatpush1.bf16.msra.mxu0 0
        %3119 = vmatprep.subr.bf16.mxu0 0
        %3120 = vmatpush1.bf16.msra.mxu0 0
        %3121 = vmatprep.subr.bf16.mxu0 0
        %3122 = vmatpush1.bf16.msra.mxu0 0
        %3123 = vmatprep.subr.bf16.mxu0 0
        %3124 = vmatpush1.bf16.msra.mxu0 0
        %3125 = vmatprep.subr.bf16.mxu0 0
        %3126 = vmatpush1.bf16.msra.mxu0 0
        %3127 = vmatprep.mubr.bf16.mxu0 0
        %3128 = vmatmul.mubr.bf16.gmra.mrb[0].mxu0 %v3090
        %v3129 = vpop.f32.mrb[0].mxu0
        %v3130 = vadd.f32 0.0, %v3129
        %v3131 = vpop.f32.mrb[0].mxu0
        %v3132 = vpop.f32.mrb[0].mxu0
        %v3133 = vpop.f32.mrb[0].mxu0
        %3134 = vdwg.mxu0
        %v3136 = vsel %vm848, %v3086, 0
        %v3139 = vsel %vm852, %v2852, 0
        %3141 = vmatprep.subr.bf16.mxu0 0
        %3142 = vmatpush1.bf16.msra.mxu0 %v3139
        %3143 = vmatprep.subr.bf16.mxu0 0
        %3144 = vmatpush1.bf16.msra.mxu0 0
        %3145 = vmatprep.subr.bf16.mxu0 0
        %3146 = vmatpush1.bf16.msra.mxu0 0
        %3147 = vmatprep.subr.bf16.mxu0 0
        %3148 = vmatpush1.bf16.msra.mxu0 0
        %3149 = vmatprep.subr.bf16.mxu0 0
        %3150 = vmatpush1.bf16.msra.mxu0 0
        %3151 = vmatprep.subr.bf16.mxu0 0
        %3152 = vmatpush1.bf16.msra.mxu0 0
        %3153 = vmatprep.subr.bf16.mxu0 0
        %3154 = vmatpush1.bf16.msra.mxu0 0
        %3155 = vmatprep.subr.bf16.mxu0 0
        %3156 = vmatpush1.bf16.msra.mxu0 0
        %3157 = vmatprep.subr.bf16.mxu0 0
        %3158 = vmatpush1.bf16.msra.mxu0 0
        %3159 = vmatprep.subr.bf16.mxu0 0
        %3160 = vmatpush1.bf16.msra.mxu0 0
        %3161 = vmatprep.subr.bf16.mxu0 0
        %3162 = vmatpush1.bf16.msra.mxu0 0
        %3163 = vmatprep.subr.bf16.mxu0 0
        %3164 = vmatpush1.bf16.msra.mxu0 0
        %3165 = vmatprep.subr.bf16.mxu0 0
        %3166 = vmatpush1.bf16.msra.mxu0 0
        %3167 = vmatprep.subr.bf16.mxu0 0
        %3168 = vmatpush1.bf16.msra.mxu0 0
        %3169 = vmatprep.subr.bf16.mxu0 0
        %3170 = vmatpush1.bf16.msra.mxu0 0
        %3171 = vmatprep.subr.bf16.mxu0 0
        %3172 = vmatpush1.bf16.msra.mxu0 0
        %3173 = vmatprep.mubr.bf16.mxu0 0
        %3174 = vmatmul.mubr.bf16.gmra.mrb[0].mxu0 %v3136
        %v3175 = vpop.f32.mrb[0].mxu0
        %v3176 = vadd.f32 0.0, %v3175
        %v3177 = vpop.f32.mrb[0].mxu0
        %v3178 = vpop.f32.mrb[0].mxu0
        %v3179 = vpop.f32.mrb[0].mxu0
        %3180 = vdwg.mxu0
        %v3182 = vsel %vm848, %v3087, 0
        %v3185 = vsel %vm852, %v2855, 0
        %3187 = vmatprep.subr.bf16.mxu0 0
        %3188 = vmatpush1.bf16.msra.mxu0 %v3185
        %3189 = vmatprep.subr.bf16.mxu0 0
        %3190 = vmatpush1.bf16.msra.mxu0 0
        %3191 = vmatprep.subr.bf16.mxu0 0
        %3192 = vmatpush1.bf16.msra.mxu0 0
        %3193 = vmatprep.subr.bf16.mxu0 0
        %3194 = vmatpush1.bf16.msra.mxu0 0
        %3195 = vmatprep.subr.bf16.mxu0 0
        %3196 = vmatpush1.bf16.msra.mxu0 0
        %3197 = vmatprep.subr.bf16.mxu0 0
        %3198 = vmatpush1.bf16.msra.mxu0 0
        %3199 = vmatprep.subr.bf16.mxu0 0
        %3200 = vmatpush1.bf16.msra.mxu0 0
        %3201 = vmatprep.subr.bf16.mxu0 0
        %3202 = vmatpush1.bf16.msra.mxu0 0
        %3203 = vmatprep.subr.bf16.mxu0 0
        %3204 = vmatpush1.bf16.msra.mxu0 0
        %3205 = vmatprep.subr.bf16.mxu0 0
        %3206 = vmatpush1.bf16.msra.mxu0 0
        %3207 = vmatprep.subr.bf16.mxu0 0
        %3208 = vmatpush1.bf16.msra.mxu0 0
        %3209 = vmatprep.subr.bf16.mxu0 0
        %3210 = vmatpush1.bf16.msra.mxu0 0
        %3211 = vmatprep.subr.bf16.mxu0 0
        %3212 = vmatpush1.bf16.msra.mxu0 0
        %3213 = vmatprep.subr.bf16.mxu0 0
        %3214 = vmatpush1.bf16.msra.mxu0 0
        %3215 = vmatprep.subr.bf16.mxu0 0
        %3216 = vmatpush1.bf16.msra.mxu0 0
        %3217 = vmatprep.subr.bf16.mxu0 0
        %3218 = vmatpush1.bf16.msra.mxu0 0
        %3219 = vmatprep.mubr.bf16.mxu0 0
        %3220 = vmatmul.mubr.bf16.gmra.mrb[0].mxu0 %v3182
        %v3221 = vpop.f32.mrb[0].mxu0
        %v3222 = vadd.f32 0.0, %v3221
        %v3223 = vpop.f32.mrb[0].mxu0
        %v3224 = vpop.f32.mrb[0].mxu0
        %v3225 = vpop.f32.mrb[0].mxu0
        %3226 = vdwg.mxu0
        %v3228 = vsel %vm848, %v3088, 0
        %v3231 = vsel %vm852, %v2858, 0
        %3233 = vmatprep.subr.bf16.mxu0 0
        %3234 = vmatpush1.bf16.msra.mxu0 %v3231
        %3235 = vmatprep.subr.bf16.mxu0 0
        %3236 = vmatpush1.bf16.msra.mxu0 0
        %3237 = vmatprep.subr.bf16.mxu0 0
        %3238 = vmatpush1.bf16.msra.mxu0 0
        %3239 = vmatprep.subr.bf16.mxu0 0
        %3240 = vmatpush1.bf16.msra.mxu0 0
        %3241 = vmatprep.subr.bf16.mxu0 0
        %3242 = vmatpush1.bf16.msra.mxu0 0
        %3243 = vmatprep.subr.bf16.mxu0 0
        %3244 = vmatpush1.bf16.msra.mxu0 0
        %3245 = vmatprep.subr.bf16.mxu0 0
        %3246 = vmatpush1.bf16.msra.mxu0 0
        %3247 = vmatprep.subr.bf16.mxu0 0
        %3248 = vmatpush1.bf16.msra.mxu0 0
        %3249 = vmatprep.subr.bf16.mxu0 0
        %3250 = vmatpush1.bf16.msra.mxu0 0
        %3251 = vmatprep.subr.bf16.mxu0 0
        %3252 = vmatpush1.bf16.msra.mxu0 0
        %3253 = vmatprep.subr.bf16.mxu0 0
        %3254 = vmatpush1.bf16.msra.mxu0 0
        %3255 = vmatprep.subr.bf16.mxu0 0
        %3256 = vmatpush1.bf16.msra.mxu0 0
        %3257 = vmatprep.subr.bf16.mxu0 0
        %3258 = vmatpush1.bf16.msra.mxu0 0
        %3259 = vmatprep.subr.bf16.mxu0 0
        %3260 = vmatpush1.bf16.msra.mxu0 0
        %3261 = vmatprep.subr.bf16.mxu0 0
        %3262 = vmatpush1.bf16.msra.mxu0 0
        %3263 = vmatprep.subr.bf16.mxu0 0
        %3264 = vmatpush1.bf16.msra.mxu0 0
        %3265 = vmatprep.mubr.bf16.mxu0 0
        %3266 = vmatmul.mubr.bf16.gmra.mrb[0].mxu0 %v3228
        %v3267 = vpop.f32.mrb[0].mxu0
        %v3268 = vadd.f32 0.0, %v3267
        %v3269 = vpop.f32.mrb[0].mxu0
        %v3270 = vpop.f32.mrb[0].mxu0
        %v3271 = vpop.f32.mrb[0].mxu0
        %3272 = vdwg.mxu0
        %v3273 = vrcp.pop %v3075
        %v3274 = vrcp.pop %v3078
        %v3275 = vrcp.pop %v3081
        %v3276 = vrcp.pop %v3084
        %v3277 = vmul.f32 %v3130, %v3273
        %v3278 = vmul.f32 %v3176, %v3274
        %v3279 = vmul.f32 %v3222, %v3275
        %v3280 = vmul.f32 %v3268, %v3276
        %v3281 = vcombine.low %v3277, %v3279
        %v3282 = vcombine.high %v3277, %v3279
        %v3284 = vunpack.c.l.s4 1983009808
        %v3285 = vunpack.c.0.s8 %v3284
        %v3286 = vlaneseq
        %v3287 = vshrl.u32 %v3286, 7
        %v3288 = vsub.s32 %v3285, %v3287
        %v3289 = vrot.slane %v3281, %v3288
        %v3291 = vunpack.c.l.s4 1983009808
        %v3292 = vunpack.c.0.s8 %v3291
        %v3293 = vlaneseq
        %v3294 = vshrl.u32 %v3293, 7
        %v3295 = vsub.s32 %v3292, %v3294
        %v3296 = vrot.slane %v3282, %v3295
        %v3297 = vcombine.low %v3278, %v3280
        %v3298 = vcombine.high %v3278, %v3280
        %v3300 = vunpack.c.l.s4 1983009808
        %v3301 = vunpack.c.0.s8 %v3300
        %v3302 = vlaneseq
        %v3303 = vshrl.u32 %v3302, 7
        %v3304 = vsub.s32 %v3301, %v3303
        %v3305 = vrot.slane %v3297, %v3304
        %v3307 = vunpack.c.l.s4 1983009808
        %v3308 = vunpack.c.0.s8 %v3307
        %v3309 = vlaneseq
        %v3310 = vshrl.u32 %v3309, 7
        %v3311 = vsub.s32 %v3308, %v3310
        %v3312 = vrot.slane %v3298, %v3311
        %v3313 = vcombine.low %v3289, %v3305
        %v3314 = vcombine.high %v3289, %v3305
        %v3316 = vunpack.c.l.s4 1934713408
        %v3317 = vunpack.c.0.s8 %v3316
        %v3318 = vlaneseq
        %v3319 = vshrl.u32 %v3318, 7
        %v3320 = vsub.s32 %v3317, %v3319
        %v3321 = vrot.slane %v3313, %v3320
        %v3323 = vunpack.c.l.s4 1934713408
        %v3324 = vunpack.c.0.s8 %v3323
        %v3325 = vlaneseq
        %v3326 = vshrl.u32 %v3325, 7
        %v3327 = vsub.s32 %v3324, %v3326
        %v3328 = vrot.slane %v3314, %v3327
        %v3329 = vcombine.low %v3296, %v3312
        %v3330 = vcombine.high %v3296, %v3312
        %v3332 = vunpack.c.l.s4 1934713408
        %v3333 = vunpack.c.0.s8 %v3332
        %v3334 = vlaneseq
        %v3335 = vshrl.u32 %v3334, 7
        %v3336 = vsub.s32 %v3333, %v3335
        %v3337 = vrot.slane %v3329, %v3336
        %v3339 = vunpack.c.l.s4 1934713408
        %v3340 = vunpack.c.0.s8 %v3339
        %v3341 = vlaneseq
        %v3342 = vshrl.u32 %v3341, 7
        %v3343 = vsub.s32 %v3340, %v3342
        %v3344 = vrot.slane %v3330, %v3343
        %v3345 = vcombine.high %v3321, 0.0
        %v3346 = vcombine.high %v3328, 0.0
        %v3347 = vcombine.high %v3337, 0.0
        %v3348 = vcombine.high %v3344, 0.0
        %v3349 = vcombine.low %v3321, %v3328
        %v3351 = vunpack.c.l.s4 1983009808
        %v3352 = vunpack.c.0.s8 %v3351
        %v3353 = vlaneseq
        %v3354 = vshrl.u32 %v3353, 7
        %v3355 = vsub.s32 %v3352, %v3354
        %v3356 = vrot.slane %v3349, %v3355
        %v3357 = vcombine.low %v3345, %v3346
        %v3359 = vunpack.c.l.s4 1983009808
        %v3360 = vunpack.c.0.s8 %v3359
        %v3361 = vlaneseq
        %v3362 = vshrl.u32 %v3361, 7
        %v3363 = vsub.s32 %v3360, %v3362
        %v3364 = vrot.slane %v3357, %v3363
        %v3365 = vcombine.low %v3337, %v3344
        %v3367 = vunpack.c.l.s4 1983009808
        %v3368 = vunpack.c.0.s8 %v3367
        %v3369 = vlaneseq
        %v3370 = vshrl.u32 %v3369, 7
        %v3371 = vsub.s32 %v3368, %v3370
        %v3372 = vrot.slane %v3365, %v3371
        %v3373 = vcombine.low %v3347, %v3348
        %v3375 = vunpack.c.l.s4 1983009808
        %v3376 = vunpack.c.0.s8 %v3375
        %v3377 = vlaneseq
        %v3378 = vshrl.u32 %v3377, 7
        %v3379 = vsub.s32 %v3376, %v3378
        %v3380 = vrot.slane %v3373, %v3379
        %v3381 = vcombine.low %v3356, %v3364
        %v3382 = vcombine.high %v3356, %v3364
        %v3384 = vunpack.c.l.s4 1934713408
        %v3385 = vunpack.c.0.s8 %v3384
        %v3386 = vlaneseq
        %v3387 = vshrl.u32 %v3386, 7
        %v3388 = vsub.s32 %v3385, %v3387
        %v3389 = vrot.slane %v3381, %v3388
        %v3391 = vunpack.c.l.s4 1934713408
        %v3392 = vunpack.c.0.s8 %v3391
        %v3393 = vlaneseq
        %v3394 = vshrl.u32 %v3393, 7
        %v3395 = vsub.s32 %v3392, %v3394
        %v3396 = vrot.slane %v3382, %v3395
        %v3397 = vcombine.low %v3372, %v3380
        %v3398 = vcombine.high %v3372, %v3380
        %v3400 = vunpack.c.l.s4 1934713408
        %v3401 = vunpack.c.0.s8 %v3400
        %v3402 = vlaneseq
        %v3403 = vshrl.u32 %v3402, 7
        %v3404 = vsub.s32 %v3401, %v3403
        %v3405 = vrot.slane %v3397, %v3404
        %v3407 = vunpack.c.l.s4 1934713408
        %v3408 = vunpack.c.0.s8 %v3407
        %v3409 = vlaneseq
        %v3410 = vshrl.u32 %v3409, 7
        %v3411 = vsub.s32 %v3408, %v3410
        %v3412 = vrot.slane %v3398, %v3411
        %v3413 = vcombine.low %v3389, %v3405
        %v3414 = vcombine.high %v3389, %v3405
        %v3415 = vcombine.low %v3396, %v3412
        %v3416 = vcombine.high %v3396, %v3412
        %3418 = vrot.lane.b32.xlu0 %v3414, 8
        %v3419 = vpop.permute.xlu0 %3418
        %3422 = vrot.lane.b32.xlu0 %v3415, 16
        %v3423 = vpop.permute.xlu0 %3422
        %3426 = vrot.lane.b32.xlu0 %v3416, 24
        %v3427 = vpop.permute.xlu0 %3426
        %v3429 = vsel %vm848, %v3413, %v3419
        %v3430 = vsel %vm2328, %v3429, %v3423
        %v3431 = vsel %vm2330, %v3430, %v3427
        %v3432 = vunpack.c.l.bf16 %v828
        %v3433 = vadd.f32 %v3432, %v2331
        %v3434 = vpack.c.bf16 %v3433, %v3433
        %v3435 = vld [vmem:[%s14] sm:$0xf]
        %v3436 = vld [vmem:[%s14 + $0x4] sm:$0xf]
        %v3437 = vld [vmem:[%s14 + $0x8] sm:$0xf]
        %v3438 = vld [vmem:[%s14 + $0xc] sm:$0xf]
        %v3439 = vld [vmem:[#allocation16] sm:$0x1]
        %v3441 = vlaneseq
        %v3442 = vshrl.u32 %v3441, 7
        %v3443 = vsub.s32 0, %v3442
        %v3444 = vrot.slane %v3439, %v3443
        %v3450 = vunpack.c.l.b16 %v3435
        %v3451 = vunpack.c.l.b16 %v3436
        %v3452 = vunpack.c.l.b16 %v3437
        %v3453 = vunpack.c.l.b16 %v3438
        %v3454 = vpack.c.b16 %v3451, %v3450
        %v3455 = vpack.c.b16 %v3453, %v3452
        %v3459 = vsel %vm964, %v3434, 0
        %3461 = vmatprep.subr.bf16.mxu0 0
        %3462 = vmatpush1.bf16.msra.mxu0 %v3454
        %3463 = vmatprep.subr.bf16.mxu0 0
        %3464 = vmatpush1.bf16.msra.mxu0 %v3455
        %3465 = vmatprep.subr.bf16.mxu0 0
        %3466 = vmatpush1.bf16.msra.mxu0 0
        %3467 = vmatprep.subr.bf16.mxu0 0
        %3468 = vmatpush1.bf16.msra.mxu0 0
        %3469 = vmatprep.subr.bf16.mxu0 0
        %3470 = vmatpush1.bf16.msra.mxu0 0
        %3471 = vmatprep.subr.bf16.mxu0 0
        %3472 = vmatpush1.bf16.msra.mxu0 0
        %3473 = vmatprep.subr.bf16.mxu0 0
        %3474 = vmatpush1.bf16.msra.mxu0 0
        %3475 = vmatprep.subr.bf16.mxu0 0
        %3476 = vmatpush1.bf16.msra.mxu0 0
        %3477 = vmatprep.subr.bf16.mxu0 0
        %3478 = vmatpush1.bf16.msra.mxu0 0
        %3479 = vmatprep.subr.bf16.mxu0 0
        %3480 = vmatpush1.bf16.msra.mxu0 0
        %3481 = vmatprep.subr.bf16.mxu0 0
        %3482 = vmatpush1.bf16.msra.mxu0 0
        %3483 = vmatprep.subr.bf16.mxu0 0
        %3484 = vmatpush1.bf16.msra.mxu0 0
        %3485 = vmatprep.subr.bf16.mxu0 0
        %3486 = vmatpush1.bf16.msra.mxu0 0
        %3487 = vmatprep.subr.bf16.mxu0 0
        %3488 = vmatpush1.bf16.msra.mxu0 0
        %3489 = vmatprep.subr.bf16.mxu0 0
        %3490 = vmatpush1.bf16.msra.mxu0 0
        %3491 = vmatprep.subr.bf16.mxu0 0
        %3492 = vmatpush1.bf16.msra.mxu0 0
        %3493 = vmatprep.mubr.bf16.mxu0 0
        %3494 = vmatmul.mubr.bf16.gmra.mrb[0].mxu0 %v3459
        %v3495 = vpop.f32.mrb[0].mxu0
        %v3496 = vadd.f32 %v3444, %v3495
        %v3497 = vpop.f32.mrb[0].mxu0
        %v3498 = vpop.f32.mrb[0].mxu0
        %v3499 = vpop.f32.mrb[0].mxu0
        %3500 = vdwg.mxu0
        %3501 = vst.msk [vmem:[%s811] sm:$0xff] %vm964, %v3496
        %v3502 = vunpack.c.l.bf16 %v829
        %v3503 = vadd.f32 %v3502, %v3431
        %v3504 = vpack.c.bf16 %v3503, %v3503
        %v3505 = vld [vmem:[%s16] sm:$0xf]
        %v3506 = vld [vmem:[%s16 + $0x4] sm:$0xf]
        %v3507 = vld [vmem:[%s16 + $0x8] sm:$0xf]
        %v3508 = vld [vmem:[%s16 + $0xc] sm:$0xf]
        %v3509 = vld [vmem:[%s17] sm:$0x1]
        %v3511 = vlaneseq
        %v3512 = vshrl.u32 %v3511, 7
        %v3513 = vsub.s32 0, %v3512
        %v3514 = vrot.slane %v3509, %v3513
        %v3520 = vunpack.c.l.b16 %v3505
        %v3521 = vunpack.c.l.b16 %v3506
        %v3522 = vunpack.c.l.b16 %v3507
        %v3523 = vunpack.c.l.b16 %v3508
        %v3524 = vpack.c.b16 %v3521, %v3520
        %v3525 = vpack.c.b16 %v3523, %v3522
        %v3529 = vsel %vm964, %v3504, 0
        %3531 = vmatprep.subr.bf16.mxu0 0
        %3532 = vmatpush1.bf16.msra.mxu0 %v3524
        %3533 = vmatprep.subr.bf16.mxu0 0
        %3534 = vmatpush1.bf16.msra.mxu0 %v3525
        %3535 = vmatprep.subr.bf16.mxu0 0
        %3536 = vmatpush1.bf16.msra.mxu0 0
        %3537 = vmatprep.subr.bf16.mxu0 0
        %3538 = vmatpush1.bf16.msra.mxu0 0
        %3539 = vmatprep.subr.bf16.mxu0 0
        %3540 = vmatpush1.bf16.msra.mxu0 0
        %3541 = vmatprep.subr.bf16.mxu0 0
        %3542 = vmatpush1.bf16.msra.mxu0 0
        %3543 = vmatprep.subr.bf16.mxu0 0
        %3544 = vmatpush1.bf16.msra.mxu0 0
        %3545 = vmatprep.subr.bf16.mxu0 0
        %3546 = vmatpush1.bf16.msra.mxu0 0
        %3547 = vmatprep.subr.bf16.mxu0 0
        %3548 = vmatpush1.bf16.msra.mxu0 0
        %3549 = vmatprep.subr.bf16.mxu0 0
        %3550 = vmatpush1.bf16.msra.mxu0 0
        %3551 = vmatprep.subr.bf16.mxu0 0
        %3552 = vmatpush1.bf16.msra.mxu0 0
        %3553 = vmatprep.subr.bf16.mxu0 0
        %3554 = vmatpush1.bf16.msra.mxu0 0
        %3555 = vmatprep.subr.bf16.mxu0 0
        %3556 = vmatpush1.bf16.msra.mxu0 0
        %3557 = vmatprep.subr.bf16.mxu0 0
        %3558 = vmatpush1.bf16.msra.mxu0 0
        %3559 = vmatprep.subr.bf16.mxu0 0
        %3560 = vmatpush1.bf16.msra.mxu0 0
        %3561 = vmatprep.subr.bf16.mxu0 0
        %3562 = vmatpush1.bf16.msra.mxu0 0
        %3563 = vmatprep.mubr.bf16.mxu0 0
        %3564 = vmatmul.mubr.bf16.gmra.mrb[0].mxu0 %v3529
        %v3565 = vpop.f32.mrb[0].mxu0
        %v3566 = vadd.f32 %v3514, %v3565
        %v3567 = vpop.f32.mrb[0].mxu0
        %v3568 = vpop.f32.mrb[0].mxu0
        %v3569 = vpop.f32.mrb[0].mxu0
        %3570 = vdwg.mxu0
        %3571 = vst.msk [vmem:[%s818] sm:$0xff] %vm964, %v3566
        %s3572 = sand.u32 %s464, 1
        %s3573 = scalar_lea.sflag [#allocation4], %s3572
        %s3574 = sand.u32 %s464, 1
        %s3575 = smul.addr %s3574, 8
        %s3576 = scalar_lea.vmem [#allocation17], %s3575
        %s3577 = sand.u32 %s490, 1
        %s3578 = scalar_lea.sflag [#allocation19], %s3577
        %s3579 = sand.u32 %s490, 1
        %s3580 = smul.addr %s3579, 8
        %s3581 = scalar_lea.vmem [#allocation18], %s3580
        // Predicated region
        $region129: #{tpu_custom_call.1} parent=91 // pred_check
          %p3582 = pneg %p474
        $region130: #{tpu_custom_call.1} parent=91 // pred_check_branch
          %3584 = sbr.rel (%p3582) target = $region132
        $region131: #{tpu_custom_call.1} parent=91 // pred_region
          %s3586 = ssub.s32 128, 128
          %3587 = vsyncadd %s3573, %s3586
          %s3588 = smul.addr %s48, 128
          %s3589 = scalar_lea.hbm %s18, %s3588
          %s3591 = sshll.u32 %s3576, 4
          %s3592 = int_to_ptr.vmem [resolvable:$true] %s3591
          %3594 = dma.vmem_to_hbm [thread:$0]  %s3592, 128, %s3589, %s3573
        $region132: #{tpu_custom_call.1} parent=91 // pred_fallthru
          _
        // Predicated region
        $region133: #{tpu_custom_call.1} parent=91 // pred_check
          %p3595 = pneg %p500
        $region134: #{tpu_custom_call.1} parent=91 // pred_check_branch
          %3597 = sbr.rel (%p3595) target = $region136
        $region135: #{tpu_custom_call.1} parent=91 // pred_region
          %s3599 = ssub.s32 128, 128
          %3600 = vsyncadd %s3578, %s3599
          %s3601 = smul.addr %s48, 128
          %s3602 = scalar_lea.hbm %s19, %s3601
          %s3604 = sshll.u32 %s3581, 4
          %s3605 = int_to_ptr.vmem [resolvable:$true] %s3604
          %3607 = dma.vmem_to_hbm [thread:$0]  %s3605, 128, %s3602, %s3578
        $region136: #{tpu_custom_call.1} parent=91 // pred_fallthru
          _
      $region92: #{tpu_custom_call.1} parent=5 // pred_fallthru
        _
      %p3608 = scmp.le.s32.totalorder 2, %s43
      // Predicated region
      $region137: #{tpu_custom_call.1} parent=5 // pred_check
        %p3609 = pneg %p3608
      $region138: #{tpu_custom_call.1} parent=5 // pred_check_branch
        %3611 = sbr.rel (%p3609) target = $region140
      $region139: #{tpu_custom_call.1} parent=5 // pred_region
        %s3612 = ssub.s32 %s43, 2
        // Predicated region
        $region141: #{tpu_custom_call.1} parent=139 // pred_check
          %p3613 = pneg %p480
        $region142: #{tpu_custom_call.1} parent=139 // pred_check_branch
          %3615 = sbr.rel (%p3613) target = $region144
        $region143: #{tpu_custom_call.1} parent=139 // pred_region
          %s3616 = sand.u32 %s465, 1
          %s3617 = scalar_lea.sflag [#allocation4], %s3616
          %s3618 = sand.u32 %s465, 1
          %s3619 = smul.addr %s3618, 8
          %s3620 = scalar_lea.vmem [#allocation17], %s3619
          %3621 = dma.done %s3617, 128
        $region144: #{tpu_custom_call.1} parent=139 // pred_fallthru
          _
        // Predicated region
        $region145: #{tpu_custom_call.1} parent=139 // pred_check
          %p3622 = pneg %p506
        $region146: #{tpu_custom_call.1} parent=139 // pred_check_branch
          %3624 = sbr.rel (%p3622) target = $region148
        $region147: #{tpu_custom_call.1} parent=139 // pred_region
          %s3625 = sand.u32 %s491, 1
          %s3626 = scalar_lea.sflag [#allocation19], %s3625
          %s3627 = sand.u32 %s491, 1
          %s3628 = smul.addr %s3627, 8
          %s3629 = scalar_lea.vmem [#allocation18], %s3628
          %3630 = dma.done %s3626, 128
        $region148: #{tpu_custom_call.1} parent=139 // pred_fallthru
          _
      $region140: #{tpu_custom_call.1} parent=5 // pred_fallthru
        _
    $region6: #{tpu_custom_call.1} parent=1 // loop_footer
      %s47 = sadd.s32 1, %s43
    $region7: #{tpu_custom_call.1} parent=1 // loop_footer_branch
      %42 = sbr.rel target = $region3
    $region8: #{tpu_custom_call.1} parent=1 // loop_exit
      _
    %3631 = vsyncpa [#allocation3], 1
    %s3632 = scalar_lea.sflag [#allocation3], 1
    %3633 = vsyncpa %s3632, 1
    %3634 = vsyncpa [#allocation6], 1
    %s3635 = scalar_lea.sflag [#allocation6], 1
    %3636 = vsyncpa %s3635, 1
    %3637 = vsyncpa [#allocation9], 1
    %s3638 = scalar_lea.sflag [#allocation9], 1
    %3639 = vsyncpa %s3638, 1
    %3640 = vsyncpa [#allocation12], 1
    %3641 = vsyncpa [#allocation15], 1
    %3642 = vsyncpa [#allocation4], 1
    %s3643 = scalar_lea.sflag [#allocation4], 1
    %3644 = vsyncpa %s3643, 1
    %3645 = vsyncpa [#allocation19], 1
    %s3646 = scalar_lea.sflag [#allocation19], 1
    %3647 = vsyncpa %s3646, 1

</llo_original>
